<compile_context>
chip_gen: v6e
topology: v6e:2x2x1
jax: 0.10.0
libtpu: 0.0.40
codegen_flags: <defaults>
</compile_context>

<pallas_src>
import functools

import jax
import jax.numpy as jnp
from jax.experimental import pallas as pl
from jax.experimental.pallas import tpu as pltpu

VMEM_SPEC = pl.BlockSpec(memory_space=pltpu.MemorySpace.VMEM)


# --------------------------------------------------------------------------------------
# Kernel 1: fused inertial encoder
#   3 x [Conv1d(k=3,p=1) -> BatchNorm1d (batch stats) -> LeakyReLU(0.1)]  (6->64->128->256)
#   + inertial_proj Linear(256*11 -> 256).   Dropout(p=0.0) is identity.
# Data layout: rows are time-major (row = l*N + n), channels on lanes.
# --------------------------------------------------------------------------------------
def _imu_fused_kernel(x_ref,
                      w1, b1, g1, t1,
                      w2, b2, g2, t2,
                      w3, b3, g3, t3,
                      wp_ref, bp_ref, out_ref, *, N, L):
    def layer(x, w_ref, b_ref, g_ref, t_ref):
        cin = x.shape[1]
        zblk = jnp.zeros((N, cin), jnp.float32)
        # "same" conv: tap 0 sees x[l-1], tap 1 sees x[l], tap 2 sees x[l+1]
        # (time-major rows => a time shift is a whole-block row shift of N rows).
        x_prev = jnp.concatenate([zblk, x[:-N, :]], axis=0)
        x_next = jnp.concatenate([x[N:, :], zblk], axis=0)
        y = (jnp.dot(x_prev, w_ref[0], preferred_element_type=jnp.float32)
             + jnp.dot(x, w_ref[1], preferred_element_type=jnp.float32)
             + jnp.dot(x_next, w_ref[2], preferred_element_type=jnp.float32)
             + b_ref[...])
        # BatchNorm1d, training-mode batch statistics over all N*L positions per channel
        mean = jnp.mean(y, axis=0, keepdims=True)
        var = jnp.mean((y - mean) ** 2, axis=0, keepdims=True)
        z = (y - mean) * jax.lax.rsqrt(var + 1e-5) * g_ref[...] + t_ref[...]
        return jnp.where(z > 0, z, 0.1 * z)            # LeakyReLU(0.1)

    h = layer(x_ref[...], w1, b1, g1, t1)               # (L*N, 64)
    h = layer(h, w2, b2, g2, t2)                         # (L*N, 128)
    h = layer(h, w3, b3, g3, t3)                         # (L*N, 256)

    # inertial_proj: flatten + Linear == sum over time steps of (N,256)@(256,256).
    # wp rows are pre-permuted to (l*256 + c) order in the wrapper.
    acc = jnp.zeros((N, 256), jnp.float32)
    for l in range(L):
        acc = acc + jnp.dot(h[l * N:(l + 1) * N, :],
                            wp_ref[l * 256:(l + 1) * 256, :],
                            preferred_element_type=jnp.float32)
    out_ref[...] = acc + bp_ref[...]


def imu_branch(x_ln, conv_params, wproj_lc, bproj, *, N, L):
    flat = []
    for layer in conv_params:
        flat += list(layer)
    kern = functools.partial(_imu_fused_kernel, N=N, L=L)
    return pl.pallas_call(
        kern,
        out_shape=jax.ShapeDtypeStruct((N, 256), jnp.float32),
        in_specs=[VMEM_SPEC] * (1 + len(flat) + 2),
        out_specs=VMEM_SPEC,
    )(x_ln, *flat, wproj_lc, bproj)


# --------------------------------------------------------------------------------------
# Kernel 2: fused visual branch + fusion + pose regressor, gridded over batch.
# Per batch element:
#   pooled  = pool_mat (HW, H0*W0) @ img_px (H0*W0, 6)          # 8x8 patch mean (matmul)
#   h       = LeakyReLU(pooled @ W1f + b1f)                      # normalize+cost_proj+vio1_1 folded
#   h       = h @ W12 + b12                                      # vio1_2 (no act)
#   x_flat  = lane-concat of the HW rows of h (PyTorch (h,w,feat) flatten order)
#   v       = LeakyReLU(x_flat @ W21 + b21); v = LeakyReLU(v @ W22 + b22)   # vio2
#   feat    = [v, imu_feat_b]; pose = (LeakyReLU(feat @ Wp1 + bp1)) @ Wp2 + bp2
# --------------------------------------------------------------------------------------
def _visual_fused_kernel(img_ref, pmat_ref, imu_ref,
                         w1_ref, b1_ref, w2_ref, b2_ref,
                         w3_ref, b3_ref, w4_ref, b4_ref,
                         w5_ref, b5_ref, w6_ref, b6_ref,
                         pose_ref, feat_ref):
    def leaky(z):
        return jnp.where(z > 0, z, 0.1 * z)

    # 8x8 mean pooling as one MXU matmul (K = H0*W0); normalization is folded into w1/b1.
    x0 = jnp.dot(pmat_ref[...], img_ref[...], preferred_element_type=jnp.float32)   # (HW, 6)

    h = leaky(jnp.dot(x0, w1_ref[...], preferred_element_type=jnp.float32) + b1_ref[...])  # (HW,128)
    h = jnp.dot(h, w2_ref[...], preferred_element_type=jnp.float32) + b2_ref[...]          # (HW, 8)

    hw = h.shape[0]
    # flatten in (h, w, feature) order -> (1, HW*8) via lane concatenation (no reshape)
    x_flat = jnp.concatenate([h[s:s + 1, :] for s in range(hw)], axis=1)                   # (1, HW*8)

    v = leaky(jnp.dot(x_flat, w3_ref[...], preferred_element_type=jnp.float32) + b3_ref[...])  # (1,2048)
    v = leaky(jnp.dot(v, w4_ref[...], preferred_element_type=jnp.float32) + b4_ref[...])        # (1, 512)

    feat = jnp.concatenate([v, imu_ref[...].reshape(1, 256)], axis=1)                      # (1, 768)

    p = leaky(jnp.dot(feat, w5_ref[...], preferred_element_type=jnp.float32) + b5_ref[...])     # (1, 128)
    p = jnp.dot(p, w6_ref[...], preferred_element_type=jnp.float32) + b6_ref[...]               # (1, 6)

    pose_ref[...] = p.reshape(pose_ref.shape)
    feat_ref[...] = feat.reshape(feat_ref.shape)


def visual_and_pose(img_px, pmatT, imu_feat, weights, *, B, HW0, HW):
    in_specs = (
        [pl.BlockSpec((HW0, 6), lambda b: (b, 0)),        # per-batch pixel block
         pl.BlockSpec((HW, HW0), lambda b: (0, 0)),       # shared pooling matrix
         pl.BlockSpec((1, 1, 256), lambda b: (b, 0, 0))]  # per-batch imu feature
        + [pl.BlockSpec(w.shape, lambda b: (0, 0)) for w in weights]   # shared weights
    )
    out_specs = (pl.BlockSpec((1, 1, 6), lambda b: (b, 0, 0)),
                 pl.BlockSpec((1, 1, 768), lambda b: (b, 0, 0)))
    pose3, feat3 = pl.pallas_call(
        _visual_fused_kernel,
        grid=(B,),
        out_shape=(jax.ShapeDtypeStruct((B, 1, 6), jnp.float32),
                   jax.ShapeDtypeStruct((B, 1, 768), jnp.float32)),
        in_specs=in_specs,
        out_specs=out_specs,
        compiler_params=pltpu.CompilerParams(
            dimension_semantics=("parallel",),           # batch axis -> both TCs on v7x
            vmem_limit_bytes=32 * 1024 * 1024),
    )(img_px, pmatT, imu_feat.reshape(B, 1, 256), *weights)
    return pose3, feat3.reshape(B, 768)


# --------------------------------------------------------------------------------------
# Parameters / config
# --------------------------------------------------------------------------------------
class Cfg:
    cost_latent_token_num = 4
    cost_latent_dim = 8
    image_size = (32, 32)      # H0, W0; cost memory lives at 1/8 resolution
    cnet = 'basicencoder'
    context_concat = False
    pretrain = False


def init_params(key, cfg):
    out_dim = cfg.cost_latent_token_num * cfg.cost_latent_dim      # 32
    H0, W0 = cfg.image_size
    flat_in = int(8 * H0 * W0 / 64)
    keys = jax.random.split(key, 12)

    def lin(k, din, dout):
        s = 1.0 / float(din) ** 0.5
        kw, kb = jax.random.split(k)
        return (jax.random.uniform(kw, (din, dout), jnp.float32, -s, s),
                jax.random.uniform(kb, (1, dout), jnp.float32, -s, s))

    def conv(k, cin, cout):
        s = 1.0 / float(cin * 3) ** 0.5
        kw, kb = jax.random.split(k)
        w = jax.random.uniform(kw, (3, cin, cout), jnp.float32, -s, s)   # (tap, Cin, Cout)
        b = jax.random.uniform(kb, (1, cout), jnp.float32, -s, s)
        return (w, b, jnp.ones((1, cout), jnp.float32), jnp.zeros((1, cout), jnp.float32))

    p = {}
    p['imu_conv'] = [conv(keys[0], 6, 64), conv(keys[1], 64, 128), conv(keys[2], 128, 256)]
    p['inertial_proj'] = lin(keys[3], 256 * 1 * 11, 256)   # rows in PyTorch flatten order (c*11+l)
    p['cost_proj'] = lin(keys[4], 6, out_dim)              # stub projection (see TODO at top)
    p['vio1'] = [lin(keys[5], out_dim, 128), lin(keys[6], 128, 8)]
    p['vio2'] = [lin(keys[7], flat_in, 2048), lin(keys[8], 2048, 512)]
    p['pose'] = [lin(keys[9], 768, 128), lin(keys[10], 128, 6)]
    return p


# --------------------------------------------------------------------------------------
# Forward (regression_mode == 2)
# --------------------------------------------------------------------------------------
def flowformer_vio_forward(params, cfg, image1, image2, imu):
    bs, sl, L = imu.shape[0], imu.shape[1], imu.shape[2]
    N = bs * sl
    B = image1.shape[0]
    H0, W0 = cfg.image_size
    H, W = H0 // 8, W0 // 8
    HW = H * W
    assert N == B, "final concat requires visual batch == bs*sl (as in the reference)"

    # ---------------- inertial branch: 1 fused Pallas kernel ----------------
    # time-major rows (row = l*N + n) so conv taps are whole-block row shifts.
    imu_ln = imu.reshape(N, L, 6).transpose(1, 0, 2).reshape(L * N, 6)
    wproj, bproj = params['inertial_proj']
    # permute rows once (layout plumbing) so the kernel consumes channel-last order:
    # PyTorch flattens the (N, 256, 11) conv output channel-major (idx = c*11 + l).
    wproj_lc = wproj.reshape(256, L, 256).transpose(1, 0, 2).reshape(L * 256, 256)
    imu_feat = imu_branch(imu_ln, params['imu_conv'], wproj_lc, bproj, N=N, L=L)  # (N, 256)

    # ---------------- visual branch + fusion: 1 fused Pallas kernel ----------------
    # images in (pixels, channels) layout; normalization folded into the fused weights.
    img = jnp.concatenate([image1, image2], axis=1)                       # (B, 6, H0, W0)
    img_px = jnp.transpose(img, (0, 2, 3, 1)).reshape(B * H0 * W0, 6)

    # constant 8x8 patch-mean pooling matrix (HW, H0*W0)
    pix = jnp.arange(H0 * W0)
    site = ((pix // W0) // 8) * W + (pix % W0) // 8
    pmatT = (jnp.arange(HW)[:, None] == site[None, :]).astype(jnp.float32) / 64.0

    # fold normalize (2*(x/255)-1) and the stub cost_proj into vio1's first linear (exact)
    wc, bc = params['cost_proj']
    w11, b11 = params['vio1'][0]
    w12, b12 = params['vio1'][1]
    wcv = jnp.dot(wc, w11)                                               # (6, 128)
    w1f = (2.0 / 255.0) * wcv
    b1f = b11 + jnp.dot(bc, w11) - jnp.sum(wcv, axis=0, keepdims=True)

    w21, b21 = params['vio2'][0]
    w22, b22 = params['vio2'][1]
    wp1, bp1 = params['pose'][0]
    wp2, bp2 = params['pose'][1]

    weights = [w1f, b1f, w12, b12, w21, b21, w22, b22, wp1, bp1, wp2, bp2]
    pose, all_feat = visual_and_pose(img_px, pmatT, imu_feat, weights,
                                     B=B, HW0=H0 * W0, HW=HW)
    return pose, all_feat                                                # ((B,1,6), (B,768))


if __name__ == "__main__":
    cfg = Cfg()
    key = jax.random.PRNGKey(0)
    k1, k2, k3, kp = jax.random.split(key, 4)

    B = 2
    image1 = jax.random.uniform(k1, (B, 3, cfg.image_size[0], cfg.image_size[1]),
                                jnp.float32, 0.0, 255.0)
    image2 = jax.random.uniform(k2, (B, 3, cfg.image_size[0], cfg.image_size[1]),
                                jnp.float32, 0.0, 255.0)
    imu = jax.random.normal(k3, (B, 1, 11, 6), jnp.float32)   # (batch, seq, L=11, 6)

    params = init_params(kp, cfg)

    pose, all_feat = flowformer_vio_forward(params, cfg, image1, image2, imu)
    jax.block_until_ready((pose, all_feat))

    assert pose.shape == (B, 1, 6), pose.shape
    assert all_feat.shape == (B, 768), all_feat.shape
    assert bool(jnp.all(jnp.isfinite(pose))) and bool(jnp.all(jnp.isfinite(all_feat)))
    print("KERNEL_OK")
</pallas_src>

<mosaic_0001>
module attributes {stable_mosaic.version = 11 : i64} {
  func.func @_imu_fused_kernel(%arg0: memref<22x6xf32, #tpu.memory_space<vmem>>, %arg1: memref<3x6x64xf32, #tpu.memory_space<vmem>>, %arg2: memref<1x64xf32, #tpu.memory_space<vmem>>, %arg3: memref<1x64xf32, #tpu.memory_space<vmem>>, %arg4: memref<1x64xf32, #tpu.memory_space<vmem>>, %arg5: memref<3x64x128xf32, #tpu.memory_space<vmem>>, %arg6: memref<1x128xf32, #tpu.memory_space<vmem>>, %arg7: memref<1x128xf32, #tpu.memory_space<vmem>>, %arg8: memref<1x128xf32, #tpu.memory_space<vmem>>, %arg9: memref<3x128x256xf32, #tpu.memory_space<vmem>>, %arg10: memref<1x256xf32, #tpu.memory_space<vmem>>, %arg11: memref<1x256xf32, #tpu.memory_space<vmem>>, %arg12: memref<1x256xf32, #tpu.memory_space<vmem>>, %arg13: memref<2816x256xf32, #tpu.memory_space<vmem>>, %arg14: memref<1x256xf32, #tpu.memory_space<vmem>>, %arg15: memref<2x256xf32, #tpu.memory_space<vmem>>) attributes {dimension_semantics = [], scalar_prefetch = 0 : i64, scratch_operands = 0 : i64, tpu.core_type = #tpu.core_type<tc>} {
    %c0 = arith.constant 0 : index
    %c0_0 = arith.constant 0 : index
    %0 = vector.load %arg0[%c0, %c0_0] : memref<22x6xf32, #tpu.memory_space<vmem>>, vector<22x6xf32>
    %cst = arith.constant 0.000000e+00 : f32
    %1 = vector.broadcast %cst : f32 to vector<2x6xf32>
    %2 = vector.extract_strided_slice %0 {offsets = [0, 0], sizes = [20, 6], strides = [1, 1]} : vector<22x6xf32> to vector<20x6xf32>
    %3 = tpu.concatenate %1, %2 in 0 : vector<2x6xf32>, vector<20x6xf32> -> vector<22x6xf32>
    %4 = vector.extract_strided_slice %0 {offsets = [2, 0], sizes = [20, 6], strides = [1, 1]} : vector<22x6xf32> to vector<20x6xf32>
    %5 = tpu.concatenate %4, %1 in 0 : vector<20x6xf32>, vector<2x6xf32> -> vector<22x6xf32>
    %c0_1 = arith.constant 0 : index
    %c0_2 = arith.constant 0 : index
    %c0_3 = arith.constant 0 : index
    %6 = vector.load %arg1[%c0_1, %c0_2, %c0_3] : memref<3x6x64xf32, #tpu.memory_space<vmem>>, vector<1x6x64xf32>
    %7 = vector.shape_cast %6 : vector<1x6x64xf32> to vector<6x64xf32>
    %cst_4 = arith.constant dense<0.000000e+00> : vector<22x64xf32>
    %8 = tpu.matmul %3, %7, %cst_4 {dimension_numbers = #tpu.dot_dimension_numbers<[1], [0], [0], [1], [0, 0, 1, 1], [], []>} : vector<22x6xf32>, vector<6x64xf32>, vector<22x64xf32> -> vector<22x64xf32>
    %c1 = arith.constant 1 : index
    %c0_5 = arith.constant 0 : index
    %c0_6 = arith.constant 0 : index
    %9 = vector.load %arg1[%c1, %c0_5, %c0_6] : memref<3x6x64xf32, #tpu.memory_space<vmem>>, vector<1x6x64xf32>
    %10 = vector.shape_cast %9 : vector<1x6x64xf32> to vector<6x64xf32>
    %cst_7 = arith.constant dense<0.000000e+00> : vector<22x64xf32>
    %11 = tpu.matmul %0, %10, %cst_7 {dimension_numbers = #tpu.dot_dimension_numbers<[1], [0], [0], [1], [0, 0, 1, 1], [], []>} : vector<22x6xf32>, vector<6x64xf32>, vector<22x64xf32> -> vector<22x64xf32>
    %12 = arith.addf %8, %11 : vector<22x64xf32>
    %c2 = arith.constant 2 : index
    %c0_8 = arith.constant 0 : index
    %c0_9 = arith.constant 0 : index
    %13 = vector.load %arg1[%c2, %c0_8, %c0_9] : memref<3x6x64xf32, #tpu.memory_space<vmem>>, vector<1x6x64xf32>
    %14 = vector.shape_cast %13 : vector<1x6x64xf32> to vector<6x64xf32>
    %cst_10 = arith.constant dense<0.000000e+00> : vector<22x64xf32>
    %15 = tpu.matmul %5, %14, %cst_10 {dimension_numbers = #tpu.dot_dimension_numbers<[1], [0], [0], [1], [0, 0, 1, 1], [], []>} : vector<22x6xf32>, vector<6x64xf32>, vector<22x64xf32> -> vector<22x64xf32>
    %16 = arith.addf %12, %15 : vector<22x64xf32>
    %c0_11 = arith.constant 0 : index
    %c0_12 = arith.constant 0 : index
    %17 = vector.load %arg2[%c0_11, %c0_12] : memref<1x64xf32, #tpu.memory_space<vmem>>, vector<1x64xf32>
    %18 = vector.broadcast %17 : vector<1x64xf32> to vector<22x64xf32>
    %19 = arith.addf %16, %18 : vector<22x64xf32>
    %cst_13 = arith.constant dense<0.000000e+00> : vector<64xf32>
    %20 = vector.multi_reduction <add>, %19, %cst_13 [0] : vector<22x64xf32> to vector<64xf32>
    %21 = vector.shape_cast %20 : vector<64xf32> to vector<1x64xf32>
    %cst_14 = arith.constant 2.200000e+01 : f32
    %22 = vector.broadcast %cst_14 : f32 to vector<1x64xf32>
    %23 = arith.divf %21, %22 : vector<1x64xf32>
    %24 = vector.broadcast %23 : vector<1x64xf32> to vector<22x64xf32>
    %25 = arith.subf %19, %24 : vector<22x64xf32>
    %26 = arith.mulf %25, %25 : vector<22x64xf32>
    %cst_15 = arith.constant dense<0.000000e+00> : vector<64xf32>
    %27 = vector.multi_reduction <add>, %26, %cst_15 [0] : vector<22x64xf32> to vector<64xf32>
    %28 = vector.shape_cast %27 : vector<64xf32> to vector<1x64xf32>
    %cst_16 = arith.constant 2.200000e+01 : f32
    %29 = vector.broadcast %cst_16 : f32 to vector<1x64xf32>
    %30 = arith.divf %28, %29 : vector<1x64xf32>
    %31 = vector.broadcast %23 : vector<1x64xf32> to vector<22x64xf32>
    %32 = arith.subf %19, %31 : vector<22x64xf32>
    %cst_17 = arith.constant 9.99999974E-6 : f32
    %33 = vector.broadcast %cst_17 : f32 to vector<1x64xf32>
    %34 = arith.addf %30, %33 : vector<1x64xf32>
    %35 = math.rsqrt %34 : vector<1x64xf32>
    %36 = vector.broadcast %35 : vector<1x64xf32> to vector<22x64xf32>
    %37 = arith.mulf %32, %36 : vector<22x64xf32>
    %c0_18 = arith.constant 0 : index
    %c0_19 = arith.constant 0 : index
    %38 = vector.load %arg3[%c0_18, %c0_19] : memref<1x64xf32, #tpu.memory_space<vmem>>, vector<1x64xf32>
    %39 = vector.broadcast %38 : vector<1x64xf32> to vector<22x64xf32>
    %40 = arith.mulf %37, %39 : vector<22x64xf32>
    %c0_20 = arith.constant 0 : index
    %c0_21 = arith.constant 0 : index
    %41 = vector.load %arg4[%c0_20, %c0_21] : memref<1x64xf32, #tpu.memory_space<vmem>>, vector<1x64xf32>
    %42 = vector.broadcast %41 : vector<1x64xf32> to vector<22x64xf32>
    %43 = arith.addf %40, %42 : vector<22x64xf32>
    %cst_22 = arith.constant 0.000000e+00 : f32
    %44 = vector.broadcast %cst_22 : f32 to vector<22x64xf32>
    %45 = arith.cmpf ogt, %43, %44 : vector<22x64xf32>
    %cst_23 = arith.constant 1.000000e-01 : f32
    %46 = vector.broadcast %cst_23 : f32 to vector<22x64xf32>
    %47 = arith.mulf %46, %43 : vector<22x64xf32>
    %48 = arith.select %45, %43, %47 : vector<22x64xi1>, vector<22x64xf32>
    %cst_24 = arith.constant 0.000000e+00 : f32
    %49 = vector.broadcast %cst_24 : f32 to vector<2x64xf32>
    %50 = vector.extract_strided_slice %48 {offsets = [0, 0], sizes = [20, 64], strides = [1, 1]} : vector<22x64xf32> to vector<20x64xf32>
    %51 = tpu.concatenate %49, %50 in 0 : vector<2x64xf32>, vector<20x64xf32> -> vector<22x64xf32>
    %52 = vector.extract_strided_slice %48 {offsets = [2, 0], sizes = [20, 64], strides = [1, 1]} : vector<22x64xf32> to vector<20x64xf32>
    %53 = tpu.concatenate %52, %49 in 0 : vector<20x64xf32>, vector<2x64xf32> -> vector<22x64xf32>
    %c0_25 = arith.constant 0 : index
    %c0_26 = arith.constant 0 : index
    %c0_27 = arith.constant 0 : index
    %54 = vector.load %arg5[%c0_25, %c0_26, %c0_27] : memref<3x64x128xf32, #tpu.memory_space<vmem>>, vector<1x64x128xf32>
    %55 = vector.shape_cast %54 : vector<1x64x128xf32> to vector<64x128xf32>
    %cst_28 = arith.constant dense<0.000000e+00> : vector<22x128xf32>
    %56 = tpu.matmul %51, %55, %cst_28 {dimension_numbers = #tpu.dot_dimension_numbers<[1], [0], [0], [1], [0, 0, 1, 1], [], []>} : vector<22x64xf32>, vector<64x128xf32>, vector<22x128xf32> -> vector<22x128xf32>
    %c1_29 = arith.constant 1 : index
    %c0_30 = arith.constant 0 : index
    %c0_31 = arith.constant 0 : index
    %57 = vector.load %arg5[%c1_29, %c0_30, %c0_31] : memref<3x64x128xf32, #tpu.memory_space<vmem>>, vector<1x64x128xf32>
    %58 = vector.shape_cast %57 : vector<1x64x128xf32> to vector<64x128xf32>
    %cst_32 = arith.constant dense<0.000000e+00> : vector<22x128xf32>
    %59 = tpu.matmul %48, %58, %cst_32 {dimension_numbers = #tpu.dot_dimension_numbers<[1], [0], [0], [1], [0, 0, 1, 1], [], []>} : vector<22x64xf32>, vector<64x128xf32>, vector<22x128xf32> -> vector<22x128xf32>
    %60 = arith.addf %56, %59 : vector<22x128xf32>
    %c2_33 = arith.constant 2 : index
    %c0_34 = arith.constant 0 : index
    %c0_35 = arith.constant 0 : index
    %61 = vector.load %arg5[%c2_33, %c0_34, %c0_35] : memref<3x64x128xf32, #tpu.memory_space<vmem>>, vector<1x64x128xf32>
    %62 = vector.shape_cast %61 : vector<1x64x128xf32> to vector<64x128xf32>
    %cst_36 = arith.constant dense<0.000000e+00> : vector<22x128xf32>
    %63 = tpu.matmul %53, %62, %cst_36 {dimension_numbers = #tpu.dot_dimension_numbers<[1], [0], [0], [1], [0, 0, 1, 1], [], []>} : vector<22x64xf32>, vector<64x128xf32>, vector<22x128xf32> -> vector<22x128xf32>
    %64 = arith.addf %60, %63 : vector<22x128xf32>
    %c0_37 = arith.constant 0 : index
    %c0_38 = arith.constant 0 : index
    %65 = vector.load %arg6[%c0_37, %c0_38] : memref<1x128xf32, #tpu.memory_space<vmem>>, vector<1x128xf32>
    %66 = vector.broadcast %65 : vector<1x128xf32> to vector<22x128xf32>
    %67 = arith.addf %64, %66 : vector<22x128xf32>
    %cst_39 = arith.constant dense<0.000000e+00> : vector<128xf32>
    %68 = vector.multi_reduction <add>, %67, %cst_39 [0] : vector<22x128xf32> to vector<128xf32>
    %69 = vector.shape_cast %68 : vector<128xf32> to vector<1x128xf32>
    %cst_40 = arith.constant 2.200000e+01 : f32
    %70 = vector.broadcast %cst_40 : f32 to vector<1x128xf32>
    %71 = arith.divf %69, %70 : vector<1x128xf32>
    %72 = vector.broadcast %71 : vector<1x128xf32> to vector<22x128xf32>
    %73 = arith.subf %67, %72 : vector<22x128xf32>
    %74 = arith.mulf %73, %73 : vector<22x128xf32>
    %cst_41 = arith.constant dense<0.000000e+00> : vector<128xf32>
    %75 = vector.multi_reduction <add>, %74, %cst_41 [0] : vector<22x128xf32> to vector<128xf32>
    %76 = vector.shape_cast %75 : vector<128xf32> to vector<1x128xf32>
    %cst_42 = arith.constant 2.200000e+01 : f32
    %77 = vector.broadcast %cst_42 : f32 to vector<1x128xf32>
    %78 = arith.divf %76, %77 : vector<1x128xf32>
    %79 = vector.broadcast %71 : vector<1x128xf32> to vector<22x128xf32>
    %80 = arith.subf %67, %79 : vector<22x128xf32>
    %cst_43 = arith.constant 9.99999974E-6 : f32
    %81 = vector.broadcast %cst_43 : f32 to vector<1x128xf32>
    %82 = arith.addf %78, %81 : vector<1x128xf32>
    %83 = math.rsqrt %82 : vector<1x128xf32>
    %84 = vector.broadcast %83 : vector<1x128xf32> to vector<22x128xf32>
    %85 = arith.mulf %80, %84 : vector<22x128xf32>
    %c0_44 = arith.constant 0 : index
    %c0_45 = arith.constant 0 : index
    %86 = vector.load %arg7[%c0_44, %c0_45] : memref<1x128xf32, #tpu.memory_space<vmem>>, vector<1x128xf32>
    %87 = vector.broadcast %86 : vector<1x128xf32> to vector<22x128xf32>
    %88 = arith.mulf %85, %87 : vector<22x128xf32>
    %c0_46 = arith.constant 0 : index
    %c0_47 = arith.constant 0 : index
    %89 = vector.load %arg8[%c0_46, %c0_47] : memref<1x128xf32, #tpu.memory_space<vmem>>, vector<1x128xf32>
    %90 = vector.broadcast %89 : vector<1x128xf32> to vector<22x128xf32>
    %91 = arith.addf %88, %90 : vector<22x128xf32>
    %cst_48 = arith.constant 0.000000e+00 : f32
    %92 = vector.broadcast %cst_48 : f32 to vector<22x128xf32>
    %93 = arith.cmpf ogt, %91, %92 : vector<22x128xf32>
    %cst_49 = arith.constant 1.000000e-01 : f32
    %94 = vector.broadcast %cst_49 : f32 to vector<22x128xf32>
    %95 = arith.mulf %94, %91 : vector<22x128xf32>
    %96 = arith.select %93, %91, %95 : vector<22x128xi1>, vector<22x128xf32>
    %cst_50 = arith.constant 0.000000e+00 : f32
    %97 = vector.broadcast %cst_50 : f32 to vector<2x128xf32>
    %98 = vector.extract_strided_slice %96 {offsets = [0, 0], sizes = [20, 128], strides = [1, 1]} : vector<22x128xf32> to vector<20x128xf32>
    %99 = tpu.concatenate %97, %98 in 0 : vector<2x128xf32>, vector<20x128xf32> -> vector<22x128xf32>
    %100 = vector.extract_strided_slice %96 {offsets = [2, 0], sizes = [20, 128], strides = [1, 1]} : vector<22x128xf32> to vector<20x128xf32>
    %101 = tpu.concatenate %100, %97 in 0 : vector<20x128xf32>, vector<2x128xf32> -> vector<22x128xf32>
    %c0_51 = arith.constant 0 : index
    %c0_52 = arith.constant 0 : index
    %c0_53 = arith.constant 0 : index
    %102 = vector.load %arg9[%c0_51, %c0_52, %c0_53] : memref<3x128x256xf32, #tpu.memory_space<vmem>>, vector<1x128x256xf32>
    %103 = vector.shape_cast %102 : vector<1x128x256xf32> to vector<128x256xf32>
    %cst_54 = arith.constant dense<0.000000e+00> : vector<22x256xf32>
    %104 = tpu.matmul %99, %103, %cst_54 {dimension_numbers = #tpu.dot_dimension_numbers<[1], [0], [0], [1], [0, 0, 1, 1], [], []>} : vector<22x128xf32>, vector<128x256xf32>, vector<22x256xf32> -> vector<22x256xf32>
    %c1_55 = arith.constant 1 : index
    %c0_56 = arith.constant 0 : index
    %c0_57 = arith.constant 0 : index
    %105 = vector.load %arg9[%c1_55, %c0_56, %c0_57] : memref<3x128x256xf32, #tpu.memory_space<vmem>>, vector<1x128x256xf32>
    %106 = vector.shape_cast %105 : vector<1x128x256xf32> to vector<128x256xf32>
    %cst_58 = arith.constant dense<0.000000e+00> : vector<22x256xf32>
    %107 = tpu.matmul %96, %106, %cst_58 {dimension_numbers = #tpu.dot_dimension_numbers<[1], [0], [0], [1], [0, 0, 1, 1], [], []>} : vector<22x128xf32>, vector<128x256xf32>, vector<22x256xf32> -> vector<22x256xf32>
    %108 = arith.addf %104, %107 : vector<22x256xf32>
    %c2_59 = arith.constant 2 : index
    %c0_60 = arith.constant 0 : index
    %c0_61 = arith.constant 0 : index
    %109 = vector.load %arg9[%c2_59, %c0_60, %c0_61] : memref<3x128x256xf32, #tpu.memory_space<vmem>>, vector<1x128x256xf32>
    %110 = vector.shape_cast %109 : vector<1x128x256xf32> to vector<128x256xf32>
    %cst_62 = arith.constant dense<0.000000e+00> : vector<22x256xf32>
    %111 = tpu.matmul %101, %110, %cst_62 {dimension_numbers = #tpu.dot_dimension_numbers<[1], [0], [0], [1], [0, 0, 1, 1], [], []>} : vector<22x128xf32>, vector<128x256xf32>, vector<22x256xf32> -> vector<22x256xf32>
    %112 = arith.addf %108, %111 : vector<22x256xf32>
    %c0_63 = arith.constant 0 : index
    %c0_64 = arith.constant 0 : index
    %113 = vector.load %arg10[%c0_63, %c0_64] : memref<1x256xf32, #tpu.memory_space<vmem>>, vector<1x256xf32>
    %114 = vector.broadcast %113 : vector<1x256xf32> to vector<22x256xf32>
    %115 = arith.addf %112, %114 : vector<22x256xf32>
    %cst_65 = arith.constant dense<0.000000e+00> : vector<256xf32>
    %116 = vector.multi_reduction <add>, %115, %cst_65 [0] : vector<22x256xf32> to vector<256xf32>
    %117 = vector.shape_cast %116 : vector<256xf32> to vector<1x256xf32>
    %cst_66 = arith.constant 2.200000e+01 : f32
    %118 = vector.broadcast %cst_66 : f32 to vector<1x256xf32>
    %119 = arith.divf %117, %118 : vector<1x256xf32>
    %120 = vector.broadcast %119 : vector<1x256xf32> to vector<22x256xf32>
    %121 = arith.subf %115, %120 : vector<22x256xf32>
    %122 = arith.mulf %121, %121 : vector<22x256xf32>
    %cst_67 = arith.constant dense<0.000000e+00> : vector<256xf32>
    %123 = vector.multi_reduction <add>, %122, %cst_67 [0] : vector<22x256xf32> to vector<256xf32>
    %124 = vector.shape_cast %123 : vector<256xf32> to vector<1x256xf32>
    %cst_68 = arith.constant 2.200000e+01 : f32
    %125 = vector.broadcast %cst_68 : f32 to vector<1x256xf32>
    %126 = arith.divf %124, %125 : vector<1x256xf32>
    %127 = vector.broadcast %119 : vector<1x256xf32> to vector<22x256xf32>
    %128 = arith.subf %115, %127 : vector<22x256xf32>
    %cst_69 = arith.constant 9.99999974E-6 : f32
    %129 = vector.broadcast %cst_69 : f32 to vector<1x256xf32>
    %130 = arith.addf %126, %129 : vector<1x256xf32>
    %131 = math.rsqrt %130 : vector<1x256xf32>
    %132 = vector.broadcast %131 : vector<1x256xf32> to vector<22x256xf32>
    %133 = arith.mulf %128, %132 : vector<22x256xf32>
    %c0_70 = arith.constant 0 : index
    %c0_71 = arith.constant 0 : index
    %134 = vector.load %arg11[%c0_70, %c0_71] : memref<1x256xf32, #tpu.memory_space<vmem>>, vector<1x256xf32>
    %135 = vector.broadcast %134 : vector<1x256xf32> to vector<22x256xf32>
    %136 = arith.mulf %133, %135 : vector<22x256xf32>
    %c0_72 = arith.constant 0 : index
    %c0_73 = arith.constant 0 : index
    %137 = vector.load %arg12[%c0_72, %c0_73] : memref<1x256xf32, #tpu.memory_space<vmem>>, vector<1x256xf32>
    %138 = vector.broadcast %137 : vector<1x256xf32> to vector<22x256xf32>
    %139 = arith.addf %136, %138 : vector<22x256xf32>
    %cst_74 = arith.constant 0.000000e+00 : f32
    %140 = vector.broadcast %cst_74 : f32 to vector<22x256xf32>
    %141 = arith.cmpf ogt, %139, %140 : vector<22x256xf32>
    %cst_75 = arith.constant 1.000000e-01 : f32
    %142 = vector.broadcast %cst_75 : f32 to vector<22x256xf32>
    %143 = arith.mulf %142, %139 : vector<22x256xf32>
    %144 = arith.select %141, %139, %143 : vector<22x256xi1>, vector<22x256xf32>
    %cst_76 = arith.constant 0.000000e+00 : f32
    %145 = vector.broadcast %cst_76 : f32 to vector<2x256xf32>
    %146 = vector.extract_strided_slice %144 {offsets = [0, 0], sizes = [2, 256], strides = [1, 1]} : vector<22x256xf32> to vector<2x256xf32>
    %c0_77 = arith.constant 0 : index
    %c0_78 = arith.constant 0 : index
    %147 = vector.load %arg13[%c0_77, %c0_78] : memref<2816x256xf32, #tpu.memory_space<vmem>>, vector<256x256xf32>
    %cst_79 = arith.constant dense<0.000000e+00> : vector<2x256xf32>
    %148 = tpu.matmul %146, %147, %cst_79 {dimension_numbers = #tpu.dot_dimension_numbers<[1], [0], [0], [1], [0, 0, 1, 1], [], []>} : vector<2x256xf32>, vector<256x256xf32>, vector<2x256xf32> -> vector<2x256xf32>
    %149 = arith.addf %145, %148 : vector<2x256xf32>
    %150 = vector.extract_strided_slice %144 {offsets = [2, 0], sizes = [2, 256], strides = [1, 1]} : vector<22x256xf32> to vector<2x256xf32>
    %c256 = arith.constant 256 : index
    %c0_80 = arith.constant 0 : index
    %151 = vector.load %arg13[%c256, %c0_80] : memref<2816x256xf32, #tpu.memory_space<vmem>>, vector<256x256xf32>
    %cst_81 = arith.constant dense<0.000000e+00> : vector<2x256xf32>
    %152 = tpu.matmul %150, %151, %cst_81 {dimension_numbers = #tpu.dot_dimension_numbers<[1], [0], [0], [1], [0, 0, 1, 1], [], []>} : vector<2x256xf32>, vector<256x256xf32>, vector<2x256xf32> -> vector<2x256xf32>
    %153 = arith.addf %149, %152 : vector<2x256xf32>
    %154 = vector.extract_strided_slice %144 {offsets = [4, 0], sizes = [2, 256], strides = [1, 1]} : vector<22x256xf32> to vector<2x256xf32>
    %c512 = arith.constant 512 : index
    %c0_82 = arith.constant 0 : index
    %155 = vector.load %arg13[%c512, %c0_82] : memref<2816x256xf32, #tpu.memory_space<vmem>>, vector<256x256xf32>
    %cst_83 = arith.constant dense<0.000000e+00> : vector<2x256xf32>
    %156 = tpu.matmul %154, %155, %cst_83 {dimension_numbers = #tpu.dot_dimension_numbers<[1], [0], [0], [1], [0, 0, 1, 1], [], []>} : vector<2x256xf32>, vector<256x256xf32>, vector<2x256xf32> -> vector<2x256xf32>
    %157 = arith.addf %153, %156 : vector<2x256xf32>
    %158 = vector.extract_strided_slice %144 {offsets = [6, 0], sizes = [2, 256], strides = [1, 1]} : vector<22x256xf32> to vector<2x256xf32>
    %c768 = arith.constant 768 : index
    %c0_84 = arith.constant 0 : index
    %159 = vector.load %arg13[%c768, %c0_84] : memref<2816x256xf32, #tpu.memory_space<vmem>>, vector<256x256xf32>
    %cst_85 = arith.constant dense<0.000000e+00> : vector<2x256xf32>
    %160 = tpu.matmul %158, %159, %cst_85 {dimension_numbers = #tpu.dot_dimension_numbers<[1], [0], [0], [1], [0, 0, 1, 1], [], []>} : vector<2x256xf32>, vector<256x256xf32>, vector<2x256xf32> -> vector<2x256xf32>
    %161 = arith.addf %157, %160 : vector<2x256xf32>
    %162 = vector.extract_strided_slice %144 {offsets = [8, 0], sizes = [2, 256], strides = [1, 1]} : vector<22x256xf32> to vector<2x256xf32>
    %c1024 = arith.constant 1024 : index
    %c0_86 = arith.constant 0 : index
    %163 = vector.load %arg13[%c1024, %c0_86] : memref<2816x256xf32, #tpu.memory_space<vmem>>, vector<256x256xf32>
    %cst_87 = arith.constant dense<0.000000e+00> : vector<2x256xf32>
    %164 = tpu.matmul %162, %163, %cst_87 {dimension_numbers = #tpu.dot_dimension_numbers<[1], [0], [0], [1], [0, 0, 1, 1], [], []>} : vector<2x256xf32>, vector<256x256xf32>, vector<2x256xf32> -> vector<2x256xf32>
    %165 = arith.addf %161, %164 : vector<2x256xf32>
    %166 = vector.extract_strided_slice %144 {offsets = [10, 0], sizes = [2, 256], strides = [1, 1]} : vector<22x256xf32> to vector<2x256xf32>
    %c1280 = arith.constant 1280 : index
    %c0_88 = arith.constant 0 : index
    %167 = vector.load %arg13[%c1280, %c0_88] : memref<2816x256xf32, #tpu.memory_space<vmem>>, vector<256x256xf32>
    %cst_89 = arith.constant dense<0.000000e+00> : vector<2x256xf32>
    %168 = tpu.matmul %166, %167, %cst_89 {dimension_numbers = #tpu.dot_dimension_numbers<[1], [0], [0], [1], [0, 0, 1, 1], [], []>} : vector<2x256xf32>, vector<256x256xf32>, vector<2x256xf32> -> vector<2x256xf32>
    %169 = arith.addf %165, %168 : vector<2x256xf32>
    %170 = vector.extract_strided_slice %144 {offsets = [12, 0], sizes = [2, 256], strides = [1, 1]} : vector<22x256xf32> to vector<2x256xf32>
    %c1536 = arith.constant 1536 : index
    %c0_90 = arith.constant 0 : index
    %171 = vector.load %arg13[%c1536, %c0_90] : memref<2816x256xf32, #tpu.memory_space<vmem>>, vector<256x256xf32>
    %cst_91 = arith.constant dense<0.000000e+00> : vector<2x256xf32>
    %172 = tpu.matmul %170, %171, %cst_91 {dimension_numbers = #tpu.dot_dimension_numbers<[1], [0], [0], [1], [0, 0, 1, 1], [], []>} : vector<2x256xf32>, vector<256x256xf32>, vector<2x256xf32> -> vector<2x256xf32>
    %173 = arith.addf %169, %172 : vector<2x256xf32>
    %174 = vector.extract_strided_slice %144 {offsets = [14, 0], sizes = [2, 256], strides = [1, 1]} : vector<22x256xf32> to vector<2x256xf32>
    %c1792 = arith.constant 1792 : index
    %c0_92 = arith.constant 0 : index
    %175 = vector.load %arg13[%c1792, %c0_92] : memref<2816x256xf32, #tpu.memory_space<vmem>>, vector<256x256xf32>
    %cst_93 = arith.constant dense<0.000000e+00> : vector<2x256xf32>
    %176 = tpu.matmul %174, %175, %cst_93 {dimension_numbers = #tpu.dot_dimension_numbers<[1], [0], [0], [1], [0, 0, 1, 1], [], []>} : vector<2x256xf32>, vector<256x256xf32>, vector<2x256xf32> -> vector<2x256xf32>
    %177 = arith.addf %173, %176 : vector<2x256xf32>
    %178 = vector.extract_strided_slice %144 {offsets = [16, 0], sizes = [2, 256], strides = [1, 1]} : vector<22x256xf32> to vector<2x256xf32>
    %c2048 = arith.constant 2048 : index
    %c0_94 = arith.constant 0 : index
    %179 = vector.load %arg13[%c2048, %c0_94] : memref<2816x256xf32, #tpu.memory_space<vmem>>, vector<256x256xf32>
    %cst_95 = arith.constant dense<0.000000e+00> : vector<2x256xf32>
    %180 = tpu.matmul %178, %179, %cst_95 {dimension_numbers = #tpu.dot_dimension_numbers<[1], [0], [0], [1], [0, 0, 1, 1], [], []>} : vector<2x256xf32>, vector<256x256xf32>, vector<2x256xf32> -> vector<2x256xf32>
    %181 = arith.addf %177, %180 : vector<2x256xf32>
    %182 = vector.extract_strided_slice %144 {offsets = [18, 0], sizes = [2, 256], strides = [1, 1]} : vector<22x256xf32> to vector<2x256xf32>
    %c2304 = arith.constant 2304 : index
    %c0_96 = arith.constant 0 : index
    %183 = vector.load %arg13[%c2304, %c0_96] : memref<2816x256xf32, #tpu.memory_space<vmem>>, vector<256x256xf32>
    %cst_97 = arith.constant dense<0.000000e+00> : vector<2x256xf32>
    %184 = tpu.matmul %182, %183, %cst_97 {dimension_numbers = #tpu.dot_dimension_numbers<[1], [0], [0], [1], [0, 0, 1, 1], [], []>} : vector<2x256xf32>, vector<256x256xf32>, vector<2x256xf32> -> vector<2x256xf32>
    %185 = arith.addf %181, %184 : vector<2x256xf32>
    %186 = vector.extract_strided_slice %144 {offsets = [20, 0], sizes = [2, 256], strides = [1, 1]} : vector<22x256xf32> to vector<2x256xf32>
    %c2560 = arith.constant 2560 : index
    %c0_98 = arith.constant 0 : index
    %187 = vector.load %arg13[%c2560, %c0_98] : memref<2816x256xf32, #tpu.memory_space<vmem>>, vector<256x256xf32>
    %cst_99 = arith.constant dense<0.000000e+00> : vector<2x256xf32>
    %188 = tpu.matmul %186, %187, %cst_99 {dimension_numbers = #tpu.dot_dimension_numbers<[1], [0], [0], [1], [0, 0, 1, 1], [], []>} : vector<2x256xf32>, vector<256x256xf32>, vector<2x256xf32> -> vector<2x256xf32>
    %189 = arith.addf %185, %188 : vector<2x256xf32>
    %c0_100 = arith.constant 0 : index
    %c0_101 = arith.constant 0 : index
    %190 = vector.load %arg14[%c0_100, %c0_101] : memref<1x256xf32, #tpu.memory_space<vmem>>, vector<1x256xf32>
    %191 = vector.broadcast %190 : vector<1x256xf32> to vector<2x256xf32>
    %192 = arith.addf %189, %191 : vector<2x256xf32>
    %c0_102 = arith.constant 0 : index
    %c0_103 = arith.constant 0 : index
    %193 = vector.load %arg15[%c0_102, %c0_103] : memref<2x256xf32, #tpu.memory_space<vmem>>, vector<2x256xf32>
    tpu.vector_store %arg15[%c0_102, %c0_103], %192 {strides = array<i32>} : memref<2x256xf32, #tpu.memory_space<vmem>>, vector<2x256xf32>,
    return
  }
}

</mosaic_0001>

<llo_original>
// kernel: tpu_custom_call.1
$region0: #{tpu_custom_call.1}
  #allocation0 [shape = 'u32[]', space=smem, size = 0x4, offset = 0x4, fixed_abs, tag = 'smem constant byte address 0x4 - core index']
  #allocation1 [shape = 'u32[144,128]{1,0:T(1,128)}', space=vmem, size = 0x12000, scoped, tag = 'internal scratch']
  %s0 = inlined_call_operand.vmem [shape: f32[22,6], index: 0, kind: input, shape index: {}]
  %s1 = inlined_call_operand.hbm [shape: f32[3,6,64], index: 1, kind: input, shape index: {}]
  %s2 = inlined_call_operand.hbm [shape: f32[1,64], index: 2, kind: input, shape index: {}]
  %s3 = inlined_call_operand.hbm [shape: f32[1,64], index: 3, kind: input, shape index: {}]
  %s4 = inlined_call_operand.hbm [shape: f32[1,64], index: 4, kind: input, shape index: {}]
  %s5 = inlined_call_operand.hbm [shape: f32[3,64,128], index: 5, kind: input, shape index: {}]
  %s6 = inlined_call_operand.hbm [shape: f32[1,128], index: 6, kind: input, shape index: {}]
  %s7 = inlined_call_operand.hbm [shape: f32[1,128], index: 7, kind: input, shape index: {}]
  %s8 = inlined_call_operand.hbm [shape: f32[1,128], index: 8, kind: input, shape index: {}]
  %s9 = inlined_call_operand.hbm [shape: f32[3,128,256], index: 9, kind: input, shape index: {}]
  %s10 = inlined_call_operand.hbm [shape: f32[1,256], index: 10, kind: input, shape index: {}]
  %s11 = inlined_call_operand.hbm [shape: f32[1,256], index: 11, kind: input, shape index: {}]
  %s12 = inlined_call_operand.hbm [shape: f32[1,256], index: 12, kind: input, shape index: {}]
  %s13 = inlined_call_operand.hbm [shape: f32[2816,256], index: 13, kind: input, shape index: {}]
  %s14 = inlined_call_operand.hbm [shape: f32[1,256], index: 14, kind: input, shape index: {}]
  %s15 = inlined_call_operand.hbm [shape: f32[2,256], index: 15, kind: output, shape index: {}]
  %s16 = sld [smem:[#allocation0]]
  $region126: #{tpu_custom_call.1} parent=0
    _
  %s18 = ssub.s32 1, %s16
  %s19 = scalar_select 0, %s18, %s16
  $region1: #{tpu_custom_call.1} parent=0
    #allocation2 [shape = 'u8[12288]{0}', space=vmem, size = 0x3000, scoped, tag = 'input window, operand 1, single buffered']
    #allocation3 [shape = 's32[1]{0}', space=sflag, size = 0x4, scoped, tag = 'scoped memory for tpu_custom_call.1']
    #allocation4 [shape = 's32[1]{0}', space=sflag, size = 0x4, scoped, tag = 'scoped memory for tpu_custom_call.1']
    #allocation5 [shape = 'u8[512]{0}', space=vmem, size = 0x400, scoped, tag = 'input window, operand 2, single buffered']
    #allocation6 [shape = 's32[1]{0}', space=sflag, size = 0x4, scoped, tag = 'scoped memory for tpu_custom_call.1']
    #allocation7 [shape = 'u8[512]{0}', space=vmem, size = 0x400, scoped, tag = 'input window, operand 3, single buffered']
    #allocation8 [shape = 'u8[512]{0}', space=vmem, size = 0x400, scoped, tag = 'input window, operand 4, single buffered']
    #allocation9 [shape = 's32[1]{0}', space=sflag, size = 0x4, scoped, tag = 'scoped memory for tpu_custom_call.1']
    #allocation10 [shape = 'u8[98304]{0}', space=vmem, size = 0x18000, scoped, tag = 'input window, operand 5, single buffered']
    #allocation11 [shape = 'u8[512]{0}', space=vmem, size = 0x400, scoped, tag = 'input window, operand 6, single buffered']
    #allocation12 [shape = 's32[1]{0}', space=sflag, size = 0x4, scoped, tag = 'scoped memory for tpu_custom_call.1']
    #allocation13 [shape = 'u8[512]{0}', space=vmem, size = 0x400, scoped, tag = 'input window, operand 7, single buffered']
    #allocation14 [shape = 'u8[512]{0}', space=vmem, size = 0x400, scoped, tag = 'input window, operand 8, single buffered']
    #allocation15 [shape = 's32[1]{0}', space=sflag, size = 0x4, scoped, tag = 'scoped memory for tpu_custom_call.1']
    #allocation16 [shape = 'u8[393216]{0}', space=vmem, size = 0x60000, scoped, tag = 'input window, operand 9, single buffered']
    #allocation17 [shape = 'u8[1024]{0}', space=vmem, size = 0x400, scoped, tag = 'input window, operand 10, single buffered']
    #allocation18 [shape = 's32[1]{0}', space=sflag, size = 0x4, scoped, tag = 'scoped memory for tpu_custom_call.1']
    #allocation19 [shape = 'u8[1024]{0}', space=vmem, size = 0x400, scoped, tag = 'input window, operand 11, single buffered']
    #allocation20 [shape = 'u8[1024]{0}', space=vmem, size = 0x400, scoped, tag = 'input window, operand 12, single buffered']
    #allocation21 [shape = 's32[1]{0}', space=sflag, size = 0x4, scoped, tag = 'scoped memory for tpu_custom_call.1']
    #allocation22 [shape = 'u8[2883584]{0}', space=vmem, size = 0x2c0000, scoped, tag = 'input window, operand 13, single buffered']
    #allocation23 [shape = 'u8[1024]{0}', space=vmem, size = 0x400, scoped, tag = 'input window, operand 14, single buffered']
    #allocation24 [shape = 's32[1]{0}', space=sflag, size = 0x4, scoped, tag = 'scoped memory for tpu_custom_call.1']
    #allocation25 [shape = 'u8[2048]{0}', space=vmem, size = 0x800, scoped, tag = 'output window, operand 0, single buffered']
    %20 = vsyncpa [#allocation3], 0
    %21 = vsyncpa [#allocation6], 0
    %22 = vsyncpa [#allocation9], 0
    %23 = vsyncpa [#allocation12], 0
    %24 = vsyncpa [#allocation15], 0
    %25 = vsyncpa [#allocation18], 0
    %26 = vsyncpa [#allocation21], 0
    %27 = vsyncpa [#allocation24], 0
    %28 = vsyncpa [#allocation4], 0
    // Predicated region
    $region2: #{tpu_custom_call.1} parent=1 // pred_check
      _
    $region3: #{tpu_custom_call.1} parent=1 // pred_check_branch
      %30 = sbr.rel (0) target = $region5
    $region4: #{tpu_custom_call.1} parent=1 // pred_region
      _
    $region5: #{tpu_custom_call.1} parent=1 // pred_fallthru
      _
    // Predicated region
    $region6: #{tpu_custom_call.1} parent=1 // pred_check
      _
    $region7: #{tpu_custom_call.1} parent=1 // pred_check_branch
      %32 = sbr.rel (0) target = $region9
    $region8: #{tpu_custom_call.1} parent=1 // pred_region
      %s34 = ssub.s32 384, 384
      %35 = vsyncadd [#allocation3], %s34
      %s36 = sshll.u32 [#allocation2], 4
      %s37 = int_to_ptr.vmem [resolvable:$true] %s36
      %42 = dma.hbm_to_vmem [thread:$0]  %s1, 384, %s37, [#allocation3], 128, 128, 8
    $region9: #{tpu_custom_call.1} parent=1 // pred_fallthru
      _
    // Predicated region
    $region10: #{tpu_custom_call.1} parent=1 // pred_check
      _
    $region11: #{tpu_custom_call.1} parent=1 // pred_check_branch
      %44 = sbr.rel (0) target = $region13
    $region12: #{tpu_custom_call.1} parent=1 // pred_region
      %s46 = ssub.s32 16, 16
      %47 = vsyncadd [#allocation6], %s46
      %s49 = sshll.u32 [#allocation5], 4
      %s50 = int_to_ptr.vmem [resolvable:$true] %s49
      %52 = dma.hbm_to_vmem [thread:$0]  %s2, 16, %s50, [#allocation6]
    $region13: #{tpu_custom_call.1} parent=1 // pred_fallthru
      _
    // Predicated region
    $region14: #{tpu_custom_call.1} parent=1 // pred_check
      _
    $region15: #{tpu_custom_call.1} parent=1 // pred_check_branch
      %54 = sbr.rel (0) target = $region17
    $region16: #{tpu_custom_call.1} parent=1 // pred_region
      %s56 = ssub.s32 16, 16
      %57 = vsyncadd [#allocation6], %s56
      %s59 = sshll.u32 [#allocation7], 4
      %s60 = int_to_ptr.vmem [resolvable:$true] %s59
      %62 = dma.hbm_to_vmem [thread:$0]  %s3, 16, %s60, [#allocation6]
    $region17: #{tpu_custom_call.1} parent=1 // pred_fallthru
      _
    // Predicated region
    $region18: #{tpu_custom_call.1} parent=1 // pred_check
      _
    $region19: #{tpu_custom_call.1} parent=1 // pred_check_branch
      %64 = sbr.rel (0) target = $region21
    $region20: #{tpu_custom_call.1} parent=1 // pred_region
      %s66 = ssub.s32 16, 16
      %67 = vsyncadd [#allocation9], %s66
      %s69 = sshll.u32 [#allocation8], 4
      %s70 = int_to_ptr.vmem [resolvable:$true] %s69
      %72 = dma.hbm_to_vmem [thread:$0]  %s4, 16, %s70, [#allocation9]
    $region21: #{tpu_custom_call.1} parent=1 // pred_fallthru
      _
    // Predicated region
    $region22: #{tpu_custom_call.1} parent=1 // pred_check
      _
    $region23: #{tpu_custom_call.1} parent=1 // pred_check_branch
      %74 = sbr.rel (0) target = $region25
    $region24: #{tpu_custom_call.1} parent=1 // pred_region
      %s76 = ssub.s32 3072, 3072
      %77 = vsyncadd [#allocation9], %s76
      %s78 = sshll.u32 [#allocation10], 4
      %s79 = int_to_ptr.vmem [resolvable:$true] %s78
      %84 = dma.hbm_to_vmem [thread:$0]  %s5, 3072, %s79, [#allocation9], 128, 128, 8
    $region25: #{tpu_custom_call.1} parent=1 // pred_fallthru
      _
    // Predicated region
    $region26: #{tpu_custom_call.1} parent=1 // pred_check
      _
    $region27: #{tpu_custom_call.1} parent=1 // pred_check_branch
      %86 = sbr.rel (0) target = $region29
    $region28: #{tpu_custom_call.1} parent=1 // pred_region
      %s88 = ssub.s32 16, 16
      %89 = vsyncadd [#allocation12], %s88
      %s91 = sshll.u32 [#allocation11], 4
      %s92 = int_to_ptr.vmem [resolvable:$true] %s91
      %94 = dma.hbm_to_vmem [thread:$0]  %s6, 16, %s92, [#allocation12]
    $region29: #{tpu_custom_call.1} parent=1 // pred_fallthru
      _
    // Predicated region
    $region30: #{tpu_custom_call.1} parent=1 // pred_check
      _
    $region31: #{tpu_custom_call.1} parent=1 // pred_check_branch
      %96 = sbr.rel (0) target = $region33
    $region32: #{tpu_custom_call.1} parent=1 // pred_region
      %s98 = ssub.s32 16, 16
      %99 = vsyncadd [#allocation12], %s98
      %s101 = sshll.u32 [#allocation13], 4
      %s102 = int_to_ptr.vmem [resolvable:$true] %s101
      %104 = dma.hbm_to_vmem [thread:$0]  %s7, 16, %s102, [#allocation12]
    $region33: #{tpu_custom_call.1} parent=1 // pred_fallthru
      _
    // Predicated region
    $region34: #{tpu_custom_call.1} parent=1 // pred_check
      _
    $region35: #{tpu_custom_call.1} parent=1 // pred_check_branch
      %106 = sbr.rel (0) target = $region37
    $region36: #{tpu_custom_call.1} parent=1 // pred_region
      %s108 = ssub.s32 16, 16
      %109 = vsyncadd [#allocation15], %s108
      %s111 = sshll.u32 [#allocation14], 4
      %s112 = int_to_ptr.vmem [resolvable:$true] %s111
      %114 = dma.hbm_to_vmem [thread:$0]  %s8, 16, %s112, [#allocation15]
    $region37: #{tpu_custom_call.1} parent=1 // pred_fallthru
      _
    // Predicated region
    $region38: #{tpu_custom_call.1} parent=1 // pred_check
      _
    $region39: #{tpu_custom_call.1} parent=1 // pred_check_branch
      %116 = sbr.rel (0) target = $region41
    $region40: #{tpu_custom_call.1} parent=1 // pred_region
      %s118 = ssub.s32 12288, 12288
      %119 = vsyncadd [#allocation15], %s118
      %s120 = sshll.u32 [#allocation16], 4
      %s121 = int_to_ptr.vmem [resolvable:$true] %s120
      %126 = dma.hbm_to_vmem [thread:$0]  %s9, 12288, %s121, [#allocation15], 256, 256, 16
    $region41: #{tpu_custom_call.1} parent=1 // pred_fallthru
      _
    // Predicated region
    $region42: #{tpu_custom_call.1} parent=1 // pred_check
      _
    $region43: #{tpu_custom_call.1} parent=1 // pred_check_branch
      %128 = sbr.rel (0) target = $region45
    $region44: #{tpu_custom_call.1} parent=1 // pred_region
      %s130 = ssub.s32 32, 32
      %131 = vsyncadd [#allocation18], %s130
      %s133 = sshll.u32 [#allocation17], 4
      %s134 = int_to_ptr.vmem [resolvable:$true] %s133
      %136 = dma.hbm_to_vmem [thread:$0]  %s10, 32, %s134, [#allocation18]
    $region45: #{tpu_custom_call.1} parent=1 // pred_fallthru
      _
    // Predicated region
    $region46: #{tpu_custom_call.1} parent=1 // pred_check
      _
    $region47: #{tpu_custom_call.1} parent=1 // pred_check_branch
      %138 = sbr.rel (0) target = $region49
    $region48: #{tpu_custom_call.1} parent=1 // pred_region
      %s140 = ssub.s32 32, 32
      %141 = vsyncadd [#allocation18], %s140
      %s143 = sshll.u32 [#allocation19], 4
      %s144 = int_to_ptr.vmem [resolvable:$true] %s143
      %146 = dma.hbm_to_vmem [thread:$0]  %s11, 32, %s144, [#allocation18]
    $region49: #{tpu_custom_call.1} parent=1 // pred_fallthru
      _
    // Predicated region
    $region50: #{tpu_custom_call.1} parent=1 // pred_check
      _
    $region51: #{tpu_custom_call.1} parent=1 // pred_check_branch
      %148 = sbr.rel (0) target = $region53
    $region52: #{tpu_custom_call.1} parent=1 // pred_region
      %s150 = ssub.s32 32, 32
      %151 = vsyncadd [#allocation21], %s150
      %s153 = sshll.u32 [#allocation20], 4
      %s154 = int_to_ptr.vmem [resolvable:$true] %s153
      %156 = dma.hbm_to_vmem [thread:$0]  %s12, 32, %s154, [#allocation21]
    $region53: #{tpu_custom_call.1} parent=1 // pred_fallthru
      _
    // Predicated region
    $region54: #{tpu_custom_call.1} parent=1 // pred_check
      _
    $region55: #{tpu_custom_call.1} parent=1 // pred_check_branch
      %158 = sbr.rel (0) target = $region57
    $region56: #{tpu_custom_call.1} parent=1 // pred_region
      %s160 = ssub.s32 90112, 90112
      %161 = vsyncadd [#allocation21], %s160
      %s162 = sshll.u32 [#allocation22], 4
      %s163 = int_to_ptr.vmem [resolvable:$true] %s162
      %168 = dma.hbm_to_vmem [thread:$0]  %s13, 90112, %s163, [#allocation21], 256, 256, 16
    $region57: #{tpu_custom_call.1} parent=1 // pred_fallthru
      _
    // Predicated region
    $region58: #{tpu_custom_call.1} parent=1 // pred_check
      _
    $region59: #{tpu_custom_call.1} parent=1 // pred_check_branch
      %170 = sbr.rel (0) target = $region61
    $region60: #{tpu_custom_call.1} parent=1 // pred_region
      %s172 = ssub.s32 32, 32
      %173 = vsyncadd [#allocation24], %s172
      %s175 = sshll.u32 [#allocation23], 4
      %s176 = int_to_ptr.vmem [resolvable:$true] %s175
      %178 = dma.hbm_to_vmem [thread:$0]  %s14, 32, %s176, [#allocation24]
    $region61: #{tpu_custom_call.1} parent=1 // pred_fallthru
      _
    // Predicated region
    $region62: #{tpu_custom_call.1} parent=1 // pred_check
      _
    $region63: #{tpu_custom_call.1} parent=1 // pred_check_branch
      %180 = sbr.rel (0) target = $region65
    $region64: #{tpu_custom_call.1} parent=1 // pred_region
      %181 = dma.done [#allocation3], 384
    $region65: #{tpu_custom_call.1} parent=1 // pred_fallthru
      _
    // Predicated region
    $region66: #{tpu_custom_call.1} parent=1 // pred_check
      _
    $region67: #{tpu_custom_call.1} parent=1 // pred_check_branch
      %183 = sbr.rel (0) target = $region69
    $region68: #{tpu_custom_call.1} parent=1 // pred_region
      %184 = dma.done [#allocation6], 16
    $region69: #{tpu_custom_call.1} parent=1 // pred_fallthru
      _
    // Predicated region
    $region70: #{tpu_custom_call.1} parent=1 // pred_check
      _
    $region71: #{tpu_custom_call.1} parent=1 // pred_check_branch
      %186 = sbr.rel (0) target = $region73
    $region72: #{tpu_custom_call.1} parent=1 // pred_region
      %187 = dma.done [#allocation6], 16
    $region73: #{tpu_custom_call.1} parent=1 // pred_fallthru
      _
    // Predicated region
    $region74: #{tpu_custom_call.1} parent=1 // pred_check
      _
    $region75: #{tpu_custom_call.1} parent=1 // pred_check_branch
      %189 = sbr.rel (0) target = $region77
    $region76: #{tpu_custom_call.1} parent=1 // pred_region
      %190 = dma.done [#allocation9], 16
    $region77: #{tpu_custom_call.1} parent=1 // pred_fallthru
      _
    // Predicated region
    $region78: #{tpu_custom_call.1} parent=1 // pred_check
      _
    $region79: #{tpu_custom_call.1} parent=1 // pred_check_branch
      %192 = sbr.rel (0) target = $region81
    $region80: #{tpu_custom_call.1} parent=1 // pred_region
      %193 = dma.done [#allocation9], 3072
    $region81: #{tpu_custom_call.1} parent=1 // pred_fallthru
      _
    // Predicated region
    $region82: #{tpu_custom_call.1} parent=1 // pred_check
      _
    $region83: #{tpu_custom_call.1} parent=1 // pred_check_branch
      %195 = sbr.rel (0) target = $region85
    $region84: #{tpu_custom_call.1} parent=1 // pred_region
      %196 = dma.done [#allocation12], 16
    $region85: #{tpu_custom_call.1} parent=1 // pred_fallthru
      _
    // Predicated region
    $region86: #{tpu_custom_call.1} parent=1 // pred_check
      _
    $region87: #{tpu_custom_call.1} parent=1 // pred_check_branch
      %198 = sbr.rel (0) target = $region89
    $region88: #{tpu_custom_call.1} parent=1 // pred_region
      %199 = dma.done [#allocation12], 16
    $region89: #{tpu_custom_call.1} parent=1 // pred_fallthru
      _
    // Predicated region
    $region90: #{tpu_custom_call.1} parent=1 // pred_check
      _
    $region91: #{tpu_custom_call.1} parent=1 // pred_check_branch
      %201 = sbr.rel (0) target = $region93
    $region92: #{tpu_custom_call.1} parent=1 // pred_region
      %202 = dma.done [#allocation15], 16
    $region93: #{tpu_custom_call.1} parent=1 // pred_fallthru
      _
    // Predicated region
    $region94: #{tpu_custom_call.1} parent=1 // pred_check
      _
    $region95: #{tpu_custom_call.1} parent=1 // pred_check_branch
      %204 = sbr.rel (0) target = $region97
    $region96: #{tpu_custom_call.1} parent=1 // pred_region
      %205 = dma.done [#allocation15], 12288
    $region97: #{tpu_custom_call.1} parent=1 // pred_fallthru
      _
    // Predicated region
    $region98: #{tpu_custom_call.1} parent=1 // pred_check
      _
    $region99: #{tpu_custom_call.1} parent=1 // pred_check_branch
      %207 = sbr.rel (0) target = $region101
    $region100: #{tpu_custom_call.1} parent=1 // pred_region
      %208 = dma.done [#allocation18], 32
    $region101: #{tpu_custom_call.1} parent=1 // pred_fallthru
      _
    // Predicated region
    $region102: #{tpu_custom_call.1} parent=1 // pred_check
      _
    $region103: #{tpu_custom_call.1} parent=1 // pred_check_branch
      %210 = sbr.rel (0) target = $region105
    $region104: #{tpu_custom_call.1} parent=1 // pred_region
      %211 = dma.done [#allocation18], 32
    $region105: #{tpu_custom_call.1} parent=1 // pred_fallthru
      _
    // Predicated region
    $region106: #{tpu_custom_call.1} parent=1 // pred_check
      _
    $region107: #{tpu_custom_call.1} parent=1 // pred_check_branch
      %213 = sbr.rel (0) target = $region109
    $region108: #{tpu_custom_call.1} parent=1 // pred_region
      %214 = dma.done [#allocation21], 32
    $region109: #{tpu_custom_call.1} parent=1 // pred_fallthru
      _
    // Predicated region
    $region110: #{tpu_custom_call.1} parent=1 // pred_check
      _
    $region111: #{tpu_custom_call.1} parent=1 // pred_check_branch
      %216 = sbr.rel (0) target = $region113
    $region112: #{tpu_custom_call.1} parent=1 // pred_region
      %217 = dma.done [#allocation21], 90112
    $region113: #{tpu_custom_call.1} parent=1 // pred_fallthru
      _
    // Predicated region
    $region114: #{tpu_custom_call.1} parent=1 // pred_check
      _
    $region115: #{tpu_custom_call.1} parent=1 // pred_check_branch
      %219 = sbr.rel (0) target = $region117
    $region116: #{tpu_custom_call.1} parent=1 // pred_region
      %220 = dma.done [#allocation24], 32
    $region117: #{tpu_custom_call.1} parent=1 // pred_fallthru
      _
    %v221 = vld [vmem:[%s0] sm:$0xff]
    %v222 = vld [vmem:[%s0 + $0x8] sm:$0xff]
    %v223 = vld [vmem:[%s0 + $0x10] sm:$0x3f]
    %vm227 = vcmask 1041408
    %v228 = vrot.slane %v221, 6
    %v229 = vrot.slane %v222, 6
    %v230 = vsel %vm227, %v228, %v229
    %v231 = vrot.slane %v223, 6
    %v232 = vsel %vm227, %v229, %v231
    %v234 = vsel %vm227, 0.0, %v228
    %vm235 = vcmask 1045504
    %v236 = vrot.slane %v221, 2
    %v237 = vrot.slane %v222, 2
    %v238 = vsel %vm235, %v236, %v237
    %v239 = vrot.slane %v223, 2
    %v240 = vsel %vm235, %v237, %v239
    %vm242 = vcmask 1043456
    %v243 = vsel %vm242, %v239, 0.0
    %v244 = vld [vmem:[#allocation2] sm:$0x3f]
    %s245 = scalar_lea.vmem [#allocation2], 8
    %v246 = vld [vmem:[%s245] sm:$0x3f]
    %vm247 = vcmask 48128
    %v248 = vsel %vm247, %v221, 0
    %v250 = vsel %vm247, %v222, 0
    %v252 = vsel %vm247, %v223, 0
    %v255 = vsel %vm235, %v246, 0
    %257 = vmatprep.subr.mxu0 0.0
    %258 = vmatpush1.msra.mxu0 0.0
    %259 = vmatprep.subr.mxu0 0.0
    %260 = vmatpush1.msra.mxu0 0.0
    %261 = vmatprep.subr.mxu0 0.0
    %262 = vmatpush1.msra.mxu0 0.0
    %263 = vmatprep.subr.mxu0 0.0
    %264 = vmatpush1.msra.mxu0 0.0
    %265 = vmatprep.subr.mxu0 0.0
    %266 = vmatpush1.msra.mxu0 0.0
    %267 = vmatprep.subr.mxu0 0.0
    %268 = vmatpush1.msra.mxu0 0.0
    %269 = vmatprep.subr.mxu0 0.0
    %270 = vmatpush1.msra.mxu0 0.0
    %271 = vmatprep.subr.mxu0 0.0
    %272 = vmatpush1.msra.mxu0 0.0
    %273 = vmatprep.subr.mxu0 0.0
    %274 = vmatpush1.msra.mxu0 0.0
    %275 = vmatprep.subr.mxu0 0.0
    %276 = vmatpush1.msra.mxu0 0.0
    %277 = vmatprep.subr.mxu0 0.0
    %278 = vmatpush1.msra.mxu0 0.0
    %279 = vmatprep.subr.mxu0 0.0
    %280 = vmatpush1.msra.mxu0 0.0
    %281 = vmatprep.subr.mxu0 0.0
    %282 = vmatpush1.msra.mxu0 0.0
    %283 = vmatprep.subr.mxu0 0.0
    %284 = vmatpush1.msra.mxu0 0.0
    %285 = vmatprep.subr.mxu0 0.0
    %286 = vmatpush1.msra.mxu0 0.0
    %287 = vmatprep.subr.mxu0 0.0
    %288 = vmatpush1.msra.mxu0 %v255
    %289 = vmatprep.subr.mxu0 0.0
    %290 = vmatpush2.msra.mxu0 0.0
    %291 = vmatprep.subr.mxu0 0.0
    %292 = vmatpush2.msra.mxu0 0.0
    %293 = vmatprep.subr.mxu0 0.0
    %294 = vmatpush2.msra.mxu0 0.0
    %295 = vmatprep.subr.mxu0 0.0
    %296 = vmatpush2.msra.mxu0 0.0
    %297 = vmatprep.subr.mxu0 0.0
    %298 = vmatpush2.msra.mxu0 0.0
    %299 = vmatprep.subr.mxu0 0.0
    %300 = vmatpush2.msra.mxu0 0.0
    %301 = vmatprep.subr.mxu0 0.0
    %302 = vmatpush2.msra.mxu0 0.0
    %303 = vmatprep.subr.mxu0 0.0
    %304 = vmatpush2.msra.mxu0 0.0
    %305 = vmatprep.subr.mxu0 0.0
    %306 = vmatpush2.msra.mxu0 0.0
    %307 = vmatprep.subr.mxu0 0.0
    %308 = vmatpush2.msra.mxu0 0.0
    %309 = vmatprep.subr.mxu0 0.0
    %310 = vmatpush2.msra.mxu0 0.0
    %311 = vmatprep.subr.mxu0 0.0
    %312 = vmatpush2.msra.mxu0 0.0
    %313 = vmatprep.subr.mxu0 0.0
    %314 = vmatpush2.msra.mxu0 0.0
    %315 = vmatprep.subr.mxu0 0.0
    %316 = vmatpush2.msra.mxu0 0.0
    %317 = vmatprep.subr.mxu0 0.0
    %318 = vmatpush2.msra.mxu0 0.0
    %319 = vmatprep.subr.mxu0 0.0
    %320 = vmatpush2.msra.mxu0 0.0
    %321 = vmatprep.mubr.f32.mxu0 0.0
    %322 = vmatmul.mubr.f32.gmra.mxu0 %v248
    %v323 = vpop.f32.mrf.mxu0
    %v324 = vadd.f32 0.0, %v323
    %v325 = vpop.f32.mrf.mxu0
    %326 = vmatprep.mubr.f32.mxu0 0.0
    %327 = vmatmul.mubr.f32.gmra.mxu0 %v250
    %v328 = vpop.f32.mrf.mxu0
    %v329 = vadd.f32 0.0, %v328
    %v330 = vpop.f32.mrf.mxu0
    %331 = vmatprep.mubr.f32.mxu0 0.0
    %332 = vmatmul.mubr.f32.gmra.mxu0 %v252
    %v333 = vpop.f32.mrf.mxu0
    %v334 = vadd.f32 0.0, %v333
    %v335 = vpop.f32.mrf.mxu0
    %336 = vdwg.mxu0
    %v338 = vsel %vm247, %v234, 0
    %v340 = vsel %vm247, %v230, 0
    %v342 = vsel %vm247, %v232, 0
    %v345 = vsel %vm235, %v244, 0
    %347 = vmatprep.subr.mxu0 0.0
    %348 = vmatpush1.msra.mxu0 0.0
    %349 = vmatprep.subr.mxu0 0.0
    %350 = vmatpush1.msra.mxu0 0.0
    %351 = vmatprep.subr.mxu0 0.0
    %352 = vmatpush1.msra.mxu0 0.0
    %353 = vmatprep.subr.mxu0 0.0
    %354 = vmatpush1.msra.mxu0 0.0
    %355 = vmatprep.subr.mxu0 0.0
    %356 = vmatpush1.msra.mxu0 0.0
    %357 = vmatprep.subr.mxu0 0.0
    %358 = vmatpush1.msra.mxu0 0.0
    %359 = vmatprep.subr.mxu0 0.0
    %360 = vmatpush1.msra.mxu0 0.0
    %361 = vmatprep.subr.mxu0 0.0
    %362 = vmatpush1.msra.mxu0 0.0
    %363 = vmatprep.subr.mxu0 0.0
    %364 = vmatpush1.msra.mxu0 0.0
    %365 = vmatprep.subr.mxu0 0.0
    %366 = vmatpush1.msra.mxu0 0.0
    %367 = vmatprep.subr.mxu0 0.0
    %368 = vmatpush1.msra.mxu0 0.0
    %369 = vmatprep.subr.mxu0 0.0
    %370 = vmatpush1.msra.mxu0 0.0
    %371 = vmatprep.subr.mxu0 0.0
    %372 = vmatpush1.msra.mxu0 0.0
    %373 = vmatprep.subr.mxu0 0.0
    %374 = vmatpush1.msra.mxu0 0.0
    %375 = vmatprep.subr.mxu0 0.0
    %376 = vmatpush1.msra.mxu0 0.0
    %377 = vmatprep.subr.mxu0 0.0
    %378 = vmatpush1.msra.mxu0 %v345
    %379 = vmatprep.subr.mxu0 0.0
    %380 = vmatpush2.msra.mxu0 0.0
    %381 = vmatprep.subr.mxu0 0.0
    %382 = vmatpush2.msra.mxu0 0.0
    %383 = vmatprep.subr.mxu0 0.0
    %384 = vmatpush2.msra.mxu0 0.0
    %385 = vmatprep.subr.mxu0 0.0
    %386 = vmatpush2.msra.mxu0 0.0
    %387 = vmatprep.subr.mxu0 0.0
    %388 = vmatpush2.msra.mxu0 0.0
    %389 = vmatprep.subr.mxu0 0.0
    %390 = vmatpush2.msra.mxu0 0.0
    %391 = vmatprep.subr.mxu0 0.0
    %392 = vmatpush2.msra.mxu0 0.0
    %393 = vmatprep.subr.mxu0 0.0
    %394 = vmatpush2.msra.mxu0 0.0
    %395 = vmatprep.subr.mxu0 0.0
    %396 = vmatpush2.msra.mxu0 0.0
    %397 = vmatprep.subr.mxu0 0.0
    %398 = vmatpush2.msra.mxu0 0.0
    %399 = vmatprep.subr.mxu0 0.0
    %400 = vmatpush2.msra.mxu0 0.0
    %401 = vmatprep.subr.mxu0 0.0
    %402 = vmatpush2.msra.mxu0 0.0
    %403 = vmatprep.subr.mxu0 0.0
    %404 = vmatpush2.msra.mxu0 0.0
    %405 = vmatprep.subr.mxu0 0.0
    %406 = vmatpush2.msra.mxu0 0.0
    %407 = vmatprep.subr.mxu0 0.0
    %408 = vmatpush2.msra.mxu0 0.0
    %409 = vmatprep.subr.mxu0 0.0
    %410 = vmatpush2.msra.mxu0 0.0
    %411 = vmatprep.mubr.f32.mxu0 0.0
    %412 = vmatmul.mubr.f32.gmra.mxu0 %v338
    %v413 = vpop.f32.mrf.mxu0
    %v414 = vadd.f32 %v324, %v413
    %v415 = vpop.f32.mrf.mxu0
    %416 = vmatprep.mubr.f32.mxu0 0.0
    %417 = vmatmul.mubr.f32.gmra.mxu0 %v340
    %v418 = vpop.f32.mrf.mxu0
    %v419 = vadd.f32 %v329, %v418
    %v420 = vpop.f32.mrf.mxu0
    %421 = vmatprep.mubr.f32.mxu0 0.0
    %422 = vmatmul.mubr.f32.gmra.mxu0 %v342
    %v423 = vpop.f32.mrf.mxu0
    %v424 = vadd.f32 %v334, %v423
    %v425 = vpop.f32.mrf.mxu0
    %426 = vdwg.mxu0
    %s427 = scalar_lea.vmem [#allocation2], 16
    %v428 = vld [vmem:[%s427] sm:$0x3f]
    %v429 = vsel %vm247, %v238, 0
    %v431 = vsel %vm247, %v240, 0
    %v434 = vsel %vm247, %v243, 0
    %v437 = vsel %vm235, %v428, 0
    %439 = vmatprep.subr.mxu0 0.0
    %440 = vmatpush1.msra.mxu0 0.0
    %441 = vmatprep.subr.mxu0 0.0
    %442 = vmatpush1.msra.mxu0 0.0
    %443 = vmatprep.subr.mxu0 0.0
    %444 = vmatpush1.msra.mxu0 0.0
    %445 = vmatprep.subr.mxu0 0.0
    %446 = vmatpush1.msra.mxu0 0.0
    %447 = vmatprep.subr.mxu0 0.0
    %448 = vmatpush1.msra.mxu0 0.0
    %449 = vmatprep.subr.mxu0 0.0
    %450 = vmatpush1.msra.mxu0 0.0
    %451 = vmatprep.subr.mxu0 0.0
    %452 = vmatpush1.msra.mxu0 0.0
    %453 = vmatprep.subr.mxu0 0.0
    %454 = vmatpush1.msra.mxu0 0.0
    %455 = vmatprep.subr.mxu0 0.0
    %456 = vmatpush1.msra.mxu0 0.0
    %457 = vmatprep.subr.mxu0 0.0
    %458 = vmatpush1.msra.mxu0 0.0
    %459 = vmatprep.subr.mxu0 0.0
    %460 = vmatpush1.msra.mxu0 0.0
    %461 = vmatprep.subr.mxu0 0.0
    %462 = vmatpush1.msra.mxu0 0.0
    %463 = vmatprep.subr.mxu0 0.0
    %464 = vmatpush1.msra.mxu0 0.0
    %465 = vmatprep.subr.mxu0 0.0
    %466 = vmatpush1.msra.mxu0 0.0
    %467 = vmatprep.subr.mxu0 0.0
    %468 = vmatpush1.msra.mxu0 0.0
    %469 = vmatprep.subr.mxu0 0.0
    %470 = vmatpush1.msra.mxu0 %v437
    %471 = vmatprep.subr.mxu0 0.0
    %472 = vmatpush2.msra.mxu0 0.0
    %473 = vmatprep.subr.mxu0 0.0
    %474 = vmatpush2.msra.mxu0 0.0
    %475 = vmatprep.subr.mxu0 0.0
    %476 = vmatpush2.msra.mxu0 0.0
    %477 = vmatprep.subr.mxu0 0.0
    %478 = vmatpush2.msra.mxu0 0.0
    %479 = vmatprep.subr.mxu0 0.0
    %480 = vmatpush2.msra.mxu0 0.0
    %481 = vmatprep.subr.mxu0 0.0
    %482 = vmatpush2.msra.mxu0 0.0
    %483 = vmatprep.subr.mxu0 0.0
    %484 = vmatpush2.msra.mxu0 0.0
    %485 = vmatprep.subr.mxu0 0.0
    %486 = vmatpush2.msra.mxu0 0.0
    %487 = vmatprep.subr.mxu0 0.0
    %488 = vmatpush2.msra.mxu0 0.0
    %489 = vmatprep.subr.mxu0 0.0
    %490 = vmatpush2.msra.mxu0 0.0
    %491 = vmatprep.subr.mxu0 0.0
    %492 = vmatpush2.msra.mxu0 0.0
    %493 = vmatprep.subr.mxu0 0.0
    %494 = vmatpush2.msra.mxu0 0.0
    %495 = vmatprep.subr.mxu0 0.0
    %496 = vmatpush2.msra.mxu0 0.0
    %497 = vmatprep.subr.mxu0 0.0
    %498 = vmatpush2.msra.mxu0 0.0
    %499 = vmatprep.subr.mxu0 0.0
    %500 = vmatpush2.msra.mxu0 0.0
    %501 = vmatprep.subr.mxu0 0.0
    %502 = vmatpush2.msra.mxu0 0.0
    %503 = vmatprep.mubr.f32.mxu0 0.0
    %504 = vmatmul.mubr.f32.gmra.mxu0 %v429
    %v505 = vpop.f32.mrf.mxu0
    %v506 = vadd.f32 0.0, %v505
    %v507 = vpop.f32.mrf.mxu0
    %508 = vmatprep.mubr.f32.mxu0 0.0
    %509 = vmatmul.mubr.f32.gmra.mxu0 %v431
    %v510 = vpop.f32.mrf.mxu0
    %v511 = vadd.f32 0.0, %v510
    %v512 = vpop.f32.mrf.mxu0
    %513 = vmatprep.mubr.f32.mxu0 0.0
    %514 = vmatmul.mubr.f32.gmra.mxu0 %v434
    %v515 = vpop.f32.mrf.mxu0
    %v516 = vadd.f32 0.0, %v515
    %v517 = vpop.f32.mrf.mxu0
    %518 = vdwg.mxu0
    %v519 = vadd.f32 %v414, %v506
    %v520 = vadd.f32 %v419, %v511
    %v521 = vadd.f32 %v424, %v516
    %v522 = vld [vmem:[#allocation5] sm:$0x1]
    %v524 = vlaneseq
    %v525 = vshrl.u32 %v524, 7
    %v526 = vsub.s32 0, %v525
    %v527 = vrot.slane %v522, %v526
    %v529 = vadd.f32 %v519, %v527
    %v530 = vadd.f32 %v520, %v527
    %v531 = vadd.f32 %v521, %v527
    %vm532 = vcmask 523264
    %v533 = vsel %vm532, %v529, 0.0
    %v534 = vsel %vm532, %v530, 0.0
    %v535 = vadd.f32 %v533, %v534
    %vm536 = vcmask 521216
    %v537 = vsel %vm536, %v531, 0.0
    %v538 = vadd.f32 %v535, %v537
    %v539 = vrot.slane %v538, 4
    %v540 = vadd.f32 %v538, %v539
    %v541 = vrot.slane %v540, 2
    %v542 = vadd.f32 %v540, %v541
    %v543 = vrot.slane %v542, 1
    %v544 = vadd.f32 %v542, %v543
    %v545 = vrcp.pop 22.0
    %v546 = vmul.f32 %v544, %v545
    %v547 = vsub.f32 %v529, %v546
    %v548 = vsub.f32 %v530, %v546
    %v549 = vsub.f32 %v531, %v546
    %v550 = vmul.f32 %v547, %v547
    %v551 = vmul.f32 %v548, %v548
    %v552 = vmul.f32 %v549, %v549
    %v553 = vsel %vm532, %v550, 0.0
    %v554 = vsel %vm532, %v551, 0.0
    %v555 = vadd.f32 %v553, %v554
    %v556 = vsel %vm536, %v552, 0.0
    %v557 = vadd.f32 %v555, %v556
    %v558 = vrot.slane %v557, 4
    %v559 = vadd.f32 %v557, %v558
    %v560 = vrot.slane %v559, 2
    %v561 = vadd.f32 %v559, %v560
    %v562 = vrot.slane %v561, 1
    %v563 = vadd.f32 %v561, %v562
    %v564 = vmul.f32 %v563, %v545
    %v565 = vadd.f32 %v564, 1e-05
    %v566 = vrsqrt.pop %v565
    %v567 = vmul.f32 %v547, %v566
    %v568 = vmul.f32 %v548, %v566
    %v569 = vmul.f32 %v549, %v566
    %v570 = vld [vmem:[#allocation7] sm:$0x1]
    %v572 = vlaneseq
    %v573 = vshrl.u32 %v572, 7
    %v574 = vsub.s32 0, %v573
    %v575 = vrot.slane %v570, %v574
    %v577 = vmul.f32 %v567, %v575
    %v578 = vmul.f32 %v568, %v575
    %v579 = vmul.f32 %v569, %v575
    %v580 = vld [vmem:[#allocation8] sm:$0x1]
    %v582 = vlaneseq
    %v583 = vshrl.u32 %v582, 7
    %v584 = vsub.s32 0, %v583
    %v585 = vrot.slane %v580, %v584
    %v587 = vadd.f32 %v577, %v585
    %v588 = vadd.f32 %v578, %v585
    %v589 = vadd.f32 %v579, %v585
    %vm590 = vcmp.gt.f32.partialorder %v587, 0.0
    %vm591 = vcmp.gt.f32.partialorder %v588, 0.0
    %vm592 = vcmp.gt.f32.partialorder %v589, 0.0
    %v593 = vmul.f32 %v587, 0.1
    %v594 = vmul.f32 %v588, 0.1
    %v595 = vmul.f32 %v589, 0.1
    %v596 = vsel %vm590, %v587, %v593
    %v597 = vsel %vm591, %v588, %v594
    %v598 = vsel %vm592, %v589, %v595
    %v602 = vrot.slane %v596, 6
    %v603 = vrot.slane %v597, 6
    %v604 = vsel %vm227, %v602, %v603
    %v605 = vrot.slane %v598, 6
    %v606 = vsel %vm227, %v603, %v605
    %v608 = vsel %vm227, 0.0, %v602
    %v609 = vrot.slane %v596, 2
    %v610 = vrot.slane %v597, 2
    %v611 = vsel %vm235, %v609, %v610
    %v612 = vrot.slane %v598, 2
    %v613 = vsel %vm235, %v610, %v612
    %v615 = vsel %vm242, %v612, 0.0
    %v616 = vld [vmem:[#allocation10] sm:$0xff]
    %v617 = vld [vmem:[#allocation10 + $0x8] sm:$0xff]
    %v618 = vld [vmem:[#allocation10 + $0x10] sm:$0xff]
    %v619 = vld [vmem:[#allocation10 + $0x18] sm:$0xff]
    %v620 = vld [vmem:[#allocation10 + $0x20] sm:$0xff]
    %v621 = vld [vmem:[#allocation10 + $0x28] sm:$0xff]
    %v622 = vld [vmem:[#allocation10 + $0x30] sm:$0xff]
    %v623 = vld [vmem:[#allocation10 + $0x38] sm:$0xff]
    %s624 = scalar_lea.vmem [#allocation10], 64
    %v625 = vld [vmem:[%s624] sm:$0xff]
    %v626 = vld [vmem:[%s624 + $0x8] sm:$0xff]
    %v627 = vld [vmem:[%s624 + $0x10] sm:$0xff]
    %v628 = vld [vmem:[%s624 + $0x18] sm:$0xff]
    %v629 = vld [vmem:[%s624 + $0x20] sm:$0xff]
    %v630 = vld [vmem:[%s624 + $0x28] sm:$0xff]
    %v631 = vld [vmem:[%s624 + $0x30] sm:$0xff]
    %v632 = vld [vmem:[%s624 + $0x38] sm:$0xff]
    %v633 = vsel %vm532, %v596, 0
    %v635 = vsel %vm532, %v597, 0
    %v637 = vsel %vm532, %v598, 0
    %639 = vmatprep.subr.mxu0 0.0
    %640 = vmatpush1.msra.mxu0 0.0
    %641 = vmatprep.subr.mxu0 0.0
    %642 = vmatpush1.msra.mxu0 0.0
    %643 = vmatprep.subr.mxu0 0.0
    %644 = vmatpush1.msra.mxu0 0.0
    %645 = vmatprep.subr.mxu0 0.0
    %646 = vmatpush1.msra.mxu0 0.0
    %647 = vmatprep.subr.mxu0 0.0
    %648 = vmatpush1.msra.mxu0 0.0
    %649 = vmatprep.subr.mxu0 0.0
    %650 = vmatpush1.msra.mxu0 0.0
    %651 = vmatprep.subr.mxu0 0.0
    %652 = vmatpush1.msra.mxu0 0.0
    %653 = vmatprep.subr.mxu0 0.0
    %654 = vmatpush1.msra.mxu0 0.0
    %655 = vmatprep.subr.mxu0 0.0
    %656 = vmatpush1.msra.mxu0 %v632
    %657 = vmatprep.subr.mxu0 0.0
    %658 = vmatpush1.msra.mxu0 %v631
    %659 = vmatprep.subr.mxu0 0.0
    %660 = vmatpush1.msra.mxu0 %v630
    %661 = vmatprep.subr.mxu0 0.0
    %662 = vmatpush1.msra.mxu0 %v629
    %663 = vmatprep.subr.mxu0 0.0
    %664 = vmatpush1.msra.mxu0 %v628
    %665 = vmatprep.subr.mxu0 0.0
    %666 = vmatpush1.msra.mxu0 %v627
    %667 = vmatprep.subr.mxu0 0.0
    %668 = vmatpush1.msra.mxu0 %v626
    %669 = vmatprep.subr.mxu0 0.0
    %670 = vmatpush1.msra.mxu0 %v625
    %671 = vmatprep.subr.mxu0 0.0
    %672 = vmatpush2.msra.mxu0 0.0
    %673 = vmatprep.subr.mxu0 0.0
    %674 = vmatpush2.msra.mxu0 0.0
    %675 = vmatprep.subr.mxu0 0.0
    %676 = vmatpush2.msra.mxu0 0.0
    %677 = vmatprep.subr.mxu0 0.0
    %678 = vmatpush2.msra.mxu0 0.0
    %679 = vmatprep.subr.mxu0 0.0
    %680 = vmatpush2.msra.mxu0 0.0
    %681 = vmatprep.subr.mxu0 0.0
    %682 = vmatpush2.msra.mxu0 0.0
    %683 = vmatprep.subr.mxu0 0.0
    %684 = vmatpush2.msra.mxu0 0.0
    %685 = vmatprep.subr.mxu0 0.0
    %686 = vmatpush2.msra.mxu0 0.0
    %687 = vmatprep.subr.mxu0 0.0
    %688 = vmatpush2.msra.mxu0 0.0
    %689 = vmatprep.subr.mxu0 0.0
    %690 = vmatpush2.msra.mxu0 0.0
    %691 = vmatprep.subr.mxu0 0.0
    %692 = vmatpush2.msra.mxu0 0.0
    %693 = vmatprep.subr.mxu0 0.0
    %694 = vmatpush2.msra.mxu0 0.0
    %695 = vmatprep.subr.mxu0 0.0
    %696 = vmatpush2.msra.mxu0 0.0
    %697 = vmatprep.subr.mxu0 0.0
    %698 = vmatpush2.msra.mxu0 0.0
    %699 = vmatprep.subr.mxu0 0.0
    %700 = vmatpush2.msra.mxu0 0.0
    %701 = vmatprep.subr.mxu0 0.0
    %702 = vmatpush2.msra.mxu0 0.0
    %703 = vmatprep.mubr.f32.mxu0 0.0
    %704 = vmatmul.mubr.f32.gmra.mxu0 %v633
    %v705 = vpop.f32.mrf.mxu0
    %v706 = vadd.f32 0.0, %v705
    %v707 = vpop.f32.mrf.mxu0
    %708 = vmatprep.mubr.f32.mxu0 0.0
    %709 = vmatmul.mubr.f32.gmra.mxu0 %v635
    %v710 = vpop.f32.mrf.mxu0
    %v711 = vadd.f32 0.0, %v710
    %v712 = vpop.f32.mrf.mxu0
    %713 = vmatprep.mubr.f32.mxu0 0.0
    %714 = vmatmul.mubr.f32.gmra.mxu0 %v637
    %v715 = vpop.f32.mrf.mxu0
    %v716 = vadd.f32 0.0, %v715
    %v717 = vpop.f32.mrf.mxu0
    %718 = vdwg.mxu0
    %v720 = vsel %vm532, %v608, 0
    %v722 = vsel %vm532, %v604, 0
    %v724 = vsel %vm532, %v606, 0
    %726 = vmatprep.subr.mxu0 0.0
    %727 = vmatpush1.msra.mxu0 0.0
    %728 = vmatprep.subr.mxu0 0.0
    %729 = vmatpush1.msra.mxu0 0.0
    %730 = vmatprep.subr.mxu0 0.0
    %731 = vmatpush1.msra.mxu0 0.0
    %732 = vmatprep.subr.mxu0 0.0
    %733 = vmatpush1.msra.mxu0 0.0
    %734 = vmatprep.subr.mxu0 0.0
    %735 = vmatpush1.msra.mxu0 0.0
    %736 = vmatprep.subr.mxu0 0.0
    %737 = vmatpush1.msra.mxu0 0.0
    %738 = vmatprep.subr.mxu0 0.0
    %739 = vmatpush1.msra.mxu0 0.0
    %740 = vmatprep.subr.mxu0 0.0
    %741 = vmatpush1.msra.mxu0 0.0
    %742 = vmatprep.subr.mxu0 0.0
    %743 = vmatpush1.msra.mxu0 %v623
    %744 = vmatprep.subr.mxu0 0.0
    %745 = vmatpush1.msra.mxu0 %v622
    %746 = vmatprep.subr.mxu0 0.0
    %747 = vmatpush1.msra.mxu0 %v621
    %748 = vmatprep.subr.mxu0 0.0
    %749 = vmatpush1.msra.mxu0 %v620
    %750 = vmatprep.subr.mxu0 0.0
    %751 = vmatpush1.msra.mxu0 %v619
    %752 = vmatprep.subr.mxu0 0.0
    %753 = vmatpush1.msra.mxu0 %v618
    %754 = vmatprep.subr.mxu0 0.0
    %755 = vmatpush1.msra.mxu0 %v617
    %756 = vmatprep.subr.mxu0 0.0
    %757 = vmatpush1.msra.mxu0 %v616
    %758 = vmatprep.subr.mxu0 0.0
    %759 = vmatpush2.msra.mxu0 0.0
    %760 = vmatprep.subr.mxu0 0.0
    %761 = vmatpush2.msra.mxu0 0.0
    %762 = vmatprep.subr.mxu0 0.0
    %763 = vmatpush2.msra.mxu0 0.0
    %764 = vmatprep.subr.mxu0 0.0
    %765 = vmatpush2.msra.mxu0 0.0
    %766 = vmatprep.subr.mxu0 0.0
    %767 = vmatpush2.msra.mxu0 0.0
    %768 = vmatprep.subr.mxu0 0.0
    %769 = vmatpush2.msra.mxu0 0.0
    %770 = vmatprep.subr.mxu0 0.0
    %771 = vmatpush2.msra.mxu0 0.0
    %772 = vmatprep.subr.mxu0 0.0
    %773 = vmatpush2.msra.mxu0 0.0
    %774 = vmatprep.subr.mxu0 0.0
    %775 = vmatpush2.msra.mxu0 0.0
    %776 = vmatprep.subr.mxu0 0.0
    %777 = vmatpush2.msra.mxu0 0.0
    %778 = vmatprep.subr.mxu0 0.0
    %779 = vmatpush2.msra.mxu0 0.0
    %780 = vmatprep.subr.mxu0 0.0
    %781 = vmatpush2.msra.mxu0 0.0
    %782 = vmatprep.subr.mxu0 0.0
    %783 = vmatpush2.msra.mxu0 0.0
    %784 = vmatprep.subr.mxu0 0.0
    %785 = vmatpush2.msra.mxu0 0.0
    %786 = vmatprep.subr.mxu0 0.0
    %787 = vmatpush2.msra.mxu0 0.0
    %788 = vmatprep.subr.mxu0 0.0
    %789 = vmatpush2.msra.mxu0 0.0
    %790 = vmatprep.mubr.f32.mxu0 0.0
    %791 = vmatmul.mubr.f32.gmra.mxu0 %v720
    %v792 = vpop.f32.mrf.mxu0
    %v793 = vadd.f32 %v706, %v792
    %v794 = vpop.f32.mrf.mxu0
    %795 = vmatprep.mubr.f32.mxu0 0.0
    %796 = vmatmul.mubr.f32.gmra.mxu0 %v722
    %v797 = vpop.f32.mrf.mxu0
    %v798 = vadd.f32 %v711, %v797
    %v799 = vpop.f32.mrf.mxu0
    %800 = vmatprep.mubr.f32.mxu0 0.0
    %801 = vmatmul.mubr.f32.gmra.mxu0 %v724
    %v802 = vpop.f32.mrf.mxu0
    %v803 = vadd.f32 %v716, %v802
    %v804 = vpop.f32.mrf.mxu0
    %805 = vdwg.mxu0
    %s806 = scalar_lea.vmem [#allocation10], 128
    %v807 = vld [vmem:[%s806] sm:$0xff]
    %v808 = vld [vmem:[%s806 + $0x8] sm:$0xff]
    %v809 = vld [vmem:[%s806 + $0x10] sm:$0xff]
    %v810 = vld [vmem:[%s806 + $0x18] sm:$0xff]
    %v811 = vld [vmem:[%s806 + $0x20] sm:$0xff]
    %v812 = vld [vmem:[%s806 + $0x28] sm:$0xff]
    %v813 = vld [vmem:[%s806 + $0x30] sm:$0xff]
    %v814 = vld [vmem:[%s806 + $0x38] sm:$0xff]
    %v815 = vsel %vm532, %v611, 0
    %v817 = vsel %vm532, %v613, 0
    %v820 = vsel %vm532, %v615, 0
    %822 = vmatprep.subr.mxu0 0.0
    %823 = vmatpush1.msra.mxu0 0.0
    %824 = vmatprep.subr.mxu0 0.0
    %825 = vmatpush1.msra.mxu0 0.0
    %826 = vmatprep.subr.mxu0 0.0
    %827 = vmatpush1.msra.mxu0 0.0
    %828 = vmatprep.subr.mxu0 0.0
    %829 = vmatpush1.msra.mxu0 0.0
    %830 = vmatprep.subr.mxu0 0.0
    %831 = vmatpush1.msra.mxu0 0.0
    %832 = vmatprep.subr.mxu0 0.0
    %833 = vmatpush1.msra.mxu0 0.0
    %834 = vmatprep.subr.mxu0 0.0
    %835 = vmatpush1.msra.mxu0 0.0
    %836 = vmatprep.subr.mxu0 0.0
    %837 = vmatpush1.msra.mxu0 0.0
    %838 = vmatprep.subr.mxu0 0.0
    %839 = vmatpush1.msra.mxu0 %v814
    %840 = vmatprep.subr.mxu0 0.0
    %841 = vmatpush1.msra.mxu0 %v813
    %842 = vmatprep.subr.mxu0 0.0
    %843 = vmatpush1.msra.mxu0 %v812
    %844 = vmatprep.subr.mxu0 0.0
    %845 = vmatpush1.msra.mxu0 %v811
    %846 = vmatprep.subr.mxu0 0.0
    %847 = vmatpush1.msra.mxu0 %v810
    %848 = vmatprep.subr.mxu0 0.0
    %849 = vmatpush1.msra.mxu0 %v809
    %850 = vmatprep.subr.mxu0 0.0
    %851 = vmatpush1.msra.mxu0 %v808
    %852 = vmatprep.subr.mxu0 0.0
    %853 = vmatpush1.msra.mxu0 %v807
    %854 = vmatprep.subr.mxu0 0.0
    %855 = vmatpush2.msra.mxu0 0.0
    %856 = vmatprep.subr.mxu0 0.0
    %857 = vmatpush2.msra.mxu0 0.0
    %858 = vmatprep.subr.mxu0 0.0
    %859 = vmatpush2.msra.mxu0 0.0
    %860 = vmatprep.subr.mxu0 0.0
    %861 = vmatpush2.msra.mxu0 0.0
    %862 = vmatprep.subr.mxu0 0.0
    %863 = vmatpush2.msra.mxu0 0.0
    %864 = vmatprep.subr.mxu0 0.0
    %865 = vmatpush2.msra.mxu0 0.0
    %866 = vmatprep.subr.mxu0 0.0
    %867 = vmatpush2.msra.mxu0 0.0
    %868 = vmatprep.subr.mxu0 0.0
    %869 = vmatpush2.msra.mxu0 0.0
    %870 = vmatprep.subr.mxu0 0.0
    %871 = vmatpush2.msra.mxu0 0.0
    %872 = vmatprep.subr.mxu0 0.0
    %873 = vmatpush2.msra.mxu0 0.0
    %874 = vmatprep.subr.mxu0 0.0
    %875 = vmatpush2.msra.mxu0 0.0
    %876 = vmatprep.subr.mxu0 0.0
    %877 = vmatpush2.msra.mxu0 0.0
    %878 = vmatprep.subr.mxu0 0.0
    %879 = vmatpush2.msra.mxu0 0.0
    %880 = vmatprep.subr.mxu0 0.0
    %881 = vmatpush2.msra.mxu0 0.0
    %882 = vmatprep.subr.mxu0 0.0
    %883 = vmatpush2.msra.mxu0 0.0
    %884 = vmatprep.subr.mxu0 0.0
    %885 = vmatpush2.msra.mxu0 0.0
    %886 = vmatprep.mubr.f32.mxu0 0.0
    %887 = vmatmul.mubr.f32.gmra.mxu0 %v815
    %v888 = vpop.f32.mrf.mxu0
    %v889 = vadd.f32 0.0, %v888
    %v890 = vpop.f32.mrf.mxu0
    %891 = vmatprep.mubr.f32.mxu0 0.0
    %892 = vmatmul.mubr.f32.gmra.mxu0 %v817
    %v893 = vpop.f32.mrf.mxu0
    %v894 = vadd.f32 0.0, %v893
    %v895 = vpop.f32.mrf.mxu0
    %896 = vmatprep.mubr.f32.mxu0 0.0
    %897 = vmatmul.mubr.f32.gmra.mxu0 %v820
    %v898 = vpop.f32.mrf.mxu0
    %v899 = vadd.f32 0.0, %v898
    %v900 = vpop.f32.mrf.mxu0
    %901 = vdwg.mxu0
    %v902 = vadd.f32 %v793, %v889
    %v903 = vadd.f32 %v798, %v894
    %v904 = vadd.f32 %v803, %v899
    %v905 = vld [vmem:[#allocation11] sm:$0x1]
    %v907 = vlaneseq
    %v908 = vshrl.u32 %v907, 7
    %v909 = vsub.s32 0, %v908
    %v910 = vrot.slane %v905, %v909
    %v912 = vadd.f32 %v902, %v910
    %v913 = vadd.f32 %v903, %v910
    %v914 = vadd.f32 %v904, %v910
    %v915 = vadd.f32 %v912, %v913
    %v916 = vsel %vm235, %v914, 0.0
    %v917 = vadd.f32 %v915, %v916
    %v918 = vrot.slane %v917, 4
    %v919 = vadd.f32 %v917, %v918
    %v920 = vrot.slane %v919, 2
    %v921 = vadd.f32 %v919, %v920
    %v922 = vrot.slane %v921, 1
    %v923 = vadd.f32 %v921, %v922
    %v924 = vmul.f32 %v923, %v545
    %v925 = vsub.f32 %v912, %v924
    %v926 = vsub.f32 %v913, %v924
    %v927 = vsub.f32 %v914, %v924
    %v928 = vmul.f32 %v925, %v925
    %v929 = vmul.f32 %v926, %v926
    %v930 = vmul.f32 %v927, %v927
    %v931 = vadd.f32 %v928, %v929
    %v932 = vsel %vm235, %v930, 0.0
    %v933 = vadd.f32 %v931, %v932
    %v934 = vrot.slane %v933, 4
    %v935 = vadd.f32 %v933, %v934
    %v936 = vrot.slane %v935, 2
    %v937 = vadd.f32 %v935, %v936
    %v938 = vrot.slane %v937, 1
    %v939 = vadd.f32 %v937, %v938
    %v940 = vmul.f32 %v939, %v545
    %v941 = vadd.f32 %v940, 1e-05
    %v942 = vrsqrt.pop %v941
    %v943 = vmul.f32 %v925, %v942
    %v944 = vmul.f32 %v926, %v942
    %v945 = vmul.f32 %v927, %v942
    %v946 = vld [vmem:[#allocation13] sm:$0x1]
    %v948 = vlaneseq
    %v949 = vshrl.u32 %v948, 7
    %v950 = vsub.s32 0, %v949
    %v951 = vrot.slane %v946, %v950
    %v953 = vmul.f32 %v943, %v951
    %v954 = vmul.f32 %v944, %v951
    %v955 = vmul.f32 %v945, %v951
    %v956 = vld [vmem:[#allocation14] sm:$0x1]
    %v958 = vlaneseq
    %v959 = vshrl.u32 %v958, 7
    %v960 = vsub.s32 0, %v959
    %v961 = vrot.slane %v956, %v960
    %v963 = vadd.f32 %v953, %v961
    %v964 = vadd.f32 %v954, %v961
    %v965 = vadd.f32 %v955, %v961
    %vm966 = vcmp.gt.f32.partialorder %v963, 0.0
    %vm967 = vcmp.gt.f32.partialorder %v964, 0.0
    %vm968 = vcmp.gt.f32.partialorder %v965, 0.0
    %v969 = vmul.f32 %v963, 0.1
    %v970 = vmul.f32 %v964, 0.1
    %v971 = vmul.f32 %v965, 0.1
    %v972 = vsel %vm966, %v963, %v969
    %v973 = vsel %vm967, %v964, %v970
    %v974 = vsel %vm968, %v965, %v971
    %v978 = vrot.slane %v972, 6
    %v979 = vrot.slane %v973, 6
    %v980 = vsel %vm227, %v978, %v979
    %v981 = vrot.slane %v974, 6
    %v982 = vsel %vm227, %v979, %v981
    %v986 = vsel %vm227, 0.0, %v978
    %v987 = vrot.slane %v972, 2
    %v988 = vrot.slane %v973, 2
    %v989 = vsel %vm235, %v987, %v988
    %v990 = vrot.slane %v974, 2
    %v991 = vsel %vm235, %v988, %v990
    %v995 = vsel %vm242, %v990, 0.0
    %v996 = vld [vmem:[#allocation16] sm:$0xff]
    %v997 = vld [vmem:[#allocation16 + $0x8] sm:$0xff]
    %v998 = vld [vmem:[#allocation16 + $0x10] sm:$0xff]
    %v999 = vld [vmem:[#allocation16 + $0x18] sm:$0xff]
    %v1000 = vld [vmem:[#allocation16 + $0x20] sm:$0xff]
    %v1001 = vld [vmem:[#allocation16 + $0x28] sm:$0xff]
    %v1002 = vld [vmem:[#allocation16 + $0x30] sm:$0xff]
    %v1003 = vld [vmem:[#allocation16 + $0x38] sm:$0xff]
    %v1004 = vld [vmem:[#allocation16 + $0x40] sm:$0xff]
    %v1005 = vld [vmem:[#allocation16 + $0x48] sm:$0xff]
    %v1006 = vld [vmem:[#allocation16 + $0x50] sm:$0xff]
    %v1007 = vld [vmem:[#allocation16 + $0x58] sm:$0xff]
    %v1008 = vld [vmem:[#allocation16 + $0x60] sm:$0xff]
    %v1009 = vld [vmem:[#allocation16 + $0x68] sm:$0xff]
    %v1010 = vld [vmem:[#allocation16 + $0x70] sm:$0xff]
    %v1011 = vld [vmem:[#allocation16 + $0x78] sm:$0xff]
    %v1012 = vld [vmem:[#allocation16 + $0x80] sm:$0xff]
    %v1013 = vld [vmem:[#allocation16 + $0x88] sm:$0xff]
    %v1014 = vld [vmem:[#allocation16 + $0x90] sm:$0xff]
    %v1015 = vld [vmem:[#allocation16 + $0x98] sm:$0xff]
    %v1016 = vld [vmem:[#allocation16 + $0xa0] sm:$0xff]
    %v1017 = vld [vmem:[#allocation16 + $0xa8] sm:$0xff]
    %v1018 = vld [vmem:[#allocation16 + $0xb0] sm:$0xff]
    %v1019 = vld [vmem:[#allocation16 + $0xb8] sm:$0xff]
    %v1020 = vld [vmem:[#allocation16 + $0xc0] sm:$0xff]
    %v1021 = vld [vmem:[#allocation16 + $0xc8] sm:$0xff]
    %v1022 = vld [vmem:[#allocation16 + $0xd0] sm:$0xff]
    %v1023 = vld [vmem:[#allocation16 + $0xd8] sm:$0xff]
    %v1024 = vld [vmem:[#allocation16 + $0xe0] sm:$0xff]
    %v1025 = vld [vmem:[#allocation16 + $0xe8] sm:$0xff]
    %v1026 = vld [vmem:[#allocation16 + $0xf0] sm:$0xff]
    %v1027 = vld [vmem:[#allocation16 + $0xf8] sm:$0xff]
    %s1028 = scalar_lea.vmem [#allocation16], 256
    %v1029 = vld [vmem:[%s1028] sm:$0xff]
    %v1030 = vld [vmem:[%s1028 + $0x8] sm:$0xff]
    %v1031 = vld [vmem:[%s1028 + $0x10] sm:$0xff]
    %v1032 = vld [vmem:[%s1028 + $0x18] sm:$0xff]
    %v1033 = vld [vmem:[%s1028 + $0x20] sm:$0xff]
    %v1034 = vld [vmem:[%s1028 + $0x28] sm:$0xff]
    %v1035 = vld [vmem:[%s1028 + $0x30] sm:$0xff]
    %v1036 = vld [vmem:[%s1028 + $0x38] sm:$0xff]
    %v1037 = vld [vmem:[%s1028 + $0x40] sm:$0xff]
    %v1038 = vld [vmem:[%s1028 + $0x48] sm:$0xff]
    %v1039 = vld [vmem:[%s1028 + $0x50] sm:$0xff]
    %v1040 = vld [vmem:[%s1028 + $0x58] sm:$0xff]
    %v1041 = vld [vmem:[%s1028 + $0x60] sm:$0xff]
    %v1042 = vld [vmem:[%s1028 + $0x68] sm:$0xff]
    %v1043 = vld [vmem:[%s1028 + $0x70] sm:$0xff]
    %v1044 = vld [vmem:[%s1028 + $0x78] sm:$0xff]
    %v1045 = vld [vmem:[%s1028 + $0x80] sm:$0xff]
    %v1046 = vld [vmem:[%s1028 + $0x88] sm:$0xff]
    %v1047 = vld [vmem:[%s1028 + $0x90] sm:$0xff]
    %v1048 = vld [vmem:[%s1028 + $0x98] sm:$0xff]
    %v1049 = vld [vmem:[%s1028 + $0xa0] sm:$0xff]
    %v1050 = vld [vmem:[%s1028 + $0xa8] sm:$0xff]
    %v1051 = vld [vmem:[%s1028 + $0xb0] sm:$0xff]
    %v1052 = vld [vmem:[%s1028 + $0xb8] sm:$0xff]
    %v1053 = vld [vmem:[%s1028 + $0xc0] sm:$0xff]
    %v1054 = vld [vmem:[%s1028 + $0xc8] sm:$0xff]
    %v1055 = vld [vmem:[%s1028 + $0xd0] sm:$0xff]
    %v1056 = vld [vmem:[%s1028 + $0xd8] sm:$0xff]
    %v1057 = vld [vmem:[%s1028 + $0xe0] sm:$0xff]
    %v1058 = vld [vmem:[%s1028 + $0xe8] sm:$0xff]
    %v1059 = vld [vmem:[%s1028 + $0xf0] sm:$0xff]
    %v1060 = vld [vmem:[%s1028 + $0xf8] sm:$0xff]
    %1061 = vmatprep.subr.mxu0 %v1060
    %1062 = vmatpush1.msra.mxu0 %v1059
    %1063 = vmatprep.subr.mxu0 %v1058
    %1064 = vmatpush1.msra.mxu0 %v1057
    %1065 = vmatprep.subr.mxu0 %v1056
    %1066 = vmatpush1.msra.mxu0 %v1055
    %1067 = vmatprep.subr.mxu0 %v1054
    %1068 = vmatpush1.msra.mxu0 %v1053
    %1069 = vmatprep.subr.mxu0 %v1052
    %1070 = vmatpush1.msra.mxu0 %v1051
    %1071 = vmatprep.subr.mxu0 %v1050
    %1072 = vmatpush1.msra.mxu0 %v1049
    %1073 = vmatprep.subr.mxu0 %v1048
    %1074 = vmatpush1.msra.mxu0 %v1047
    %1075 = vmatprep.subr.mxu0 %v1046
    %1076 = vmatpush1.msra.mxu0 %v1045
    %1077 = vmatprep.subr.mxu0 %v1044
    %1078 = vmatpush1.msra.mxu0 %v1043
    %1079 = vmatprep.subr.mxu0 %v1042
    %1080 = vmatpush1.msra.mxu0 %v1041
    %1081 = vmatprep.subr.mxu0 %v1040
    %1082 = vmatpush1.msra.mxu0 %v1039
    %1083 = vmatprep.subr.mxu0 %v1038
    %1084 = vmatpush1.msra.mxu0 %v1037
    %1085 = vmatprep.subr.mxu0 %v1036
    %1086 = vmatpush1.msra.mxu0 %v1035
    %1087 = vmatprep.subr.mxu0 %v1034
    %1088 = vmatpush1.msra.mxu0 %v1033
    %1089 = vmatprep.subr.mxu0 %v1032
    %1090 = vmatpush1.msra.mxu0 %v1031
    %1091 = vmatprep.subr.mxu0 %v1030
    %1092 = vmatpush1.msra.mxu0 %v1029
    %1093 = vmatprep.subr.mxu0 0.0
    %1094 = vmatpush2.msra.mxu0 0.0
    %1095 = vmatprep.subr.mxu0 0.0
    %1096 = vmatpush2.msra.mxu0 0.0
    %1097 = vmatprep.subr.mxu0 0.0
    %1098 = vmatpush2.msra.mxu0 0.0
    %1099 = vmatprep.subr.mxu0 0.0
    %1100 = vmatpush2.msra.mxu0 0.0
    %1101 = vmatprep.subr.mxu0 0.0
    %1102 = vmatpush2.msra.mxu0 0.0
    %1103 = vmatprep.subr.mxu0 0.0
    %1104 = vmatpush2.msra.mxu0 0.0
    %1105 = vmatprep.subr.mxu0 0.0
    %1106 = vmatpush2.msra.mxu0 0.0
    %1107 = vmatprep.subr.mxu0 0.0
    %1108 = vmatpush2.msra.mxu0 0.0
    %1109 = vmatprep.subr.mxu0 0.0
    %1110 = vmatpush2.msra.mxu0 0.0
    %1111 = vmatprep.subr.mxu0 0.0
    %1112 = vmatpush2.msra.mxu0 0.0
    %1113 = vmatprep.subr.mxu0 0.0
    %1114 = vmatpush2.msra.mxu0 0.0
    %1115 = vmatprep.subr.mxu0 0.0
    %1116 = vmatpush2.msra.mxu0 0.0
    %1117 = vmatprep.subr.mxu0 0.0
    %1118 = vmatpush2.msra.mxu0 0.0
    %1119 = vmatprep.subr.mxu0 0.0
    %1120 = vmatpush2.msra.mxu0 0.0
    %1121 = vmatprep.subr.mxu0 0.0
    %1122 = vmatpush2.msra.mxu0 0.0
    %1123 = vmatprep.subr.mxu0 0.0
    %1124 = vmatpush2.msra.mxu0 0.0
    %1125 = vmatprep.mubr.f32.mxu0 0.0
    %1126 = vmatmul.mubr.f32.gmra.mxu0 %v972
    %v1127 = vpop.f32.mrf.mxu0
    %v1128 = vadd.f32 0.0, %v1127
    %v1129 = vpop.f32.mrf.mxu0
    %v1130 = vadd.f32 0.0, %v1129
    %1131 = vmatprep.mubr.f32.mxu0 0.0
    %1132 = vmatmul.mubr.f32.gmra.mxu0 %v973
    %v1133 = vpop.f32.mrf.mxu0
    %v1134 = vadd.f32 0.0, %v1133
    %v1135 = vpop.f32.mrf.mxu0
    %v1136 = vadd.f32 0.0, %v1135
    %1137 = vmatprep.mubr.f32.mxu0 0.0
    %1138 = vmatmul.mubr.f32.gmra.mxu0 %v974
    %v1139 = vpop.f32.mrf.mxu0
    %v1140 = vadd.f32 0.0, %v1139
    %v1141 = vpop.f32.mrf.mxu0
    %v1142 = vadd.f32 0.0, %v1141
    %1143 = vdwg.mxu0
    %1144 = vmatprep.subr.mxu0 %v1027
    %1145 = vmatpush1.msra.mxu0 %v1026
    %1146 = vmatprep.subr.mxu0 %v1025
    %1147 = vmatpush1.msra.mxu0 %v1024
    %1148 = vmatprep.subr.mxu0 %v1023
    %1149 = vmatpush1.msra.mxu0 %v1022
    %1150 = vmatprep.subr.mxu0 %v1021
    %1151 = vmatpush1.msra.mxu0 %v1020
    %1152 = vmatprep.subr.mxu0 %v1019
    %1153 = vmatpush1.msra.mxu0 %v1018
    %1154 = vmatprep.subr.mxu0 %v1017
    %1155 = vmatpush1.msra.mxu0 %v1016
    %1156 = vmatprep.subr.mxu0 %v1015
    %1157 = vmatpush1.msra.mxu0 %v1014
    %1158 = vmatprep.subr.mxu0 %v1013
    %1159 = vmatpush1.msra.mxu0 %v1012
    %1160 = vmatprep.subr.mxu0 %v1011
    %1161 = vmatpush1.msra.mxu0 %v1010
    %1162 = vmatprep.subr.mxu0 %v1009
    %1163 = vmatpush1.msra.mxu0 %v1008
    %1164 = vmatprep.subr.mxu0 %v1007
    %1165 = vmatpush1.msra.mxu0 %v1006
    %1166 = vmatprep.subr.mxu0 %v1005
    %1167 = vmatpush1.msra.mxu0 %v1004
    %1168 = vmatprep.subr.mxu0 %v1003
    %1169 = vmatpush1.msra.mxu0 %v1002
    %1170 = vmatprep.subr.mxu0 %v1001
    %1171 = vmatpush1.msra.mxu0 %v1000
    %1172 = vmatprep.subr.mxu0 %v999
    %1173 = vmatpush1.msra.mxu0 %v998
    %1174 = vmatprep.subr.mxu0 %v997
    %1175 = vmatpush1.msra.mxu0 %v996
    %1176 = vmatprep.subr.mxu0 0.0
    %1177 = vmatpush2.msra.mxu0 0.0
    %1178 = vmatprep.subr.mxu0 0.0
    %1179 = vmatpush2.msra.mxu0 0.0
    %1180 = vmatprep.subr.mxu0 0.0
    %1181 = vmatpush2.msra.mxu0 0.0
    %1182 = vmatprep.subr.mxu0 0.0
    %1183 = vmatpush2.msra.mxu0 0.0
    %1184 = vmatprep.subr.mxu0 0.0
    %1185 = vmatpush2.msra.mxu0 0.0
    %1186 = vmatprep.subr.mxu0 0.0
    %1187 = vmatpush2.msra.mxu0 0.0
    %1188 = vmatprep.subr.mxu0 0.0
    %1189 = vmatpush2.msra.mxu0 0.0
    %1190 = vmatprep.subr.mxu0 0.0
    %1191 = vmatpush2.msra.mxu0 0.0
    %1192 = vmatprep.subr.mxu0 0.0
    %1193 = vmatpush2.msra.mxu0 0.0
    %1194 = vmatprep.subr.mxu0 0.0
    %1195 = vmatpush2.msra.mxu0 0.0
    %1196 = vmatprep.subr.mxu0 0.0
    %1197 = vmatpush2.msra.mxu0 0.0
    %1198 = vmatprep.subr.mxu0 0.0
    %1199 = vmatpush2.msra.mxu0 0.0
    %1200 = vmatprep.subr.mxu0 0.0
    %1201 = vmatpush2.msra.mxu0 0.0
    %1202 = vmatprep.subr.mxu0 0.0
    %1203 = vmatpush2.msra.mxu0 0.0
    %1204 = vmatprep.subr.mxu0 0.0
    %1205 = vmatpush2.msra.mxu0 0.0
    %1206 = vmatprep.subr.mxu0 0.0
    %1207 = vmatpush2.msra.mxu0 0.0
    %1208 = vmatprep.mubr.f32.mxu0 0.0
    %1209 = vmatmul.mubr.f32.gmra.mxu0 %v986
    %v1210 = vpop.f32.mrf.mxu0
    %v1211 = vadd.f32 %v1128, %v1210
    %v1212 = vpop.f32.mrf.mxu0
    %v1213 = vadd.f32 %v1130, %v1212
    %1214 = vmatprep.mubr.f32.mxu0 0.0
    %1215 = vmatmul.mubr.f32.gmra.mxu0 %v980
    %v1216 = vpop.f32.mrf.mxu0
    %v1217 = vadd.f32 %v1134, %v1216
    %v1218 = vpop.f32.mrf.mxu0
    %v1219 = vadd.f32 %v1136, %v1218
    %1220 = vmatprep.mubr.f32.mxu0 0.0
    %1221 = vmatmul.mubr.f32.gmra.mxu0 %v982
    %v1222 = vpop.f32.mrf.mxu0
    %v1223 = vadd.f32 %v1140, %v1222
    %v1224 = vpop.f32.mrf.mxu0
    %v1225 = vadd.f32 %v1142, %v1224
    %1226 = vdwg.mxu0
    %s1227 = scalar_lea.vmem [#allocation16], 512
    %v1228 = vld [vmem:[%s1227] sm:$0xff]
    %v1229 = vld [vmem:[%s1227 + $0x8] sm:$0xff]
    %v1230 = vld [vmem:[%s1227 + $0x10] sm:$0xff]
    %v1231 = vld [vmem:[%s1227 + $0x18] sm:$0xff]
    %v1232 = vld [vmem:[%s1227 + $0x20] sm:$0xff]
    %v1233 = vld [vmem:[%s1227 + $0x28] sm:$0xff]
    %v1234 = vld [vmem:[%s1227 + $0x30] sm:$0xff]
    %v1235 = vld [vmem:[%s1227 + $0x38] sm:$0xff]
    %v1236 = vld [vmem:[%s1227 + $0x40] sm:$0xff]
    %v1237 = vld [vmem:[%s1227 + $0x48] sm:$0xff]
    %v1238 = vld [vmem:[%s1227 + $0x50] sm:$0xff]
    %v1239 = vld [vmem:[%s1227 + $0x58] sm:$0xff]
    %v1240 = vld [vmem:[%s1227 + $0x60] sm:$0xff]
    %v1241 = vld [vmem:[%s1227 + $0x68] sm:$0xff]
    %v1242 = vld [vmem:[%s1227 + $0x70] sm:$0xff]
    %v1243 = vld [vmem:[%s1227 + $0x78] sm:$0xff]
    %v1244 = vld [vmem:[%s1227 + $0x80] sm:$0xff]
    %v1245 = vld [vmem:[%s1227 + $0x88] sm:$0xff]
    %v1246 = vld [vmem:[%s1227 + $0x90] sm:$0xff]
    %v1247 = vld [vmem:[%s1227 + $0x98] sm:$0xff]
    %v1248 = vld [vmem:[%s1227 + $0xa0] sm:$0xff]
    %v1249 = vld [vmem:[%s1227 + $0xa8] sm:$0xff]
    %v1250 = vld [vmem:[%s1227 + $0xb0] sm:$0xff]
    %v1251 = vld [vmem:[%s1227 + $0xb8] sm:$0xff]
    %v1252 = vld [vmem:[%s1227 + $0xc0] sm:$0xff]
    %v1253 = vld [vmem:[%s1227 + $0xc8] sm:$0xff]
    %v1254 = vld [vmem:[%s1227 + $0xd0] sm:$0xff]
    %v1255 = vld [vmem:[%s1227 + $0xd8] sm:$0xff]
    %v1256 = vld [vmem:[%s1227 + $0xe0] sm:$0xff]
    %v1257 = vld [vmem:[%s1227 + $0xe8] sm:$0xff]
    %v1258 = vld [vmem:[%s1227 + $0xf0] sm:$0xff]
    %v1259 = vld [vmem:[%s1227 + $0xf8] sm:$0xff]
    %1260 = vmatprep.subr.mxu0 %v1259
    %1261 = vmatpush1.msra.mxu0 %v1258
    %1262 = vmatprep.subr.mxu0 %v1257
    %1263 = vmatpush1.msra.mxu0 %v1256
    %1264 = vmatprep.subr.mxu0 %v1255
    %1265 = vmatpush1.msra.mxu0 %v1254
    %1266 = vmatprep.subr.mxu0 %v1253
    %1267 = vmatpush1.msra.mxu0 %v1252
    %1268 = vmatprep.subr.mxu0 %v1251
    %1269 = vmatpush1.msra.mxu0 %v1250
    %1270 = vmatprep.subr.mxu0 %v1249
    %1271 = vmatpush1.msra.mxu0 %v1248
    %1272 = vmatprep.subr.mxu0 %v1247
    %1273 = vmatpush1.msra.mxu0 %v1246
    %1274 = vmatprep.subr.mxu0 %v1245
    %1275 = vmatpush1.msra.mxu0 %v1244
    %1276 = vmatprep.subr.mxu0 %v1243
    %1277 = vmatpush1.msra.mxu0 %v1242
    %1278 = vmatprep.subr.mxu0 %v1241
    %1279 = vmatpush1.msra.mxu0 %v1240
    %1280 = vmatprep.subr.mxu0 %v1239
    %1281 = vmatpush1.msra.mxu0 %v1238
    %1282 = vmatprep.subr.mxu0 %v1237
    %1283 = vmatpush1.msra.mxu0 %v1236
    %1284 = vmatprep.subr.mxu0 %v1235
    %1285 = vmatpush1.msra.mxu0 %v1234
    %1286 = vmatprep.subr.mxu0 %v1233
    %1287 = vmatpush1.msra.mxu0 %v1232
    %1288 = vmatprep.subr.mxu0 %v1231
    %1289 = vmatpush1.msra.mxu0 %v1230
    %1290 = vmatprep.subr.mxu0 %v1229
    %1291 = vmatpush1.msra.mxu0 %v1228
    %1292 = vmatprep.subr.mxu0 0.0
    %1293 = vmatpush2.msra.mxu0 0.0
    %1294 = vmatprep.subr.mxu0 0.0
    %1295 = vmatpush2.msra.mxu0 0.0
    %1296 = vmatprep.subr.mxu0 0.0
    %1297 = vmatpush2.msra.mxu0 0.0
    %1298 = vmatprep.subr.mxu0 0.0
    %1299 = vmatpush2.msra.mxu0 0.0
    %1300 = vmatprep.subr.mxu0 0.0
    %1301 = vmatpush2.msra.mxu0 0.0
    %1302 = vmatprep.subr.mxu0 0.0
    %1303 = vmatpush2.msra.mxu0 0.0
    %1304 = vmatprep.subr.mxu0 0.0
    %1305 = vmatpush2.msra.mxu0 0.0
    %1306 = vmatprep.subr.mxu0 0.0
    %1307 = vmatpush2.msra.mxu0 0.0
    %1308 = vmatprep.subr.mxu0 0.0
    %1309 = vmatpush2.msra.mxu0 0.0
    %1310 = vmatprep.subr.mxu0 0.0
    %1311 = vmatpush2.msra.mxu0 0.0
    %1312 = vmatprep.subr.mxu0 0.0
    %1313 = vmatpush2.msra.mxu0 0.0
    %1314 = vmatprep.subr.mxu0 0.0
    %1315 = vmatpush2.msra.mxu0 0.0
    %1316 = vmatprep.subr.mxu0 0.0
    %1317 = vmatpush2.msra.mxu0 0.0
    %1318 = vmatprep.subr.mxu0 0.0
    %1319 = vmatpush2.msra.mxu0 0.0
    %1320 = vmatprep.subr.mxu0 0.0
    %1321 = vmatpush2.msra.mxu0 0.0
    %1322 = vmatprep.subr.mxu0 0.0
    %1323 = vmatpush2.msra.mxu0 0.0
    %1324 = vmatprep.mubr.f32.mxu0 0.0
    %1325 = vmatmul.mubr.f32.gmra.mxu0 %v989
    %v1326 = vpop.f32.mrf.mxu0
    %v1327 = vadd.f32 0.0, %v1326
    %v1328 = vpop.f32.mrf.mxu0
    %v1329 = vadd.f32 0.0, %v1328
    %1330 = vmatprep.mubr.f32.mxu0 0.0
    %1331 = vmatmul.mubr.f32.gmra.mxu0 %v991
    %v1332 = vpop.f32.mrf.mxu0
    %v1333 = vadd.f32 0.0, %v1332
    %v1334 = vpop.f32.mrf.mxu0
    %v1335 = vadd.f32 0.0, %v1334
    %1336 = vmatprep.mubr.f32.mxu0 0.0
    %1337 = vmatmul.mubr.f32.gmra.mxu0 %v995
    %v1338 = vpop.f32.mrf.mxu0
    %v1339 = vadd.f32 0.0, %v1338
    %v1340 = vpop.f32.mrf.mxu0
    %v1341 = vadd.f32 0.0, %v1340
    %1342 = vdwg.mxu0
    %v1343 = vadd.f32 %v1211, %v1327
    %v1344 = vadd.f32 %v1213, %v1329
    %v1345 = vadd.f32 %v1217, %v1333
    %v1346 = vadd.f32 %v1219, %v1335
    %v1347 = vadd.f32 %v1223, %v1339
    %v1348 = vadd.f32 %v1225, %v1341
    %v1349 = vld [vmem:[#allocation17] sm:$0x3]
    %v1351 = vlaneseq
    %v1352 = vshrl.u32 %v1351, 7
    %v1353 = vsub.s32 0, %v1352
    %v1354 = vrot.slane %v1349, %v1353
    %v1355 = vlaneseq
    %v1356 = vshrl.u32 %v1355, 7
    %v1357 = vsub.s32 1, %v1356
    %v1358 = vrot.slane %v1349, %v1357
    %v1361 = vadd.f32 %v1343, %v1354
    %v1362 = vadd.f32 %v1344, %v1358
    %v1363 = vadd.f32 %v1345, %v1354
    %v1364 = vadd.f32 %v1346, %v1358
    %v1365 = vadd.f32 %v1347, %v1354
    %v1366 = vadd.f32 %v1348, %v1358
    %v1367 = vadd.f32 %v1361, %v1363
    %v1368 = vsel %vm235, %v1365, 0.0
    %v1369 = vadd.f32 %v1367, %v1368
    %v1370 = vrot.slane %v1369, 4
    %v1371 = vadd.f32 %v1369, %v1370
    %v1372 = vrot.slane %v1371, 2
    %v1373 = vadd.f32 %v1371, %v1372
    %v1374 = vrot.slane %v1373, 1
    %v1375 = vadd.f32 %v1373, %v1374
    %v1376 = vadd.f32 %v1362, %v1364
    %v1377 = vsel %vm235, %v1366, 0.0
    %v1378 = vadd.f32 %v1376, %v1377
    %v1379 = vrot.slane %v1378, 4
    %v1380 = vadd.f32 %v1378, %v1379
    %v1381 = vrot.slane %v1380, 2
    %v1382 = vadd.f32 %v1380, %v1381
    %v1383 = vrot.slane %v1382, 1
    %v1384 = vadd.f32 %v1382, %v1383
    %v1385 = vmul.f32 %v1375, %v545
    %v1386 = vmul.f32 %v1384, %v545
    %v1387 = vsub.f32 %v1361, %v1385
    %v1388 = vsub.f32 %v1362, %v1386
    %v1389 = vsub.f32 %v1363, %v1385
    %v1390 = vsub.f32 %v1364, %v1386
    %v1391 = vsub.f32 %v1365, %v1385
    %v1392 = vsub.f32 %v1366, %v1386
    %v1393 = vmul.f32 %v1387, %v1387
    %v1394 = vmul.f32 %v1388, %v1388
    %v1395 = vmul.f32 %v1389, %v1389
    %v1396 = vmul.f32 %v1390, %v1390
    %v1397 = vmul.f32 %v1391, %v1391
    %v1398 = vmul.f32 %v1392, %v1392
    %v1399 = vadd.f32 %v1393, %v1395
    %v1400 = vsel %vm235, %v1397, 0.0
    %v1401 = vadd.f32 %v1399, %v1400
    %v1402 = vrot.slane %v1401, 4
    %v1403 = vadd.f32 %v1401, %v1402
    %v1404 = vrot.slane %v1403, 2
    %v1405 = vadd.f32 %v1403, %v1404
    %v1406 = vrot.slane %v1405, 1
    %v1407 = vadd.f32 %v1405, %v1406
    %v1408 = vadd.f32 %v1394, %v1396
    %v1409 = vsel %vm235, %v1398, 0.0
    %v1410 = vadd.f32 %v1408, %v1409
    %v1411 = vrot.slane %v1410, 4
    %v1412 = vadd.f32 %v1410, %v1411
    %v1413 = vrot.slane %v1412, 2
    %v1414 = vadd.f32 %v1412, %v1413
    %v1415 = vrot.slane %v1414, 1
    %v1416 = vadd.f32 %v1414, %v1415
    %v1417 = vmul.f32 %v1407, %v545
    %v1418 = vmul.f32 %v1416, %v545
    %v1419 = vadd.f32 %v1417, 1e-05
    %v1420 = vadd.f32 %v1418, 1e-05
    %v1421 = vrsqrt.pop %v1419
    %v1422 = vrsqrt.pop %v1420
    %v1423 = vmul.f32 %v1387, %v1421
    %v1424 = vmul.f32 %v1388, %v1422
    %v1425 = vmul.f32 %v1389, %v1421
    %v1426 = vmul.f32 %v1390, %v1422
    %v1427 = vmul.f32 %v1391, %v1421
    %v1428 = vmul.f32 %v1392, %v1422
    %v1429 = vld [vmem:[#allocation19] sm:$0x3]
    %v1431 = vlaneseq
    %v1432 = vshrl.u32 %v1431, 7
    %v1433 = vsub.s32 0, %v1432
    %v1434 = vrot.slane %v1429, %v1433
    %v1435 = vlaneseq
    %v1436 = vshrl.u32 %v1435, 7
    %v1437 = vsub.s32 1, %v1436
    %v1438 = vrot.slane %v1429, %v1437
    %v1441 = vmul.f32 %v1423, %v1434
    %v1442 = vmul.f32 %v1424, %v1438
    %v1443 = vmul.f32 %v1425, %v1434
    %v1444 = vmul.f32 %v1426, %v1438
    %v1445 = vmul.f32 %v1427, %v1434
    %v1446 = vmul.f32 %v1428, %v1438
    %v1447 = vld [vmem:[#allocation20] sm:$0x3]
    %v1449 = vlaneseq
    %v1450 = vshrl.u32 %v1449, 7
    %v1451 = vsub.s32 0, %v1450
    %v1452 = vrot.slane %v1447, %v1451
    %v1453 = vlaneseq
    %v1454 = vshrl.u32 %v1453, 7
    %v1455 = vsub.s32 1, %v1454
    %v1456 = vrot.slane %v1447, %v1455
    %v1459 = vadd.f32 %v1441, %v1452
    %v1460 = vadd.f32 %v1442, %v1456
    %v1461 = vadd.f32 %v1443, %v1452
    %v1462 = vadd.f32 %v1444, %v1456
    %v1463 = vadd.f32 %v1445, %v1452
    %v1464 = vadd.f32 %v1446, %v1456
    %vm1465 = vcmp.gt.f32.partialorder %v1459, 0.0
    %vm1466 = vcmp.gt.f32.partialorder %v1460, 0.0
    %vm1467 = vcmp.gt.f32.partialorder %v1461, 0.0
    %vm1468 = vcmp.gt.f32.partialorder %v1462, 0.0
    %vm1469 = vcmp.gt.f32.partialorder %v1463, 0.0
    %vm1470 = vcmp.gt.f32.partialorder %v1464, 0.0
    %v1471 = vmul.f32 %v1459, 0.1
    %v1472 = vmul.f32 %v1460, 0.1
    %v1473 = vmul.f32 %v1461, 0.1
    %v1474 = vmul.f32 %v1462, 0.1
    %v1475 = vmul.f32 %v1463, 0.1
    %v1476 = vmul.f32 %v1464, 0.1
    %v1477 = vsel %vm1465, %v1459, %v1471
    %v1478 = vsel %vm1466, %v1460, %v1472
    %v1479 = vsel %vm1467, %v1461, %v1473
    %v1480 = vsel %vm1468, %v1462, %v1474
    %v1481 = vsel %vm1469, %v1463, %v1475
    %v1482 = vsel %vm1470, %v1464, %v1476
    %v1483 = vld [vmem:[#allocation22] sm:$0xff]
    %v1484 = vld [vmem:[#allocation22 + $0x8] sm:$0xff]
    %v1485 = vld [vmem:[#allocation22 + $0x10] sm:$0xff]
    %v1486 = vld [vmem:[#allocation22 + $0x18] sm:$0xff]
    %v1487 = vld [vmem:[#allocation22 + $0x20] sm:$0xff]
    %v1488 = vld [vmem:[#allocation22 + $0x28] sm:$0xff]
    %v1489 = vld [vmem:[#allocation22 + $0x30] sm:$0xff]
    %v1490 = vld [vmem:[#allocation22 + $0x38] sm:$0xff]
    %v1491 = vld [vmem:[#allocation22 + $0x40] sm:$0xff]
    %v1492 = vld [vmem:[#allocation22 + $0x48] sm:$0xff]
    %v1493 = vld [vmem:[#allocation22 + $0x50] sm:$0xff]
    %v1494 = vld [vmem:[#allocation22 + $0x58] sm:$0xff]
    %v1495 = vld [vmem:[#allocation22 + $0x60] sm:$0xff]
    %v1496 = vld [vmem:[#allocation22 + $0x68] sm:$0xff]
    %v1497 = vld [vmem:[#allocation22 + $0x70] sm:$0xff]
    %v1498 = vld [vmem:[#allocation22 + $0x78] sm:$0xff]
    %v1499 = vld [vmem:[#allocation22 + $0x80] sm:$0xff]
    %v1500 = vld [vmem:[#allocation22 + $0x88] sm:$0xff]
    %v1501 = vld [vmem:[#allocation22 + $0x90] sm:$0xff]
    %v1502 = vld [vmem:[#allocation22 + $0x98] sm:$0xff]
    %v1503 = vld [vmem:[#allocation22 + $0xa0] sm:$0xff]
    %v1504 = vld [vmem:[#allocation22 + $0xa8] sm:$0xff]
    %v1505 = vld [vmem:[#allocation22 + $0xb0] sm:$0xff]
    %v1506 = vld [vmem:[#allocation22 + $0xb8] sm:$0xff]
    %v1507 = vld [vmem:[#allocation22 + $0xc0] sm:$0xff]
    %v1508 = vld [vmem:[#allocation22 + $0xc8] sm:$0xff]
    %v1509 = vld [vmem:[#allocation22 + $0xd0] sm:$0xff]
    %v1510 = vld [vmem:[#allocation22 + $0xd8] sm:$0xff]
    %v1511 = vld [vmem:[#allocation22 + $0xe0] sm:$0xff]
    %v1512 = vld [vmem:[#allocation22 + $0xe8] sm:$0xff]
    %v1513 = vld [vmem:[#allocation22 + $0xf0] sm:$0xff]
    %v1514 = vld [vmem:[#allocation22 + $0xf8] sm:$0xff]
    %v1515 = vld [vmem:[#allocation22 + $0x100] sm:$0xff]
    %v1516 = vld [vmem:[#allocation22 + $0x108] sm:$0xff]
    %v1517 = vld [vmem:[#allocation22 + $0x110] sm:$0xff]
    %v1518 = vld [vmem:[#allocation22 + $0x118] sm:$0xff]
    %v1519 = vld [vmem:[#allocation22 + $0x120] sm:$0xff]
    %v1520 = vld [vmem:[#allocation22 + $0x128] sm:$0xff]
    %v1521 = vld [vmem:[#allocation22 + $0x130] sm:$0xff]
    %v1522 = vld [vmem:[#allocation22 + $0x138] sm:$0xff]
    %v1523 = vld [vmem:[#allocation22 + $0x140] sm:$0xff]
    %v1524 = vld [vmem:[#allocation22 + $0x148] sm:$0xff]
    %v1525 = vld [vmem:[#allocation22 + $0x150] sm:$0xff]
    %v1526 = vld [vmem:[#allocation22 + $0x158] sm:$0xff]
    %v1527 = vld [vmem:[#allocation22 + $0x160] sm:$0xff]
    %v1528 = vld [vmem:[#allocation22 + $0x168] sm:$0xff]
    %v1529 = vld [vmem:[#allocation22 + $0x170] sm:$0xff]
    %v1530 = vld [vmem:[#allocation22 + $0x178] sm:$0xff]
    %v1531 = vld [vmem:[#allocation22 + $0x180] sm:$0xff]
    %v1532 = vld [vmem:[#allocation22 + $0x188] sm:$0xff]
    %v1533 = vld [vmem:[#allocation22 + $0x190] sm:$0xff]
    %v1534 = vld [vmem:[#allocation22 + $0x198] sm:$0xff]
    %v1535 = vld [vmem:[#allocation22 + $0x1a0] sm:$0xff]
    %v1536 = vld [vmem:[#allocation22 + $0x1a8] sm:$0xff]
    %v1537 = vld [vmem:[#allocation22 + $0x1b0] sm:$0xff]
    %v1538 = vld [vmem:[#allocation22 + $0x1b8] sm:$0xff]
    %v1539 = vld [vmem:[#allocation22 + $0x1c0] sm:$0xff]
    %v1540 = vld [vmem:[#allocation22 + $0x1c8] sm:$0xff]
    %v1541 = vld [vmem:[#allocation22 + $0x1d0] sm:$0xff]
    %v1542 = vld [vmem:[#allocation22 + $0x1d8] sm:$0xff]
    %v1543 = vld [vmem:[#allocation22 + $0x1e0] sm:$0xff]
    %v1544 = vld [vmem:[#allocation22 + $0x1e8] sm:$0xff]
    %v1545 = vld [vmem:[#allocation22 + $0x1f0] sm:$0xff]
    %v1546 = vld [vmem:[#allocation22 + $0x1f8] sm:$0xff]
    %v1547 = vld [vmem:[#allocation22 + $0x200] sm:$0xff]
    %v1548 = vld [vmem:[#allocation22 + $0x208] sm:$0xff]
    %v1549 = vld [vmem:[#allocation22 + $0x210] sm:$0xff]
    %v1550 = vld [vmem:[#allocation22 + $0x218] sm:$0xff]
    %v1551 = vld [vmem:[#allocation22 + $0x220] sm:$0xff]
    %v1552 = vld [vmem:[#allocation22 + $0x228] sm:$0xff]
    %v1553 = vld [vmem:[#allocation22 + $0x230] sm:$0xff]
    %v1554 = vld [vmem:[#allocation22 + $0x238] sm:$0xff]
    %v1555 = vld [vmem:[#allocation22 + $0x240] sm:$0xff]
    %v1556 = vld [vmem:[#allocation22 + $0x248] sm:$0xff]
    %v1557 = vld [vmem:[#allocation22 + $0x250] sm:$0xff]
    %v1558 = vld [vmem:[#allocation22 + $0x258] sm:$0xff]
    %v1559 = vld [vmem:[#allocation22 + $0x260] sm:$0xff]
    %v1560 = vld [vmem:[#allocation22 + $0x268] sm:$0xff]
    %v1561 = vld [vmem:[#allocation22 + $0x270] sm:$0xff]
    %v1562 = vld [vmem:[#allocation22 + $0x278] sm:$0xff]
    %v1563 = vld [vmem:[#allocation22 + $0x280] sm:$0xff]
    %v1564 = vld [vmem:[#allocation22 + $0x288] sm:$0xff]
    %v1565 = vld [vmem:[#allocation22 + $0x290] sm:$0xff]
    %v1566 = vld [vmem:[#allocation22 + $0x298] sm:$0xff]
    %v1567 = vld [vmem:[#allocation22 + $0x2a0] sm:$0xff]
    %v1568 = vld [vmem:[#allocation22 + $0x2a8] sm:$0xff]
    %v1569 = vld [vmem:[#allocation22 + $0x2b0] sm:$0xff]
    %v1570 = vld [vmem:[#allocation22 + $0x2b8] sm:$0xff]
    %v1571 = vld [vmem:[#allocation22 + $0x2c0] sm:$0xff]
    %v1572 = vld [vmem:[#allocation22 + $0x2c8] sm:$0xff]
    %v1573 = vld [vmem:[#allocation22 + $0x2d0] sm:$0xff]
    %v1574 = vld [vmem:[#allocation22 + $0x2d8] sm:$0xff]
    %v1575 = vld [vmem:[#allocation22 + $0x2e0] sm:$0xff]
    %v1576 = vld [vmem:[#allocation22 + $0x2e8] sm:$0xff]
    %v1577 = vld [vmem:[#allocation22 + $0x2f0] sm:$0xff]
    %v1578 = vld [vmem:[#allocation22 + $0x2f8] sm:$0xff]
    %v1579 = vld [vmem:[#allocation22 + $0x300] sm:$0xff]
    %v1580 = vld [vmem:[#allocation22 + $0x308] sm:$0xff]
    %v1581 = vld [vmem:[#allocation22 + $0x310] sm:$0xff]
    %v1582 = vld [vmem:[#allocation22 + $0x318] sm:$0xff]
    %v1583 = vld [vmem:[#allocation22 + $0x320] sm:$0xff]
    %v1584 = vld [vmem:[#allocation22 + $0x328] sm:$0xff]
    %v1585 = vld [vmem:[#allocation22 + $0x330] sm:$0xff]
    %v1586 = vld [vmem:[#allocation22 + $0x338] sm:$0xff]
    %v1587 = vld [vmem:[#allocation22 + $0x340] sm:$0xff]
    %v1588 = vld [vmem:[#allocation22 + $0x348] sm:$0xff]
    %v1589 = vld [vmem:[#allocation22 + $0x350] sm:$0xff]
    %v1590 = vld [vmem:[#allocation22 + $0x358] sm:$0xff]
    %v1591 = vld [vmem:[#allocation22 + $0x360] sm:$0xff]
    %v1592 = vld [vmem:[#allocation22 + $0x368] sm:$0xff]
    %v1593 = vld [vmem:[#allocation22 + $0x370] sm:$0xff]
    %v1594 = vld [vmem:[#allocation22 + $0x378] sm:$0xff]
    %v1595 = vld [vmem:[#allocation22 + $0x380] sm:$0xff]
    %v1596 = vld [vmem:[#allocation22 + $0x388] sm:$0xff]
    %v1597 = vld [vmem:[#allocation22 + $0x390] sm:$0xff]
    %v1598 = vld [vmem:[#allocation22 + $0x398] sm:$0xff]
    %v1599 = vld [vmem:[#allocation22 + $0x3a0] sm:$0xff]
    %v1600 = vld [vmem:[#allocation22 + $0x3a8] sm:$0xff]
    %v1601 = vld [vmem:[#allocation22 + $0x3b0] sm:$0xff]
    %v1602 = vld [vmem:[#allocation22 + $0x3b8] sm:$0xff]
    %v1603 = vld [vmem:[#allocation22 + $0x3c0] sm:$0xff]
    %v1604 = vld [vmem:[#allocation22 + $0x3c8] sm:$0xff]
    %v1605 = vld [vmem:[#allocation22 + $0x3d0] sm:$0xff]
    %v1606 = vld [vmem:[#allocation22 + $0x3d8] sm:$0xff]
    %v1607 = vld [vmem:[#allocation22 + $0x3e0] sm:$0xff]
    %v1608 = vld [vmem:[#allocation22 + $0x3e8] sm:$0xff]
    %v1609 = vld [vmem:[#allocation22 + $0x3f0] sm:$0xff]
    %v1610 = vld [vmem:[#allocation22 + $0x3f8] sm:$0xff]
    %v1613 = vrot.slane %v1477, 2
    %v1614 = vrot.slane %v1478, 2
    %1617 = vmatprep.subr.mxu0 %v1578
    %1618 = vmatpush1.msra.mxu0 %v1577
    %1619 = vmatprep.subr.mxu0 %v1576
    %1620 = vmatpush1.msra.mxu0 %v1575
    %1621 = vmatprep.subr.mxu0 %v1574
    %1622 = vmatpush1.msra.mxu0 %v1573
    %1623 = vmatprep.subr.mxu0 %v1572
    %1624 = vmatpush1.msra.mxu0 %v1571
    %1625 = vmatprep.subr.mxu0 %v1570
    %1626 = vmatpush1.msra.mxu0 %v1569
    %1627 = vmatprep.subr.mxu0 %v1568
    %1628 = vmatpush1.msra.mxu0 %v1567
    %1629 = vmatprep.subr.mxu0 %v1566
    %1630 = vmatpush1.msra.mxu0 %v1565
    %1631 = vmatprep.subr.mxu0 %v1564
    %1632 = vmatpush1.msra.mxu0 %v1563
    %1633 = vmatprep.subr.mxu0 %v1562
    %1634 = vmatpush1.msra.mxu0 %v1561
    %1635 = vmatprep.subr.mxu0 %v1560
    %1636 = vmatpush1.msra.mxu0 %v1559
    %1637 = vmatprep.subr.mxu0 %v1558
    %1638 = vmatpush1.msra.mxu0 %v1557
    %1639 = vmatprep.subr.mxu0 %v1556
    %1640 = vmatpush1.msra.mxu0 %v1555
    %1641 = vmatprep.subr.mxu0 %v1554
    %1642 = vmatpush1.msra.mxu0 %v1553
    %1643 = vmatprep.subr.mxu0 %v1552
    %1644 = vmatpush1.msra.mxu0 %v1551
    %1645 = vmatprep.subr.mxu0 %v1550
    %1646 = vmatpush1.msra.mxu0 %v1549
    %1647 = vmatprep.subr.mxu0 %v1548
    %1648 = vmatpush1.msra.mxu0 %v1547
    %1649 = vmatprep.subr.mxu0 %v1610
    %1650 = vmatpush2.msra.mxu0 %v1609
    %1651 = vmatprep.subr.mxu0 %v1608
    %1652 = vmatpush2.msra.mxu0 %v1607
    %1653 = vmatprep.subr.mxu0 %v1606
    %1654 = vmatpush2.msra.mxu0 %v1605
    %1655 = vmatprep.subr.mxu0 %v1604
    %1656 = vmatpush2.msra.mxu0 %v1603
    %1657 = vmatprep.subr.mxu0 %v1602
    %1658 = vmatpush2.msra.mxu0 %v1601
    %1659 = vmatprep.subr.mxu0 %v1600
    %1660 = vmatpush2.msra.mxu0 %v1599
    %1661 = vmatprep.subr.mxu0 %v1598
    %1662 = vmatpush2.msra.mxu0 %v1597
    %1663 = vmatprep.subr.mxu0 %v1596
    %1664 = vmatpush2.msra.mxu0 %v1595
    %1665 = vmatprep.subr.mxu0 %v1594
    %1666 = vmatpush2.msra.mxu0 %v1593
    %1667 = vmatprep.subr.mxu0 %v1592
    %1668 = vmatpush2.msra.mxu0 %v1591
    %1669 = vmatprep.subr.mxu0 %v1590
    %1670 = vmatpush2.msra.mxu0 %v1589
    %1671 = vmatprep.subr.mxu0 %v1588
    %1672 = vmatpush2.msra.mxu0 %v1587
    %1673 = vmatprep.subr.mxu0 %v1586
    %1674 = vmatpush2.msra.mxu0 %v1585
    %1675 = vmatprep.subr.mxu0 %v1584
    %1676 = vmatpush2.msra.mxu0 %v1583
    %1677 = vmatprep.subr.mxu0 %v1582
    %1678 = vmatpush2.msra.mxu0 %v1581
    %1679 = vmatprep.subr.mxu0 %v1580
    %1680 = vmatpush2.msra.mxu0 %v1579
    %1681 = vmatprep.mubr.f32.mxu0 %v1614
    %1682 = vmatmul.mubr.f32.gmra.mxu0 %v1613
    %v1683 = vpop.f32.mrf.mxu0
    %v1684 = vadd.f32 0.0, %v1683
    %v1685 = vpop.f32.mrf.mxu0
    %v1686 = vadd.f32 0.0, %v1685
    %1687 = vdwg.mxu0
    %1688 = vmatprep.subr.mxu0 %v1514
    %1689 = vmatpush1.msra.mxu0 %v1513
    %1690 = vmatprep.subr.mxu0 %v1512
    %1691 = vmatpush1.msra.mxu0 %v1511
    %1692 = vmatprep.subr.mxu0 %v1510
    %1693 = vmatpush1.msra.mxu0 %v1509
    %1694 = vmatprep.subr.mxu0 %v1508
    %1695 = vmatpush1.msra.mxu0 %v1507
    %1696 = vmatprep.subr.mxu0 %v1506
    %1697 = vmatpush1.msra.mxu0 %v1505
    %1698 = vmatprep.subr.mxu0 %v1504
    %1699 = vmatpush1.msra.mxu0 %v1503
    %1700 = vmatprep.subr.mxu0 %v1502
    %1701 = vmatpush1.msra.mxu0 %v1501
    %1702 = vmatprep.subr.mxu0 %v1500
    %1703 = vmatpush1.msra.mxu0 %v1499
    %1704 = vmatprep.subr.mxu0 %v1498
    %1705 = vmatpush1.msra.mxu0 %v1497
    %1706 = vmatprep.subr.mxu0 %v1496
    %1707 = vmatpush1.msra.mxu0 %v1495
    %1708 = vmatprep.subr.mxu0 %v1494
    %1709 = vmatpush1.msra.mxu0 %v1493
    %1710 = vmatprep.subr.mxu0 %v1492
    %1711 = vmatpush1.msra.mxu0 %v1491
    %1712 = vmatprep.subr.mxu0 %v1490
    %1713 = vmatpush1.msra.mxu0 %v1489
    %1714 = vmatprep.subr.mxu0 %v1488
    %1715 = vmatpush1.msra.mxu0 %v1487
    %1716 = vmatprep.subr.mxu0 %v1486
    %1717 = vmatpush1.msra.mxu0 %v1485
    %1718 = vmatprep.subr.mxu0 %v1484
    %1719 = vmatpush1.msra.mxu0 %v1483
    %1720 = vmatprep.subr.mxu0 %v1546
    %1721 = vmatpush2.msra.mxu0 %v1545
    %1722 = vmatprep.subr.mxu0 %v1544
    %1723 = vmatpush2.msra.mxu0 %v1543
    %1724 = vmatprep.subr.mxu0 %v1542
    %1725 = vmatpush2.msra.mxu0 %v1541
    %1726 = vmatprep.subr.mxu0 %v1540
    %1727 = vmatpush2.msra.mxu0 %v1539
    %1728 = vmatprep.subr.mxu0 %v1538
    %1729 = vmatpush2.msra.mxu0 %v1537
    %1730 = vmatprep.subr.mxu0 %v1536
    %1731 = vmatpush2.msra.mxu0 %v1535
    %1732 = vmatprep.subr.mxu0 %v1534
    %1733 = vmatpush2.msra.mxu0 %v1533
    %1734 = vmatprep.subr.mxu0 %v1532
    %1735 = vmatpush2.msra.mxu0 %v1531
    %1736 = vmatprep.subr.mxu0 %v1530
    %1737 = vmatpush2.msra.mxu0 %v1529
    %1738 = vmatprep.subr.mxu0 %v1528
    %1739 = vmatpush2.msra.mxu0 %v1527
    %1740 = vmatprep.subr.mxu0 %v1526
    %1741 = vmatpush2.msra.mxu0 %v1525
    %1742 = vmatprep.subr.mxu0 %v1524
    %1743 = vmatpush2.msra.mxu0 %v1523
    %1744 = vmatprep.subr.mxu0 %v1522
    %1745 = vmatpush2.msra.mxu0 %v1521
    %1746 = vmatprep.subr.mxu0 %v1520
    %1747 = vmatpush2.msra.mxu0 %v1519
    %1748 = vmatprep.subr.mxu0 %v1518
    %1749 = vmatpush2.msra.mxu0 %v1517
    %1750 = vmatprep.subr.mxu0 %v1516
    %1751 = vmatpush2.msra.mxu0 %v1515
    %1752 = vmatprep.mubr.f32.mxu0 %v1478
    %1753 = vmatmul.mubr.f32.gmra.mxu0 %v1477
    %v1754 = vpop.f32.mrf.mxu0
    %v1755 = vadd.f32 %v1684, %v1754
    %v1756 = vpop.f32.mrf.mxu0
    %v1757 = vadd.f32 %v1686, %v1756
    %1758 = vdwg.mxu0
    %v1759 = vld [vmem:[#allocation22 + $0x400] sm:$0xff]
    %v1760 = vld [vmem:[#allocation22 + $0x408] sm:$0xff]
    %v1761 = vld [vmem:[#allocation22 + $0x410] sm:$0xff]
    %v1762 = vld [vmem:[#allocation22 + $0x418] sm:$0xff]
    %v1763 = vld [vmem:[#allocation22 + $0x420] sm:$0xff]
    %v1764 = vld [vmem:[#allocation22 + $0x428] sm:$0xff]
    %v1765 = vld [vmem:[#allocation22 + $0x430] sm:$0xff]
    %v1766 = vld [vmem:[#allocation22 + $0x438] sm:$0xff]
    %v1767 = vld [vmem:[#allocation22 + $0x440] sm:$0xff]
    %v1768 = vld [vmem:[#allocation22 + $0x448] sm:$0xff]
    %v1769 = vld [vmem:[#allocation22 + $0x450] sm:$0xff]
    %v1770 = vld [vmem:[#allocation22 + $0x458] sm:$0xff]
    %v1771 = vld [vmem:[#allocation22 + $0x460] sm:$0xff]
    %v1772 = vld [vmem:[#allocation22 + $0x468] sm:$0xff]
    %v1773 = vld [vmem:[#allocation22 + $0x470] sm:$0xff]
    %v1774 = vld [vmem:[#allocation22 + $0x478] sm:$0xff]
    %v1775 = vld [vmem:[#allocation22 + $0x480] sm:$0xff]
    %v1776 = vld [vmem:[#allocation22 + $0x488] sm:$0xff]
    %v1777 = vld [vmem:[#allocation22 + $0x490] sm:$0xff]
    %v1778 = vld [vmem:[#allocation22 + $0x498] sm:$0xff]
    %v1779 = vld [vmem:[#allocation22 + $0x4a0] sm:$0xff]
    %v1780 = vld [vmem:[#allocation22 + $0x4a8] sm:$0xff]
    %v1781 = vld [vmem:[#allocation22 + $0x4b0] sm:$0xff]
    %v1782 = vld [vmem:[#allocation22 + $0x4b8] sm:$0xff]
    %v1783 = vld [vmem:[#allocation22 + $0x4c0] sm:$0xff]
    %v1784 = vld [vmem:[#allocation22 + $0x4c8] sm:$0xff]
    %v1785 = vld [vmem:[#allocation22 + $0x4d0] sm:$0xff]
    %v1786 = vld [vmem:[#allocation22 + $0x4d8] sm:$0xff]
    %v1787 = vld [vmem:[#allocation22 + $0x4e0] sm:$0xff]
    %v1788 = vld [vmem:[#allocation22 + $0x4e8] sm:$0xff]
    %v1789 = vld [vmem:[#allocation22 + $0x4f0] sm:$0xff]
    %v1790 = vld [vmem:[#allocation22 + $0x4f8] sm:$0xff]
    %v1791 = vld [vmem:[#allocation22 + $0x500] sm:$0xff]
    %v1792 = vld [vmem:[#allocation22 + $0x508] sm:$0xff]
    %v1793 = vld [vmem:[#allocation22 + $0x510] sm:$0xff]
    %v1794 = vld [vmem:[#allocation22 + $0x518] sm:$0xff]
    %v1795 = vld [vmem:[#allocation22 + $0x520] sm:$0xff]
    %v1796 = vld [vmem:[#allocation22 + $0x528] sm:$0xff]
    %v1797 = vld [vmem:[#allocation22 + $0x530] sm:$0xff]
    %v1798 = vld [vmem:[#allocation22 + $0x538] sm:$0xff]
    %v1799 = vld [vmem:[#allocation22 + $0x540] sm:$0xff]
    %v1800 = vld [vmem:[#allocation22 + $0x548] sm:$0xff]
    %v1801 = vld [vmem:[#allocation22 + $0x550] sm:$0xff]
    %v1802 = vld [vmem:[#allocation22 + $0x558] sm:$0xff]
    %v1803 = vld [vmem:[#allocation22 + $0x560] sm:$0xff]
    %v1804 = vld [vmem:[#allocation22 + $0x568] sm:$0xff]
    %v1805 = vld [vmem:[#allocation22 + $0x570] sm:$0xff]
    %v1806 = vld [vmem:[#allocation22 + $0x578] sm:$0xff]
    %v1807 = vld [vmem:[#allocation22 + $0x580] sm:$0xff]
    %v1808 = vld [vmem:[#allocation22 + $0x588] sm:$0xff]
    %v1809 = vld [vmem:[#allocation22 + $0x590] sm:$0xff]
    %v1810 = vld [vmem:[#allocation22 + $0x598] sm:$0xff]
    %v1811 = vld [vmem:[#allocation22 + $0x5a0] sm:$0xff]
    %v1812 = vld [vmem:[#allocation22 + $0x5a8] sm:$0xff]
    %v1813 = vld [vmem:[#allocation22 + $0x5b0] sm:$0xff]
    %v1814 = vld [vmem:[#allocation22 + $0x5b8] sm:$0xff]
    %v1815 = vld [vmem:[#allocation22 + $0x5c0] sm:$0xff]
    %v1816 = vld [vmem:[#allocation22 + $0x5c8] sm:$0xff]
    %v1817 = vld [vmem:[#allocation22 + $0x5d0] sm:$0xff]
    %v1818 = vld [vmem:[#allocation22 + $0x5d8] sm:$0xff]
    %v1819 = vld [vmem:[#allocation22 + $0x5e0] sm:$0xff]
    %v1820 = vld [vmem:[#allocation22 + $0x5e8] sm:$0xff]
    %v1821 = vld [vmem:[#allocation22 + $0x5f0] sm:$0xff]
    %v1822 = vld [vmem:[#allocation22 + $0x5f8] sm:$0xff]
    %v1823 = vrot.slane %v1477, 4
    %v1824 = vrot.slane %v1478, 4
    %1827 = vmatprep.subr.mxu0 %v1790
    %1828 = vmatpush1.msra.mxu0 %v1789
    %1829 = vmatprep.subr.mxu0 %v1788
    %1830 = vmatpush1.msra.mxu0 %v1787
    %1831 = vmatprep.subr.mxu0 %v1786
    %1832 = vmatpush1.msra.mxu0 %v1785
    %1833 = vmatprep.subr.mxu0 %v1784
    %1834 = vmatpush1.msra.mxu0 %v1783
    %1835 = vmatprep.subr.mxu0 %v1782
    %1836 = vmatpush1.msra.mxu0 %v1781
    %1837 = vmatprep.subr.mxu0 %v1780
    %1838 = vmatpush1.msra.mxu0 %v1779
    %1839 = vmatprep.subr.mxu0 %v1778
    %1840 = vmatpush1.msra.mxu0 %v1777
    %1841 = vmatprep.subr.mxu0 %v1776
    %1842 = vmatpush1.msra.mxu0 %v1775
    %1843 = vmatprep.subr.mxu0 %v1774
    %1844 = vmatpush1.msra.mxu0 %v1773
    %1845 = vmatprep.subr.mxu0 %v1772
    %1846 = vmatpush1.msra.mxu0 %v1771
    %1847 = vmatprep.subr.mxu0 %v1770
    %1848 = vmatpush1.msra.mxu0 %v1769
    %1849 = vmatprep.subr.mxu0 %v1768
    %1850 = vmatpush1.msra.mxu0 %v1767
    %1851 = vmatprep.subr.mxu0 %v1766
    %1852 = vmatpush1.msra.mxu0 %v1765
    %1853 = vmatprep.subr.mxu0 %v1764
    %1854 = vmatpush1.msra.mxu0 %v1763
    %1855 = vmatprep.subr.mxu0 %v1762
    %1856 = vmatpush1.msra.mxu0 %v1761
    %1857 = vmatprep.subr.mxu0 %v1760
    %1858 = vmatpush1.msra.mxu0 %v1759
    %1859 = vmatprep.subr.mxu0 %v1822
    %1860 = vmatpush2.msra.mxu0 %v1821
    %1861 = vmatprep.subr.mxu0 %v1820
    %1862 = vmatpush2.msra.mxu0 %v1819
    %1863 = vmatprep.subr.mxu0 %v1818
    %1864 = vmatpush2.msra.mxu0 %v1817
    %1865 = vmatprep.subr.mxu0 %v1816
    %1866 = vmatpush2.msra.mxu0 %v1815
    %1867 = vmatprep.subr.mxu0 %v1814
    %1868 = vmatpush2.msra.mxu0 %v1813
    %1869 = vmatprep.subr.mxu0 %v1812
    %1870 = vmatpush2.msra.mxu0 %v1811
    %1871 = vmatprep.subr.mxu0 %v1810
    %1872 = vmatpush2.msra.mxu0 %v1809
    %1873 = vmatprep.subr.mxu0 %v1808
    %1874 = vmatpush2.msra.mxu0 %v1807
    %1875 = vmatprep.subr.mxu0 %v1806
    %1876 = vmatpush2.msra.mxu0 %v1805
    %1877 = vmatprep.subr.mxu0 %v1804
    %1878 = vmatpush2.msra.mxu0 %v1803
    %1879 = vmatprep.subr.mxu0 %v1802
    %1880 = vmatpush2.msra.mxu0 %v1801
    %1881 = vmatprep.subr.mxu0 %v1800
    %1882 = vmatpush2.msra.mxu0 %v1799
    %1883 = vmatprep.subr.mxu0 %v1798
    %1884 = vmatpush2.msra.mxu0 %v1797
    %1885 = vmatprep.subr.mxu0 %v1796
    %1886 = vmatpush2.msra.mxu0 %v1795
    %1887 = vmatprep.subr.mxu0 %v1794
    %1888 = vmatpush2.msra.mxu0 %v1793
    %1889 = vmatprep.subr.mxu0 %v1792
    %1890 = vmatpush2.msra.mxu0 %v1791
    %1891 = vmatprep.mubr.f32.mxu0 %v1824
    %1892 = vmatmul.mubr.f32.gmra.mxu0 %v1823
    %v1893 = vpop.f32.mrf.mxu0
    %v1894 = vadd.f32 0.0, %v1893
    %v1895 = vpop.f32.mrf.mxu0
    %v1896 = vadd.f32 0.0, %v1895
    %1897 = vdwg.mxu0
    %v1898 = vadd.f32 %v1755, %v1894
    %v1899 = vadd.f32 %v1757, %v1896
    %v1900 = vld [vmem:[#allocation22 + $0x600] sm:$0xff]
    %v1901 = vld [vmem:[#allocation22 + $0x608] sm:$0xff]
    %v1902 = vld [vmem:[#allocation22 + $0x610] sm:$0xff]
    %v1903 = vld [vmem:[#allocation22 + $0x618] sm:$0xff]
    %v1904 = vld [vmem:[#allocation22 + $0x620] sm:$0xff]
    %v1905 = vld [vmem:[#allocation22 + $0x628] sm:$0xff]
    %v1906 = vld [vmem:[#allocation22 + $0x630] sm:$0xff]
    %v1907 = vld [vmem:[#allocation22 + $0x638] sm:$0xff]
    %v1908 = vld [vmem:[#allocation22 + $0x640] sm:$0xff]
    %v1909 = vld [vmem:[#allocation22 + $0x648] sm:$0xff]
    %v1910 = vld [vmem:[#allocation22 + $0x650] sm:$0xff]
    %v1911 = vld [vmem:[#allocation22 + $0x658] sm:$0xff]
    %v1912 = vld [vmem:[#allocation22 + $0x660] sm:$0xff]
    %v1913 = vld [vmem:[#allocation22 + $0x668] sm:$0xff]
    %v1914 = vld [vmem:[#allocation22 + $0x670] sm:$0xff]
    %v1915 = vld [vmem:[#allocation22 + $0x678] sm:$0xff]
    %v1916 = vld [vmem:[#allocation22 + $0x680] sm:$0xff]
    %v1917 = vld [vmem:[#allocation22 + $0x688] sm:$0xff]
    %v1918 = vld [vmem:[#allocation22 + $0x690] sm:$0xff]
    %v1919 = vld [vmem:[#allocation22 + $0x698] sm:$0xff]
    %v1920 = vld [vmem:[#allocation22 + $0x6a0] sm:$0xff]
    %v1921 = vld [vmem:[#allocation22 + $0x6a8] sm:$0xff]
    %v1922 = vld [vmem:[#allocation22 + $0x6b0] sm:$0xff]
    %v1923 = vld [vmem:[#allocation22 + $0x6b8] sm:$0xff]
    %v1924 = vld [vmem:[#allocation22 + $0x6c0] sm:$0xff]
    %v1925 = vld [vmem:[#allocation22 + $0x6c8] sm:$0xff]
    %v1926 = vld [vmem:[#allocation22 + $0x6d0] sm:$0xff]
    %v1927 = vld [vmem:[#allocation22 + $0x6d8] sm:$0xff]
    %v1928 = vld [vmem:[#allocation22 + $0x6e0] sm:$0xff]
    %v1929 = vld [vmem:[#allocation22 + $0x6e8] sm:$0xff]
    %v1930 = vld [vmem:[#allocation22 + $0x6f0] sm:$0xff]
    %v1931 = vld [vmem:[#allocation22 + $0x6f8] sm:$0xff]
    %v1932 = vld [vmem:[#allocation22 + $0x700] sm:$0xff]
    %v1933 = vld [vmem:[#allocation22 + $0x708] sm:$0xff]
    %v1934 = vld [vmem:[#allocation22 + $0x710] sm:$0xff]
    %v1935 = vld [vmem:[#allocation22 + $0x718] sm:$0xff]
    %v1936 = vld [vmem:[#allocation22 + $0x720] sm:$0xff]
    %v1937 = vld [vmem:[#allocation22 + $0x728] sm:$0xff]
    %v1938 = vld [vmem:[#allocation22 + $0x730] sm:$0xff]
    %v1939 = vld [vmem:[#allocation22 + $0x738] sm:$0xff]
    %v1940 = vld [vmem:[#allocation22 + $0x740] sm:$0xff]
    %v1941 = vld [vmem:[#allocation22 + $0x748] sm:$0xff]
    %v1942 = vld [vmem:[#allocation22 + $0x750] sm:$0xff]
    %v1943 = vld [vmem:[#allocation22 + $0x758] sm:$0xff]
    %v1944 = vld [vmem:[#allocation22 + $0x760] sm:$0xff]
    %v1945 = vld [vmem:[#allocation22 + $0x768] sm:$0xff]
    %v1946 = vld [vmem:[#allocation22 + $0x770] sm:$0xff]
    %v1947 = vld [vmem:[#allocation22 + $0x778] sm:$0xff]
    %v1948 = vld [vmem:[#allocation22 + $0x780] sm:$0xff]
    %v1949 = vld [vmem:[#allocation22 + $0x788] sm:$0xff]
    %v1950 = vld [vmem:[#allocation22 + $0x790] sm:$0xff]
    %v1951 = vld [vmem:[#allocation22 + $0x798] sm:$0xff]
    %v1952 = vld [vmem:[#allocation22 + $0x7a0] sm:$0xff]
    %v1953 = vld [vmem:[#allocation22 + $0x7a8] sm:$0xff]
    %v1954 = vld [vmem:[#allocation22 + $0x7b0] sm:$0xff]
    %v1955 = vld [vmem:[#allocation22 + $0x7b8] sm:$0xff]
    %v1956 = vld [vmem:[#allocation22 + $0x7c0] sm:$0xff]
    %v1957 = vld [vmem:[#allocation22 + $0x7c8] sm:$0xff]
    %v1958 = vld [vmem:[#allocation22 + $0x7d0] sm:$0xff]
    %v1959 = vld [vmem:[#allocation22 + $0x7d8] sm:$0xff]
    %v1960 = vld [vmem:[#allocation22 + $0x7e0] sm:$0xff]
    %v1961 = vld [vmem:[#allocation22 + $0x7e8] sm:$0xff]
    %v1962 = vld [vmem:[#allocation22 + $0x7f0] sm:$0xff]
    %v1963 = vld [vmem:[#allocation22 + $0x7f8] sm:$0xff]
    %v1964 = vrot.slane %v1477, 6
    %v1965 = vrot.slane %v1478, 6
    %1968 = vmatprep.subr.mxu0 %v1931
    %1969 = vmatpush1.msra.mxu0 %v1930
    %1970 = vmatprep.subr.mxu0 %v1929
    %1971 = vmatpush1.msra.mxu0 %v1928
    %1972 = vmatprep.subr.mxu0 %v1927
    %1973 = vmatpush1.msra.mxu0 %v1926
    %1974 = vmatprep.subr.mxu0 %v1925
    %1975 = vmatpush1.msra.mxu0 %v1924
    %1976 = vmatprep.subr.mxu0 %v1923
    %1977 = vmatpush1.msra.mxu0 %v1922
    %1978 = vmatprep.subr.mxu0 %v1921
    %1979 = vmatpush1.msra.mxu0 %v1920
    %1980 = vmatprep.subr.mxu0 %v1919
    %1981 = vmatpush1.msra.mxu0 %v1918
    %1982 = vmatprep.subr.mxu0 %v1917
    %1983 = vmatpush1.msra.mxu0 %v1916
    %1984 = vmatprep.subr.mxu0 %v1915
    %1985 = vmatpush1.msra.mxu0 %v1914
    %1986 = vmatprep.subr.mxu0 %v1913
    %1987 = vmatpush1.msra.mxu0 %v1912
    %1988 = vmatprep.subr.mxu0 %v1911
    %1989 = vmatpush1.msra.mxu0 %v1910
    %1990 = vmatprep.subr.mxu0 %v1909
    %1991 = vmatpush1.msra.mxu0 %v1908
    %1992 = vmatprep.subr.mxu0 %v1907
    %1993 = vmatpush1.msra.mxu0 %v1906
    %1994 = vmatprep.subr.mxu0 %v1905
    %1995 = vmatpush1.msra.mxu0 %v1904
    %1996 = vmatprep.subr.mxu0 %v1903
    %1997 = vmatpush1.msra.mxu0 %v1902
    %1998 = vmatprep.subr.mxu0 %v1901
    %1999 = vmatpush1.msra.mxu0 %v1900
    %2000 = vmatprep.subr.mxu0 %v1963
    %2001 = vmatpush2.msra.mxu0 %v1962
    %2002 = vmatprep.subr.mxu0 %v1961
    %2003 = vmatpush2.msra.mxu0 %v1960
    %2004 = vmatprep.subr.mxu0 %v1959
    %2005 = vmatpush2.msra.mxu0 %v1958
    %2006 = vmatprep.subr.mxu0 %v1957
    %2007 = vmatpush2.msra.mxu0 %v1956
    %2008 = vmatprep.subr.mxu0 %v1955
    %2009 = vmatpush2.msra.mxu0 %v1954
    %2010 = vmatprep.subr.mxu0 %v1953
    %2011 = vmatpush2.msra.mxu0 %v1952
    %2012 = vmatprep.subr.mxu0 %v1951
    %2013 = vmatpush2.msra.mxu0 %v1950
    %2014 = vmatprep.subr.mxu0 %v1949
    %2015 = vmatpush2.msra.mxu0 %v1948
    %2016 = vmatprep.subr.mxu0 %v1947
    %2017 = vmatpush2.msra.mxu0 %v1946
    %2018 = vmatprep.subr.mxu0 %v1945
    %2019 = vmatpush2.msra.mxu0 %v1944
    %2020 = vmatprep.subr.mxu0 %v1943
    %2021 = vmatpush2.msra.mxu0 %v1942
    %2022 = vmatprep.subr.mxu0 %v1941
    %2023 = vmatpush2.msra.mxu0 %v1940
    %2024 = vmatprep.subr.mxu0 %v1939
    %2025 = vmatpush2.msra.mxu0 %v1938
    %2026 = vmatprep.subr.mxu0 %v1937
    %2027 = vmatpush2.msra.mxu0 %v1936
    %2028 = vmatprep.subr.mxu0 %v1935
    %2029 = vmatpush2.msra.mxu0 %v1934
    %2030 = vmatprep.subr.mxu0 %v1933
    %2031 = vmatpush2.msra.mxu0 %v1932
    %2032 = vmatprep.mubr.f32.mxu0 %v1965
    %2033 = vmatmul.mubr.f32.gmra.mxu0 %v1964
    %v2034 = vpop.f32.mrf.mxu0
    %v2035 = vadd.f32 0.0, %v2034
    %v2036 = vpop.f32.mrf.mxu0
    %v2037 = vadd.f32 0.0, %v2036
    %2038 = vdwg.mxu0
    %v2039 = vadd.f32 %v1898, %v2035
    %v2040 = vadd.f32 %v1899, %v2037
    %v2041 = vld [vmem:[#allocation22 + $0x800] sm:$0xff]
    %v2042 = vld [vmem:[#allocation22 + $0x808] sm:$0xff]
    %v2043 = vld [vmem:[#allocation22 + $0x810] sm:$0xff]
    %v2044 = vld [vmem:[#allocation22 + $0x818] sm:$0xff]
    %v2045 = vld [vmem:[#allocation22 + $0x820] sm:$0xff]
    %v2046 = vld [vmem:[#allocation22 + $0x828] sm:$0xff]
    %v2047 = vld [vmem:[#allocation22 + $0x830] sm:$0xff]
    %v2048 = vld [vmem:[#allocation22 + $0x838] sm:$0xff]
    %v2049 = vld [vmem:[#allocation22 + $0x840] sm:$0xff]
    %v2050 = vld [vmem:[#allocation22 + $0x848] sm:$0xff]
    %v2051 = vld [vmem:[#allocation22 + $0x850] sm:$0xff]
    %v2052 = vld [vmem:[#allocation22 + $0x858] sm:$0xff]
    %v2053 = vld [vmem:[#allocation22 + $0x860] sm:$0xff]
    %v2054 = vld [vmem:[#allocation22 + $0x868] sm:$0xff]
    %v2055 = vld [vmem:[#allocation22 + $0x870] sm:$0xff]
    %v2056 = vld [vmem:[#allocation22 + $0x878] sm:$0xff]
    %v2057 = vld [vmem:[#allocation22 + $0x880] sm:$0xff]
    %v2058 = vld [vmem:[#allocation22 + $0x888] sm:$0xff]
    %v2059 = vld [vmem:[#allocation22 + $0x890] sm:$0xff]
    %v2060 = vld [vmem:[#allocation22 + $0x898] sm:$0xff]
    %v2061 = vld [vmem:[#allocation22 + $0x8a0] sm:$0xff]
    %v2062 = vld [vmem:[#allocation22 + $0x8a8] sm:$0xff]
    %v2063 = vld [vmem:[#allocation22 + $0x8b0] sm:$0xff]
    %v2064 = vld [vmem:[#allocation22 + $0x8b8] sm:$0xff]
    %v2065 = vld [vmem:[#allocation22 + $0x8c0] sm:$0xff]
    %v2066 = vld [vmem:[#allocation22 + $0x8c8] sm:$0xff]
    %v2067 = vld [vmem:[#allocation22 + $0x8d0] sm:$0xff]
    %v2068 = vld [vmem:[#allocation22 + $0x8d8] sm:$0xff]
    %v2069 = vld [vmem:[#allocation22 + $0x8e0] sm:$0xff]
    %v2070 = vld [vmem:[#allocation22 + $0x8e8] sm:$0xff]
    %v2071 = vld [vmem:[#allocation22 + $0x8f0] sm:$0xff]
    %v2072 = vld [vmem:[#allocation22 + $0x8f8] sm:$0xff]
    %v2073 = vld [vmem:[#allocation22 + $0x900] sm:$0xff]
    %v2074 = vld [vmem:[#allocation22 + $0x908] sm:$0xff]
    %v2075 = vld [vmem:[#allocation22 + $0x910] sm:$0xff]
    %v2076 = vld [vmem:[#allocation22 + $0x918] sm:$0xff]
    %v2077 = vld [vmem:[#allocation22 + $0x920] sm:$0xff]
    %v2078 = vld [vmem:[#allocation22 + $0x928] sm:$0xff]
    %v2079 = vld [vmem:[#allocation22 + $0x930] sm:$0xff]
    %v2080 = vld [vmem:[#allocation22 + $0x938] sm:$0xff]
    %v2081 = vld [vmem:[#allocation22 + $0x940] sm:$0xff]
    %v2082 = vld [vmem:[#allocation22 + $0x948] sm:$0xff]
    %v2083 = vld [vmem:[#allocation22 + $0x950] sm:$0xff]
    %v2084 = vld [vmem:[#allocation22 + $0x958] sm:$0xff]
    %v2085 = vld [vmem:[#allocation22 + $0x960] sm:$0xff]
    %v2086 = vld [vmem:[#allocation22 + $0x968] sm:$0xff]
    %v2087 = vld [vmem:[#allocation22 + $0x970] sm:$0xff]
    %v2088 = vld [vmem:[#allocation22 + $0x978] sm:$0xff]
    %v2089 = vld [vmem:[#allocation22 + $0x980] sm:$0xff]
    %v2090 = vld [vmem:[#allocation22 + $0x988] sm:$0xff]
    %v2091 = vld [vmem:[#allocation22 + $0x990] sm:$0xff]
    %v2092 = vld [vmem:[#allocation22 + $0x998] sm:$0xff]
    %v2093 = vld [vmem:[#allocation22 + $0x9a0] sm:$0xff]
    %v2094 = vld [vmem:[#allocation22 + $0x9a8] sm:$0xff]
    %v2095 = vld [vmem:[#allocation22 + $0x9b0] sm:$0xff]
    %v2096 = vld [vmem:[#allocation22 + $0x9b8] sm:$0xff]
    %v2097 = vld [vmem:[#allocation22 + $0x9c0] sm:$0xff]
    %v2098 = vld [vmem:[#allocation22 + $0x9c8] sm:$0xff]
    %v2099 = vld [vmem:[#allocation22 + $0x9d0] sm:$0xff]
    %v2100 = vld [vmem:[#allocation22 + $0x9d8] sm:$0xff]
    %v2101 = vld [vmem:[#allocation22 + $0x9e0] sm:$0xff]
    %v2102 = vld [vmem:[#allocation22 + $0x9e8] sm:$0xff]
    %v2103 = vld [vmem:[#allocation22 + $0x9f0] sm:$0xff]
    %v2104 = vld [vmem:[#allocation22 + $0x9f8] sm:$0xff]
    %2105 = vmatprep.subr.mxu0 %v2072
    %2106 = vmatpush1.msra.mxu0 %v2071
    %2107 = vmatprep.subr.mxu0 %v2070
    %2108 = vmatpush1.msra.mxu0 %v2069
    %2109 = vmatprep.subr.mxu0 %v2068
    %2110 = vmatpush1.msra.mxu0 %v2067
    %2111 = vmatprep.subr.mxu0 %v2066
    %2112 = vmatpush1.msra.mxu0 %v2065
    %2113 = vmatprep.subr.mxu0 %v2064
    %2114 = vmatpush1.msra.mxu0 %v2063
    %2115 = vmatprep.subr.mxu0 %v2062
    %2116 = vmatpush1.msra.mxu0 %v2061
    %2117 = vmatprep.subr.mxu0 %v2060
    %2118 = vmatpush1.msra.mxu0 %v2059
    %2119 = vmatprep.subr.mxu0 %v2058
    %2120 = vmatpush1.msra.mxu0 %v2057
    %2121 = vmatprep.subr.mxu0 %v2056
    %2122 = vmatpush1.msra.mxu0 %v2055
    %2123 = vmatprep.subr.mxu0 %v2054
    %2124 = vmatpush1.msra.mxu0 %v2053
    %2125 = vmatprep.subr.mxu0 %v2052
    %2126 = vmatpush1.msra.mxu0 %v2051
    %2127 = vmatprep.subr.mxu0 %v2050
    %2128 = vmatpush1.msra.mxu0 %v2049
    %2129 = vmatprep.subr.mxu0 %v2048
    %2130 = vmatpush1.msra.mxu0 %v2047
    %2131 = vmatprep.subr.mxu0 %v2046
    %2132 = vmatpush1.msra.mxu0 %v2045
    %2133 = vmatprep.subr.mxu0 %v2044
    %2134 = vmatpush1.msra.mxu0 %v2043
    %2135 = vmatprep.subr.mxu0 %v2042
    %2136 = vmatpush1.msra.mxu0 %v2041
    %2137 = vmatprep.subr.mxu0 %v2104
    %2138 = vmatpush2.msra.mxu0 %v2103
    %2139 = vmatprep.subr.mxu0 %v2102
    %2140 = vmatpush2.msra.mxu0 %v2101
    %2141 = vmatprep.subr.mxu0 %v2100
    %2142 = vmatpush2.msra.mxu0 %v2099
    %2143 = vmatprep.subr.mxu0 %v2098
    %2144 = vmatpush2.msra.mxu0 %v2097
    %2145 = vmatprep.subr.mxu0 %v2096
    %2146 = vmatpush2.msra.mxu0 %v2095
    %2147 = vmatprep.subr.mxu0 %v2094
    %2148 = vmatpush2.msra.mxu0 %v2093
    %2149 = vmatprep.subr.mxu0 %v2092
    %2150 = vmatpush2.msra.mxu0 %v2091
    %2151 = vmatprep.subr.mxu0 %v2090
    %2152 = vmatpush2.msra.mxu0 %v2089
    %2153 = vmatprep.subr.mxu0 %v2088
    %2154 = vmatpush2.msra.mxu0 %v2087
    %2155 = vmatprep.subr.mxu0 %v2086
    %2156 = vmatpush2.msra.mxu0 %v2085
    %2157 = vmatprep.subr.mxu0 %v2084
    %2158 = vmatpush2.msra.mxu0 %v2083
    %2159 = vmatprep.subr.mxu0 %v2082
    %2160 = vmatpush2.msra.mxu0 %v2081
    %2161 = vmatprep.subr.mxu0 %v2080
    %2162 = vmatpush2.msra.mxu0 %v2079
    %2163 = vmatprep.subr.mxu0 %v2078
    %2164 = vmatpush2.msra.mxu0 %v2077
    %2165 = vmatprep.subr.mxu0 %v2076
    %2166 = vmatpush2.msra.mxu0 %v2075
    %2167 = vmatprep.subr.mxu0 %v2074
    %2168 = vmatpush2.msra.mxu0 %v2073
    %2169 = vmatprep.mubr.f32.mxu0 %v1480
    %2170 = vmatmul.mubr.f32.gmra.mxu0 %v1479
    %v2171 = vpop.f32.mrf.mxu0
    %v2172 = vadd.f32 0.0, %v2171
    %v2173 = vpop.f32.mrf.mxu0
    %v2174 = vadd.f32 0.0, %v2173
    %2175 = vdwg.mxu0
    %v2176 = vadd.f32 %v2039, %v2172
    %v2177 = vadd.f32 %v2040, %v2174
    %v2178 = vld [vmem:[#allocation22 + $0xa00] sm:$0xff]
    %v2179 = vld [vmem:[#allocation22 + $0xa08] sm:$0xff]
    %v2180 = vld [vmem:[#allocation22 + $0xa10] sm:$0xff]
    %v2181 = vld [vmem:[#allocation22 + $0xa18] sm:$0xff]
    %v2182 = vld [vmem:[#allocation22 + $0xa20] sm:$0xff]
    %v2183 = vld [vmem:[#allocation22 + $0xa28] sm:$0xff]
    %v2184 = vld [vmem:[#allocation22 + $0xa30] sm:$0xff]
    %v2185 = vld [vmem:[#allocation22 + $0xa38] sm:$0xff]
    %v2186 = vld [vmem:[#allocation22 + $0xa40] sm:$0xff]
    %v2187 = vld [vmem:[#allocation22 + $0xa48] sm:$0xff]
    %v2188 = vld [vmem:[#allocation22 + $0xa50] sm:$0xff]
    %v2189 = vld [vmem:[#allocation22 + $0xa58] sm:$0xff]
    %v2190 = vld [vmem:[#allocation22 + $0xa60] sm:$0xff]
    %v2191 = vld [vmem:[#allocation22 + $0xa68] sm:$0xff]
    %v2192 = vld [vmem:[#allocation22 + $0xa70] sm:$0xff]
    %v2193 = vld [vmem:[#allocation22 + $0xa78] sm:$0xff]
    %v2194 = vld [vmem:[#allocation22 + $0xa80] sm:$0xff]
    %v2195 = vld [vmem:[#allocation22 + $0xa88] sm:$0xff]
    %v2196 = vld [vmem:[#allocation22 + $0xa90] sm:$0xff]
    %v2197 = vld [vmem:[#allocation22 + $0xa98] sm:$0xff]
    %v2198 = vld [vmem:[#allocation22 + $0xaa0] sm:$0xff]
    %v2199 = vld [vmem:[#allocation22 + $0xaa8] sm:$0xff]
    %v2200 = vld [vmem:[#allocation22 + $0xab0] sm:$0xff]
    %v2201 = vld [vmem:[#allocation22 + $0xab8] sm:$0xff]
    %v2202 = vld [vmem:[#allocation22 + $0xac0] sm:$0xff]
    %v2203 = vld [vmem:[#allocation22 + $0xac8] sm:$0xff]
    %v2204 = vld [vmem:[#allocation22 + $0xad0] sm:$0xff]
    %v2205 = vld [vmem:[#allocation22 + $0xad8] sm:$0xff]
    %v2206 = vld [vmem:[#allocation22 + $0xae0] sm:$0xff]
    %v2207 = vld [vmem:[#allocation22 + $0xae8] sm:$0xff]
    %v2208 = vld [vmem:[#allocation22 + $0xaf0] sm:$0xff]
    %v2209 = vld [vmem:[#allocation22 + $0xaf8] sm:$0xff]
    %v2210 = vld [vmem:[#allocation22 + $0xb00] sm:$0xff]
    %v2211 = vld [vmem:[#allocation22 + $0xb08] sm:$0xff]
    %v2212 = vld [vmem:[#allocation22 + $0xb10] sm:$0xff]
    %v2213 = vld [vmem:[#allocation22 + $0xb18] sm:$0xff]
    %v2214 = vld [vmem:[#allocation22 + $0xb20] sm:$0xff]
    %v2215 = vld [vmem:[#allocation22 + $0xb28] sm:$0xff]
    %v2216 = vld [vmem:[#allocation22 + $0xb30] sm:$0xff]
    %v2217 = vld [vmem:[#allocation22 + $0xb38] sm:$0xff]
    %v2218 = vld [vmem:[#allocation22 + $0xb40] sm:$0xff]
    %v2219 = vld [vmem:[#allocation22 + $0xb48] sm:$0xff]
    %v2220 = vld [vmem:[#allocation22 + $0xb50] sm:$0xff]
    %v2221 = vld [vmem:[#allocation22 + $0xb58] sm:$0xff]
    %v2222 = vld [vmem:[#allocation22 + $0xb60] sm:$0xff]
    %v2223 = vld [vmem:[#allocation22 + $0xb68] sm:$0xff]
    %v2224 = vld [vmem:[#allocation22 + $0xb70] sm:$0xff]
    %v2225 = vld [vmem:[#allocation22 + $0xb78] sm:$0xff]
    %v2226 = vld [vmem:[#allocation22 + $0xb80] sm:$0xff]
    %v2227 = vld [vmem:[#allocation22 + $0xb88] sm:$0xff]
    %v2228 = vld [vmem:[#allocation22 + $0xb90] sm:$0xff]
    %v2229 = vld [vmem:[#allocation22 + $0xb98] sm:$0xff]
    %v2230 = vld [vmem:[#allocation22 + $0xba0] sm:$0xff]
    %v2231 = vld [vmem:[#allocation22 + $0xba8] sm:$0xff]
    %v2232 = vld [vmem:[#allocation22 + $0xbb0] sm:$0xff]
    %v2233 = vld [vmem:[#allocation22 + $0xbb8] sm:$0xff]
    %v2234 = vld [vmem:[#allocation22 + $0xbc0] sm:$0xff]
    %v2235 = vld [vmem:[#allocation22 + $0xbc8] sm:$0xff]
    %v2236 = vld [vmem:[#allocation22 + $0xbd0] sm:$0xff]
    %v2237 = vld [vmem:[#allocation22 + $0xbd8] sm:$0xff]
    %v2238 = vld [vmem:[#allocation22 + $0xbe0] sm:$0xff]
    %v2239 = vld [vmem:[#allocation22 + $0xbe8] sm:$0xff]
    %v2240 = vld [vmem:[#allocation22 + $0xbf0] sm:$0xff]
    %v2241 = vld [vmem:[#allocation22 + $0xbf8] sm:$0xff]
    %v2244 = vrot.slane %v1479, 2
    %v2245 = vrot.slane %v1480, 2
    %2248 = vmatprep.subr.mxu0 %v2209
    %2249 = vmatpush1.msra.mxu0 %v2208
    %2250 = vmatprep.subr.mxu0 %v2207
    %2251 = vmatpush1.msra.mxu0 %v2206
    %2252 = vmatprep.subr.mxu0 %v2205
    %2253 = vmatpush1.msra.mxu0 %v2204
    %2254 = vmatprep.subr.mxu0 %v2203
    %2255 = vmatpush1.msra.mxu0 %v2202
    %2256 = vmatprep.subr.mxu0 %v2201
    %2257 = vmatpush1.msra.mxu0 %v2200
    %2258 = vmatprep.subr.mxu0 %v2199
    %2259 = vmatpush1.msra.mxu0 %v2198
    %2260 = vmatprep.subr.mxu0 %v2197
    %2261 = vmatpush1.msra.mxu0 %v2196
    %2262 = vmatprep.subr.mxu0 %v2195
    %2263 = vmatpush1.msra.mxu0 %v2194
    %2264 = vmatprep.subr.mxu0 %v2193
    %2265 = vmatpush1.msra.mxu0 %v2192
    %2266 = vmatprep.subr.mxu0 %v2191
    %2267 = vmatpush1.msra.mxu0 %v2190
    %2268 = vmatprep.subr.mxu0 %v2189
    %2269 = vmatpush1.msra.mxu0 %v2188
    %2270 = vmatprep.subr.mxu0 %v2187
    %2271 = vmatpush1.msra.mxu0 %v2186
    %2272 = vmatprep.subr.mxu0 %v2185
    %2273 = vmatpush1.msra.mxu0 %v2184
    %2274 = vmatprep.subr.mxu0 %v2183
    %2275 = vmatpush1.msra.mxu0 %v2182
    %2276 = vmatprep.subr.mxu0 %v2181
    %2277 = vmatpush1.msra.mxu0 %v2180
    %2278 = vmatprep.subr.mxu0 %v2179
    %2279 = vmatpush1.msra.mxu0 %v2178
    %2280 = vmatprep.subr.mxu0 %v2241
    %2281 = vmatpush2.msra.mxu0 %v2240
    %2282 = vmatprep.subr.mxu0 %v2239
    %2283 = vmatpush2.msra.mxu0 %v2238
    %2284 = vmatprep.subr.mxu0 %v2237
    %2285 = vmatpush2.msra.mxu0 %v2236
    %2286 = vmatprep.subr.mxu0 %v2235
    %2287 = vmatpush2.msra.mxu0 %v2234
    %2288 = vmatprep.subr.mxu0 %v2233
    %2289 = vmatpush2.msra.mxu0 %v2232
    %2290 = vmatprep.subr.mxu0 %v2231
    %2291 = vmatpush2.msra.mxu0 %v2230
    %2292 = vmatprep.subr.mxu0 %v2229
    %2293 = vmatpush2.msra.mxu0 %v2228
    %2294 = vmatprep.subr.mxu0 %v2227
    %2295 = vmatpush2.msra.mxu0 %v2226
    %2296 = vmatprep.subr.mxu0 %v2225
    %2297 = vmatpush2.msra.mxu0 %v2224
    %2298 = vmatprep.subr.mxu0 %v2223
    %2299 = vmatpush2.msra.mxu0 %v2222
    %2300 = vmatprep.subr.mxu0 %v2221
    %2301 = vmatpush2.msra.mxu0 %v2220
    %2302 = vmatprep.subr.mxu0 %v2219
    %2303 = vmatpush2.msra.mxu0 %v2218
    %2304 = vmatprep.subr.mxu0 %v2217
    %2305 = vmatpush2.msra.mxu0 %v2216
    %2306 = vmatprep.subr.mxu0 %v2215
    %2307 = vmatpush2.msra.mxu0 %v2214
    %2308 = vmatprep.subr.mxu0 %v2213
    %2309 = vmatpush2.msra.mxu0 %v2212
    %2310 = vmatprep.subr.mxu0 %v2211
    %2311 = vmatpush2.msra.mxu0 %v2210
    %2312 = vmatprep.mubr.f32.mxu0 %v2245
    %2313 = vmatmul.mubr.f32.gmra.mxu0 %v2244
    %v2314 = vpop.f32.mrf.mxu0
    %v2315 = vadd.f32 0.0, %v2314
    %v2316 = vpop.f32.mrf.mxu0
    %v2317 = vadd.f32 0.0, %v2316
    %2318 = vdwg.mxu0
    %v2319 = vadd.f32 %v2176, %v2315
    %v2320 = vadd.f32 %v2177, %v2317
    %v2321 = vld [vmem:[#allocation22 + $0xc00] sm:$0xff]
    %v2322 = vld [vmem:[#allocation22 + $0xc08] sm:$0xff]
    %v2323 = vld [vmem:[#allocation22 + $0xc10] sm:$0xff]
    %v2324 = vld [vmem:[#allocation22 + $0xc18] sm:$0xff]
    %v2325 = vld [vmem:[#allocation22 + $0xc20] sm:$0xff]
    %v2326 = vld [vmem:[#allocation22 + $0xc28] sm:$0xff]
    %v2327 = vld [vmem:[#allocation22 + $0xc30] sm:$0xff]
    %v2328 = vld [vmem:[#allocation22 + $0xc38] sm:$0xff]
    %v2329 = vld [vmem:[#allocation22 + $0xc40] sm:$0xff]
    %v2330 = vld [vmem:[#allocation22 + $0xc48] sm:$0xff]
    %v2331 = vld [vmem:[#allocation22 + $0xc50] sm:$0xff]
    %v2332 = vld [vmem:[#allocation22 + $0xc58] sm:$0xff]
    %v2333 = vld [vmem:[#allocation22 + $0xc60] sm:$0xff]
    %v2334 = vld [vmem:[#allocation22 + $0xc68] sm:$0xff]
    %v2335 = vld [vmem:[#allocation22 + $0xc70] sm:$0xff]
    %v2336 = vld [vmem:[#allocation22 + $0xc78] sm:$0xff]
    %v2337 = vld [vmem:[#allocation22 + $0xc80] sm:$0xff]
    %v2338 = vld [vmem:[#allocation22 + $0xc88] sm:$0xff]
    %v2339 = vld [vmem:[#allocation22 + $0xc90] sm:$0xff]
    %v2340 = vld [vmem:[#allocation22 + $0xc98] sm:$0xff]
    %v2341 = vld [vmem:[#allocation22 + $0xca0] sm:$0xff]
    %v2342 = vld [vmem:[#allocation22 + $0xca8] sm:$0xff]
    %v2343 = vld [vmem:[#allocation22 + $0xcb0] sm:$0xff]
    %v2344 = vld [vmem:[#allocation22 + $0xcb8] sm:$0xff]
    %v2345 = vld [vmem:[#allocation22 + $0xcc0] sm:$0xff]
    %v2346 = vld [vmem:[#allocation22 + $0xcc8] sm:$0xff]
    %v2347 = vld [vmem:[#allocation22 + $0xcd0] sm:$0xff]
    %v2348 = vld [vmem:[#allocation22 + $0xcd8] sm:$0xff]
    %v2349 = vld [vmem:[#allocation22 + $0xce0] sm:$0xff]
    %v2350 = vld [vmem:[#allocation22 + $0xce8] sm:$0xff]
    %v2351 = vld [vmem:[#allocation22 + $0xcf0] sm:$0xff]
    %v2352 = vld [vmem:[#allocation22 + $0xcf8] sm:$0xff]
    %v2353 = vld [vmem:[#allocation22 + $0xd00] sm:$0xff]
    %v2354 = vld [vmem:[#allocation22 + $0xd08] sm:$0xff]
    %v2355 = vld [vmem:[#allocation22 + $0xd10] sm:$0xff]
    %v2356 = vld [vmem:[#allocation22 + $0xd18] sm:$0xff]
    %v2357 = vld [vmem:[#allocation22 + $0xd20] sm:$0xff]
    %v2358 = vld [vmem:[#allocation22 + $0xd28] sm:$0xff]
    %v2359 = vld [vmem:[#allocation22 + $0xd30] sm:$0xff]
    %v2360 = vld [vmem:[#allocation22 + $0xd38] sm:$0xff]
    %v2361 = vld [vmem:[#allocation22 + $0xd40] sm:$0xff]
    %v2362 = vld [vmem:[#allocation22 + $0xd48] sm:$0xff]
    %v2363 = vld [vmem:[#allocation22 + $0xd50] sm:$0xff]
    %v2364 = vld [vmem:[#allocation22 + $0xd58] sm:$0xff]
    %v2365 = vld [vmem:[#allocation22 + $0xd60] sm:$0xff]
    %v2366 = vld [vmem:[#allocation22 + $0xd68] sm:$0xff]
    %v2367 = vld [vmem:[#allocation22 + $0xd70] sm:$0xff]
    %v2368 = vld [vmem:[#allocation22 + $0xd78] sm:$0xff]
    %v2369 = vld [vmem:[#allocation22 + $0xd80] sm:$0xff]
    %v2370 = vld [vmem:[#allocation22 + $0xd88] sm:$0xff]
    %v2371 = vld [vmem:[#allocation22 + $0xd90] sm:$0xff]
    %v2372 = vld [vmem:[#allocation22 + $0xd98] sm:$0xff]
    %v2373 = vld [vmem:[#allocation22 + $0xda0] sm:$0xff]
    %v2374 = vld [vmem:[#allocation22 + $0xda8] sm:$0xff]
    %v2375 = vld [vmem:[#allocation22 + $0xdb0] sm:$0xff]
    %v2376 = vld [vmem:[#allocation22 + $0xdb8] sm:$0xff]
    %v2377 = vld [vmem:[#allocation22 + $0xdc0] sm:$0xff]
    %v2378 = vld [vmem:[#allocation22 + $0xdc8] sm:$0xff]
    %v2379 = vld [vmem:[#allocation22 + $0xdd0] sm:$0xff]
    %v2380 = vld [vmem:[#allocation22 + $0xdd8] sm:$0xff]
    %v2381 = vld [vmem:[#allocation22 + $0xde0] sm:$0xff]
    %v2382 = vld [vmem:[#allocation22 + $0xde8] sm:$0xff]
    %v2383 = vld [vmem:[#allocation22 + $0xdf0] sm:$0xff]
    %v2384 = vld [vmem:[#allocation22 + $0xdf8] sm:$0xff]
    %v2385 = vrot.slane %v1479, 4
    %v2386 = vrot.slane %v1480, 4
    %2389 = vmatprep.subr.mxu0 %v2352
    %2390 = vmatpush1.msra.mxu0 %v2351
    %2391 = vmatprep.subr.mxu0 %v2350
    %2392 = vmatpush1.msra.mxu0 %v2349
    %2393 = vmatprep.subr.mxu0 %v2348
    %2394 = vmatpush1.msra.mxu0 %v2347
    %2395 = vmatprep.subr.mxu0 %v2346
    %2396 = vmatpush1.msra.mxu0 %v2345
    %2397 = vmatprep.subr.mxu0 %v2344
    %2398 = vmatpush1.msra.mxu0 %v2343
    %2399 = vmatprep.subr.mxu0 %v2342
    %2400 = vmatpush1.msra.mxu0 %v2341
    %2401 = vmatprep.subr.mxu0 %v2340
    %2402 = vmatpush1.msra.mxu0 %v2339
    %2403 = vmatprep.subr.mxu0 %v2338
    %2404 = vmatpush1.msra.mxu0 %v2337
    %2405 = vmatprep.subr.mxu0 %v2336
    %2406 = vmatpush1.msra.mxu0 %v2335
    %2407 = vmatprep.subr.mxu0 %v2334
    %2408 = vmatpush1.msra.mxu0 %v2333
    %2409 = vmatprep.subr.mxu0 %v2332
    %2410 = vmatpush1.msra.mxu0 %v2331
    %2411 = vmatprep.subr.mxu0 %v2330
    %2412 = vmatpush1.msra.mxu0 %v2329
    %2413 = vmatprep.subr.mxu0 %v2328
    %2414 = vmatpush1.msra.mxu0 %v2327
    %2415 = vmatprep.subr.mxu0 %v2326
    %2416 = vmatpush1.msra.mxu0 %v2325
    %2417 = vmatprep.subr.mxu0 %v2324
    %2418 = vmatpush1.msra.mxu0 %v2323
    %2419 = vmatprep.subr.mxu0 %v2322
    %2420 = vmatpush1.msra.mxu0 %v2321
    %2421 = vmatprep.subr.mxu0 %v2384
    %2422 = vmatpush2.msra.mxu0 %v2383
    %2423 = vmatprep.subr.mxu0 %v2382
    %2424 = vmatpush2.msra.mxu0 %v2381
    %2425 = vmatprep.subr.mxu0 %v2380
    %2426 = vmatpush2.msra.mxu0 %v2379
    %2427 = vmatprep.subr.mxu0 %v2378
    %2428 = vmatpush2.msra.mxu0 %v2377
    %2429 = vmatprep.subr.mxu0 %v2376
    %2430 = vmatpush2.msra.mxu0 %v2375
    %2431 = vmatprep.subr.mxu0 %v2374
    %2432 = vmatpush2.msra.mxu0 %v2373
    %2433 = vmatprep.subr.mxu0 %v2372
    %2434 = vmatpush2.msra.mxu0 %v2371
    %2435 = vmatprep.subr.mxu0 %v2370
    %2436 = vmatpush2.msra.mxu0 %v2369
    %2437 = vmatprep.subr.mxu0 %v2368
    %2438 = vmatpush2.msra.mxu0 %v2367
    %2439 = vmatprep.subr.mxu0 %v2366
    %2440 = vmatpush2.msra.mxu0 %v2365
    %2441 = vmatprep.subr.mxu0 %v2364
    %2442 = vmatpush2.msra.mxu0 %v2363
    %2443 = vmatprep.subr.mxu0 %v2362
    %2444 = vmatpush2.msra.mxu0 %v2361
    %2445 = vmatprep.subr.mxu0 %v2360
    %2446 = vmatpush2.msra.mxu0 %v2359
    %2447 = vmatprep.subr.mxu0 %v2358
    %2448 = vmatpush2.msra.mxu0 %v2357
    %2449 = vmatprep.subr.mxu0 %v2356
    %2450 = vmatpush2.msra.mxu0 %v2355
    %2451 = vmatprep.subr.mxu0 %v2354
    %2452 = vmatpush2.msra.mxu0 %v2353
    %2453 = vmatprep.mubr.f32.mxu0 %v2386
    %2454 = vmatmul.mubr.f32.gmra.mxu0 %v2385
    %v2455 = vpop.f32.mrf.mxu0
    %v2456 = vadd.f32 0.0, %v2455
    %v2457 = vpop.f32.mrf.mxu0
    %v2458 = vadd.f32 0.0, %v2457
    %2459 = vdwg.mxu0
    %v2460 = vadd.f32 %v2319, %v2456
    %v2461 = vadd.f32 %v2320, %v2458
    %v2462 = vld [vmem:[#allocation22 + $0xe00] sm:$0xff]
    %v2463 = vld [vmem:[#allocation22 + $0xe08] sm:$0xff]
    %v2464 = vld [vmem:[#allocation22 + $0xe10] sm:$0xff]
    %v2465 = vld [vmem:[#allocation22 + $0xe18] sm:$0xff]
    %v2466 = vld [vmem:[#allocation22 + $0xe20] sm:$0xff]
    %v2467 = vld [vmem:[#allocation22 + $0xe28] sm:$0xff]
    %v2468 = vld [vmem:[#allocation22 + $0xe30] sm:$0xff]
    %v2469 = vld [vmem:[#allocation22 + $0xe38] sm:$0xff]
    %v2470 = vld [vmem:[#allocation22 + $0xe40] sm:$0xff]
    %v2471 = vld [vmem:[#allocation22 + $0xe48] sm:$0xff]
    %v2472 = vld [vmem:[#allocation22 + $0xe50] sm:$0xff]
    %v2473 = vld [vmem:[#allocation22 + $0xe58] sm:$0xff]
    %v2474 = vld [vmem:[#allocation22 + $0xe60] sm:$0xff]
    %v2475 = vld [vmem:[#allocation22 + $0xe68] sm:$0xff]
    %v2476 = vld [vmem:[#allocation22 + $0xe70] sm:$0xff]
    %v2477 = vld [vmem:[#allocation22 + $0xe78] sm:$0xff]
    %v2478 = vld [vmem:[#allocation22 + $0xe80] sm:$0xff]
    %v2479 = vld [vmem:[#allocation22 + $0xe88] sm:$0xff]
    %v2480 = vld [vmem:[#allocation22 + $0xe90] sm:$0xff]
    %v2481 = vld [vmem:[#allocation22 + $0xe98] sm:$0xff]
    %v2482 = vld [vmem:[#allocation22 + $0xea0] sm:$0xff]
    %v2483 = vld [vmem:[#allocation22 + $0xea8] sm:$0xff]
    %v2484 = vld [vmem:[#allocation22 + $0xeb0] sm:$0xff]
    %v2485 = vld [vmem:[#allocation22 + $0xeb8] sm:$0xff]
    %v2486 = vld [vmem:[#allocation22 + $0xec0] sm:$0xff]
    %v2487 = vld [vmem:[#allocation22 + $0xec8] sm:$0xff]
    %v2488 = vld [vmem:[#allocation22 + $0xed0] sm:$0xff]
    %v2489 = vld [vmem:[#allocation22 + $0xed8] sm:$0xff]
    %v2490 = vld [vmem:[#allocation22 + $0xee0] sm:$0xff]
    %v2491 = vld [vmem:[#allocation22 + $0xee8] sm:$0xff]
    %v2492 = vld [vmem:[#allocation22 + $0xef0] sm:$0xff]
    %v2493 = vld [vmem:[#allocation22 + $0xef8] sm:$0xff]
    %v2494 = vld [vmem:[#allocation22 + $0xf00] sm:$0xff]
    %v2495 = vld [vmem:[#allocation22 + $0xf08] sm:$0xff]
    %v2496 = vld [vmem:[#allocation22 + $0xf10] sm:$0xff]
    %v2497 = vld [vmem:[#allocation22 + $0xf18] sm:$0xff]
    %v2498 = vld [vmem:[#allocation22 + $0xf20] sm:$0xff]
    %v2499 = vld [vmem:[#allocation22 + $0xf28] sm:$0xff]
    %v2500 = vld [vmem:[#allocation22 + $0xf30] sm:$0xff]
    %v2501 = vld [vmem:[#allocation22 + $0xf38] sm:$0xff]
    %v2502 = vld [vmem:[#allocation22 + $0xf40] sm:$0xff]
    %v2503 = vld [vmem:[#allocation22 + $0xf48] sm:$0xff]
    %v2504 = vld [vmem:[#allocation22 + $0xf50] sm:$0xff]
    %v2505 = vld [vmem:[#allocation22 + $0xf58] sm:$0xff]
    %v2506 = vld [vmem:[#allocation22 + $0xf60] sm:$0xff]
    %v2507 = vld [vmem:[#allocation22 + $0xf68] sm:$0xff]
    %v2508 = vld [vmem:[#allocation22 + $0xf70] sm:$0xff]
    %v2509 = vld [vmem:[#allocation22 + $0xf78] sm:$0xff]
    %v2510 = vld [vmem:[#allocation22 + $0xf80] sm:$0xff]
    %v2511 = vld [vmem:[#allocation22 + $0xf88] sm:$0xff]
    %v2512 = vld [vmem:[#allocation22 + $0xf90] sm:$0xff]
    %v2513 = vld [vmem:[#allocation22 + $0xf98] sm:$0xff]
    %v2514 = vld [vmem:[#allocation22 + $0xfa0] sm:$0xff]
    %v2515 = vld [vmem:[#allocation22 + $0xfa8] sm:$0xff]
    %v2516 = vld [vmem:[#allocation22 + $0xfb0] sm:$0xff]
    %v2517 = vld [vmem:[#allocation22 + $0xfb8] sm:$0xff]
    %v2518 = vld [vmem:[#allocation22 + $0xfc0] sm:$0xff]
    %v2519 = vld [vmem:[#allocation22 + $0xfc8] sm:$0xff]
    %v2520 = vld [vmem:[#allocation22 + $0xfd0] sm:$0xff]
    %v2521 = vld [vmem:[#allocation22 + $0xfd8] sm:$0xff]
    %v2522 = vld [vmem:[#allocation22 + $0xfe0] sm:$0xff]
    %v2523 = vld [vmem:[#allocation22 + $0xfe8] sm:$0xff]
    %v2524 = vld [vmem:[#allocation22 + $0xff0] sm:$0xff]
    %v2525 = vld [vmem:[#allocation22 + $0xff8] sm:$0xff]
    %v2526 = vrot.slane %v1479, 6
    %v2527 = vrot.slane %v1480, 6
    %2530 = vmatprep.subr.mxu0 %v2493
    %2531 = vmatpush1.msra.mxu0 %v2492
    %2532 = vmatprep.subr.mxu0 %v2491
    %2533 = vmatpush1.msra.mxu0 %v2490
    %2534 = vmatprep.subr.mxu0 %v2489
    %2535 = vmatpush1.msra.mxu0 %v2488
    %2536 = vmatprep.subr.mxu0 %v2487
    %2537 = vmatpush1.msra.mxu0 %v2486
    %2538 = vmatprep.subr.mxu0 %v2485
    %2539 = vmatpush1.msra.mxu0 %v2484
    %2540 = vmatprep.subr.mxu0 %v2483
    %2541 = vmatpush1.msra.mxu0 %v2482
    %2542 = vmatprep.subr.mxu0 %v2481
    %2543 = vmatpush1.msra.mxu0 %v2480
    %2544 = vmatprep.subr.mxu0 %v2479
    %2545 = vmatpush1.msra.mxu0 %v2478
    %2546 = vmatprep.subr.mxu0 %v2477
    %2547 = vmatpush1.msra.mxu0 %v2476
    %2548 = vmatprep.subr.mxu0 %v2475
    %2549 = vmatpush1.msra.mxu0 %v2474
    %2550 = vmatprep.subr.mxu0 %v2473
    %2551 = vmatpush1.msra.mxu0 %v2472
    %2552 = vmatprep.subr.mxu0 %v2471
    %2553 = vmatpush1.msra.mxu0 %v2470
    %2554 = vmatprep.subr.mxu0 %v2469
    %2555 = vmatpush1.msra.mxu0 %v2468
    %2556 = vmatprep.subr.mxu0 %v2467
    %2557 = vmatpush1.msra.mxu0 %v2466
    %2558 = vmatprep.subr.mxu0 %v2465
    %2559 = vmatpush1.msra.mxu0 %v2464
    %2560 = vmatprep.subr.mxu0 %v2463
    %2561 = vmatpush1.msra.mxu0 %v2462
    %2562 = vmatprep.subr.mxu0 %v2525
    %2563 = vmatpush2.msra.mxu0 %v2524
    %2564 = vmatprep.subr.mxu0 %v2523
    %2565 = vmatpush2.msra.mxu0 %v2522
    %2566 = vmatprep.subr.mxu0 %v2521
    %2567 = vmatpush2.msra.mxu0 %v2520
    %2568 = vmatprep.subr.mxu0 %v2519
    %2569 = vmatpush2.msra.mxu0 %v2518
    %2570 = vmatprep.subr.mxu0 %v2517
    %2571 = vmatpush2.msra.mxu0 %v2516
    %2572 = vmatprep.subr.mxu0 %v2515
    %2573 = vmatpush2.msra.mxu0 %v2514
    %2574 = vmatprep.subr.mxu0 %v2513
    %2575 = vmatpush2.msra.mxu0 %v2512
    %2576 = vmatprep.subr.mxu0 %v2511
    %2577 = vmatpush2.msra.mxu0 %v2510
    %2578 = vmatprep.subr.mxu0 %v2509
    %2579 = vmatpush2.msra.mxu0 %v2508
    %2580 = vmatprep.subr.mxu0 %v2507
    %2581 = vmatpush2.msra.mxu0 %v2506
    %2582 = vmatprep.subr.mxu0 %v2505
    %2583 = vmatpush2.msra.mxu0 %v2504
    %2584 = vmatprep.subr.mxu0 %v2503
    %2585 = vmatpush2.msra.mxu0 %v2502
    %2586 = vmatprep.subr.mxu0 %v2501
    %2587 = vmatpush2.msra.mxu0 %v2500
    %2588 = vmatprep.subr.mxu0 %v2499
    %2589 = vmatpush2.msra.mxu0 %v2498
    %2590 = vmatprep.subr.mxu0 %v2497
    %2591 = vmatpush2.msra.mxu0 %v2496
    %2592 = vmatprep.subr.mxu0 %v2495
    %2593 = vmatpush2.msra.mxu0 %v2494
    %2594 = vmatprep.mubr.f32.mxu0 %v2527
    %2595 = vmatmul.mubr.f32.gmra.mxu0 %v2526
    %v2596 = vpop.f32.mrf.mxu0
    %v2597 = vadd.f32 0.0, %v2596
    %v2598 = vpop.f32.mrf.mxu0
    %v2599 = vadd.f32 0.0, %v2598
    %2600 = vdwg.mxu0
    %v2601 = vadd.f32 %v2460, %v2597
    %v2602 = vadd.f32 %v2461, %v2599
    %v2603 = vld [vmem:[#allocation22 + $0x1000] sm:$0xff]
    %v2604 = vld [vmem:[#allocation22 + $0x1008] sm:$0xff]
    %v2605 = vld [vmem:[#allocation22 + $0x1010] sm:$0xff]
    %v2606 = vld [vmem:[#allocation22 + $0x1018] sm:$0xff]
    %v2607 = vld [vmem:[#allocation22 + $0x1020] sm:$0xff]
    %v2608 = vld [vmem:[#allocation22 + $0x1028] sm:$0xff]
    %v2609 = vld [vmem:[#allocation22 + $0x1030] sm:$0xff]
    %v2610 = vld [vmem:[#allocation22 + $0x1038] sm:$0xff]
    %v2611 = vld [vmem:[#allocation22 + $0x1040] sm:$0xff]
    %v2612 = vld [vmem:[#allocation22 + $0x1048] sm:$0xff]
    %v2613 = vld [vmem:[#allocation22 + $0x1050] sm:$0xff]
    %v2614 = vld [vmem:[#allocation22 + $0x1058] sm:$0xff]
    %v2615 = vld [vmem:[#allocation22 + $0x1060] sm:$0xff]
    %v2616 = vld [vmem:[#allocation22 + $0x1068] sm:$0xff]
    %v2617 = vld [vmem:[#allocation22 + $0x1070] sm:$0xff]
    %v2618 = vld [vmem:[#allocation22 + $0x1078] sm:$0xff]
    %v2619 = vld [vmem:[#allocation22 + $0x1080] sm:$0xff]
    %v2620 = vld [vmem:[#allocation22 + $0x1088] sm:$0xff]
    %v2621 = vld [vmem:[#allocation22 + $0x1090] sm:$0xff]
    %v2622 = vld [vmem:[#allocation22 + $0x1098] sm:$0xff]
    %v2623 = vld [vmem:[#allocation22 + $0x10a0] sm:$0xff]
    %v2624 = vld [vmem:[#allocation22 + $0x10a8] sm:$0xff]
    %v2625 = vld [vmem:[#allocation22 + $0x10b0] sm:$0xff]
    %v2626 = vld [vmem:[#allocation22 + $0x10b8] sm:$0xff]
    %v2627 = vld [vmem:[#allocation22 + $0x10c0] sm:$0xff]
    %v2628 = vld [vmem:[#allocation22 + $0x10c8] sm:$0xff]
    %v2629 = vld [vmem:[#allocation22 + $0x10d0] sm:$0xff]
    %v2630 = vld [vmem:[#allocation22 + $0x10d8] sm:$0xff]
    %v2631 = vld [vmem:[#allocation22 + $0x10e0] sm:$0xff]
    %v2632 = vld [vmem:[#allocation22 + $0x10e8] sm:$0xff]
    %v2633 = vld [vmem:[#allocation22 + $0x10f0] sm:$0xff]
    %v2634 = vld [vmem:[#allocation22 + $0x10f8] sm:$0xff]
    %v2635 = vld [vmem:[#allocation22 + $0x1100] sm:$0xff]
    %v2636 = vld [vmem:[#allocation22 + $0x1108] sm:$0xff]
    %v2637 = vld [vmem:[#allocation22 + $0x1110] sm:$0xff]
    %v2638 = vld [vmem:[#allocation22 + $0x1118] sm:$0xff]
    %v2639 = vld [vmem:[#allocation22 + $0x1120] sm:$0xff]
    %v2640 = vld [vmem:[#allocation22 + $0x1128] sm:$0xff]
    %v2641 = vld [vmem:[#allocation22 + $0x1130] sm:$0xff]
    %v2642 = vld [vmem:[#allocation22 + $0x1138] sm:$0xff]
    %v2643 = vld [vmem:[#allocation22 + $0x1140] sm:$0xff]
    %v2644 = vld [vmem:[#allocation22 + $0x1148] sm:$0xff]
    %v2645 = vld [vmem:[#allocation22 + $0x1150] sm:$0xff]
    %v2646 = vld [vmem:[#allocation22 + $0x1158] sm:$0xff]
    %v2647 = vld [vmem:[#allocation22 + $0x1160] sm:$0xff]
    %v2648 = vld [vmem:[#allocation22 + $0x1168] sm:$0xff]
    %v2649 = vld [vmem:[#allocation22 + $0x1170] sm:$0xff]
    %v2650 = vld [vmem:[#allocation22 + $0x1178] sm:$0xff]
    %v2651 = vld [vmem:[#allocation22 + $0x1180] sm:$0xff]
    %v2652 = vld [vmem:[#allocation22 + $0x1188] sm:$0xff]
    %v2653 = vld [vmem:[#allocation22 + $0x1190] sm:$0xff]
    %v2654 = vld [vmem:[#allocation22 + $0x1198] sm:$0xff]
    %v2655 = vld [vmem:[#allocation22 + $0x11a0] sm:$0xff]
    %v2656 = vld [vmem:[#allocation22 + $0x11a8] sm:$0xff]
    %v2657 = vld [vmem:[#allocation22 + $0x11b0] sm:$0xff]
    %v2658 = vld [vmem:[#allocation22 + $0x11b8] sm:$0xff]
    %v2659 = vld [vmem:[#allocation22 + $0x11c0] sm:$0xff]
    %v2660 = vld [vmem:[#allocation22 + $0x11c8] sm:$0xff]
    %v2661 = vld [vmem:[#allocation22 + $0x11d0] sm:$0xff]
    %v2662 = vld [vmem:[#allocation22 + $0x11d8] sm:$0xff]
    %v2663 = vld [vmem:[#allocation22 + $0x11e0] sm:$0xff]
    %v2664 = vld [vmem:[#allocation22 + $0x11e8] sm:$0xff]
    %v2665 = vld [vmem:[#allocation22 + $0x11f0] sm:$0xff]
    %v2666 = vld [vmem:[#allocation22 + $0x11f8] sm:$0xff]
    %2667 = vmatprep.subr.mxu0 %v2634
    %2668 = vmatpush1.msra.mxu0 %v2633
    %2669 = vmatprep.subr.mxu0 %v2632
    %2670 = vmatpush1.msra.mxu0 %v2631
    %2671 = vmatprep.subr.mxu0 %v2630
    %2672 = vmatpush1.msra.mxu0 %v2629
    %2673 = vmatprep.subr.mxu0 %v2628
    %2674 = vmatpush1.msra.mxu0 %v2627
    %2675 = vmatprep.subr.mxu0 %v2626
    %2676 = vmatpush1.msra.mxu0 %v2625
    %2677 = vmatprep.subr.mxu0 %v2624
    %2678 = vmatpush1.msra.mxu0 %v2623
    %2679 = vmatprep.subr.mxu0 %v2622
    %2680 = vmatpush1.msra.mxu0 %v2621
    %2681 = vmatprep.subr.mxu0 %v2620
    %2682 = vmatpush1.msra.mxu0 %v2619
    %2683 = vmatprep.subr.mxu0 %v2618
    %2684 = vmatpush1.msra.mxu0 %v2617
    %2685 = vmatprep.subr.mxu0 %v2616
    %2686 = vmatpush1.msra.mxu0 %v2615
    %2687 = vmatprep.subr.mxu0 %v2614
    %2688 = vmatpush1.msra.mxu0 %v2613
    %2689 = vmatprep.subr.mxu0 %v2612
    %2690 = vmatpush1.msra.mxu0 %v2611
    %2691 = vmatprep.subr.mxu0 %v2610
    %2692 = vmatpush1.msra.mxu0 %v2609
    %2693 = vmatprep.subr.mxu0 %v2608
    %2694 = vmatpush1.msra.mxu0 %v2607
    %2695 = vmatprep.subr.mxu0 %v2606
    %2696 = vmatpush1.msra.mxu0 %v2605
    %2697 = vmatprep.subr.mxu0 %v2604
    %2698 = vmatpush1.msra.mxu0 %v2603
    %2699 = vmatprep.subr.mxu0 %v2666
    %2700 = vmatpush2.msra.mxu0 %v2665
    %2701 = vmatprep.subr.mxu0 %v2664
    %2702 = vmatpush2.msra.mxu0 %v2663
    %2703 = vmatprep.subr.mxu0 %v2662
    %2704 = vmatpush2.msra.mxu0 %v2661
    %2705 = vmatprep.subr.mxu0 %v2660
    %2706 = vmatpush2.msra.mxu0 %v2659
    %2707 = vmatprep.subr.mxu0 %v2658
    %2708 = vmatpush2.msra.mxu0 %v2657
    %2709 = vmatprep.subr.mxu0 %v2656
    %2710 = vmatpush2.msra.mxu0 %v2655
    %2711 = vmatprep.subr.mxu0 %v2654
    %2712 = vmatpush2.msra.mxu0 %v2653
    %2713 = vmatprep.subr.mxu0 %v2652
    %2714 = vmatpush2.msra.mxu0 %v2651
    %2715 = vmatprep.subr.mxu0 %v2650
    %2716 = vmatpush2.msra.mxu0 %v2649
    %2717 = vmatprep.subr.mxu0 %v2648
    %2718 = vmatpush2.msra.mxu0 %v2647
    %2719 = vmatprep.subr.mxu0 %v2646
    %2720 = vmatpush2.msra.mxu0 %v2645
    %2721 = vmatprep.subr.mxu0 %v2644
    %2722 = vmatpush2.msra.mxu0 %v2643
    %2723 = vmatprep.subr.mxu0 %v2642
    %2724 = vmatpush2.msra.mxu0 %v2641
    %2725 = vmatprep.subr.mxu0 %v2640
    %2726 = vmatpush2.msra.mxu0 %v2639
    %2727 = vmatprep.subr.mxu0 %v2638
    %2728 = vmatpush2.msra.mxu0 %v2637
    %2729 = vmatprep.subr.mxu0 %v2636
    %2730 = vmatpush2.msra.mxu0 %v2635
    %2731 = vmatprep.mubr.f32.mxu0 %v1482
    %2732 = vmatmul.mubr.f32.gmra.mxu0 %v1481
    %v2733 = vpop.f32.mrf.mxu0
    %v2734 = vadd.f32 0.0, %v2733
    %v2735 = vpop.f32.mrf.mxu0
    %v2736 = vadd.f32 0.0, %v2735
    %2737 = vdwg.mxu0
    %v2738 = vadd.f32 %v2601, %v2734
    %v2739 = vadd.f32 %v2602, %v2736
    %v2740 = vld [vmem:[#allocation22 + $0x1200] sm:$0xff]
    %v2741 = vld [vmem:[#allocation22 + $0x1208] sm:$0xff]
    %v2742 = vld [vmem:[#allocation22 + $0x1210] sm:$0xff]
    %v2743 = vld [vmem:[#allocation22 + $0x1218] sm:$0xff]
    %v2744 = vld [vmem:[#allocation22 + $0x1220] sm:$0xff]
    %v2745 = vld [vmem:[#allocation22 + $0x1228] sm:$0xff]
    %v2746 = vld [vmem:[#allocation22 + $0x1230] sm:$0xff]
    %v2747 = vld [vmem:[#allocation22 + $0x1238] sm:$0xff]
    %v2748 = vld [vmem:[#allocation22 + $0x1240] sm:$0xff]
    %v2749 = vld [vmem:[#allocation22 + $0x1248] sm:$0xff]
    %v2750 = vld [vmem:[#allocation22 + $0x1250] sm:$0xff]
    %v2751 = vld [vmem:[#allocation22 + $0x1258] sm:$0xff]
    %v2752 = vld [vmem:[#allocation22 + $0x1260] sm:$0xff]
    %v2753 = vld [vmem:[#allocation22 + $0x1268] sm:$0xff]
    %v2754 = vld [vmem:[#allocation22 + $0x1270] sm:$0xff]
    %v2755 = vld [vmem:[#allocation22 + $0x1278] sm:$0xff]
    %v2756 = vld [vmem:[#allocation22 + $0x1280] sm:$0xff]
    %v2757 = vld [vmem:[#allocation22 + $0x1288] sm:$0xff]
    %v2758 = vld [vmem:[#allocation22 + $0x1290] sm:$0xff]
    %v2759 = vld [vmem:[#allocation22 + $0x1298] sm:$0xff]
    %v2760 = vld [vmem:[#allocation22 + $0x12a0] sm:$0xff]
    %v2761 = vld [vmem:[#allocation22 + $0x12a8] sm:$0xff]
    %v2762 = vld [vmem:[#allocation22 + $0x12b0] sm:$0xff]
    %v2763 = vld [vmem:[#allocation22 + $0x12b8] sm:$0xff]
    %v2764 = vld [vmem:[#allocation22 + $0x12c0] sm:$0xff]
    %v2765 = vld [vmem:[#allocation22 + $0x12c8] sm:$0xff]
    %v2766 = vld [vmem:[#allocation22 + $0x12d0] sm:$0xff]
    %v2767 = vld [vmem:[#allocation22 + $0x12d8] sm:$0xff]
    %v2768 = vld [vmem:[#allocation22 + $0x12e0] sm:$0xff]
    %v2769 = vld [vmem:[#allocation22 + $0x12e8] sm:$0xff]
    %v2770 = vld [vmem:[#allocation22 + $0x12f0] sm:$0xff]
    %v2771 = vld [vmem:[#allocation22 + $0x12f8] sm:$0xff]
    %v2772 = vld [vmem:[#allocation22 + $0x1300] sm:$0xff]
    %v2773 = vld [vmem:[#allocation22 + $0x1308] sm:$0xff]
    %v2774 = vld [vmem:[#allocation22 + $0x1310] sm:$0xff]
    %v2775 = vld [vmem:[#allocation22 + $0x1318] sm:$0xff]
    %v2776 = vld [vmem:[#allocation22 + $0x1320] sm:$0xff]
    %v2777 = vld [vmem:[#allocation22 + $0x1328] sm:$0xff]
    %v2778 = vld [vmem:[#allocation22 + $0x1330] sm:$0xff]
    %v2779 = vld [vmem:[#allocation22 + $0x1338] sm:$0xff]
    %v2780 = vld [vmem:[#allocation22 + $0x1340] sm:$0xff]
    %v2781 = vld [vmem:[#allocation22 + $0x1348] sm:$0xff]
    %v2782 = vld [vmem:[#allocation22 + $0x1350] sm:$0xff]
    %v2783 = vld [vmem:[#allocation22 + $0x1358] sm:$0xff]
    %v2784 = vld [vmem:[#allocation22 + $0x1360] sm:$0xff]
    %v2785 = vld [vmem:[#allocation22 + $0x1368] sm:$0xff]
    %v2786 = vld [vmem:[#allocation22 + $0x1370] sm:$0xff]
    %v2787 = vld [vmem:[#allocation22 + $0x1378] sm:$0xff]
    %v2788 = vld [vmem:[#allocation22 + $0x1380] sm:$0xff]
    %v2789 = vld [vmem:[#allocation22 + $0x1388] sm:$0xff]
    %v2790 = vld [vmem:[#allocation22 + $0x1390] sm:$0xff]
    %v2791 = vld [vmem:[#allocation22 + $0x1398] sm:$0xff]
    %v2792 = vld [vmem:[#allocation22 + $0x13a0] sm:$0xff]
    %v2793 = vld [vmem:[#allocation22 + $0x13a8] sm:$0xff]
    %v2794 = vld [vmem:[#allocation22 + $0x13b0] sm:$0xff]
    %v2795 = vld [vmem:[#allocation22 + $0x13b8] sm:$0xff]
    %v2796 = vld [vmem:[#allocation22 + $0x13c0] sm:$0xff]
    %v2797 = vld [vmem:[#allocation22 + $0x13c8] sm:$0xff]
    %v2798 = vld [vmem:[#allocation22 + $0x13d0] sm:$0xff]
    %v2799 = vld [vmem:[#allocation22 + $0x13d8] sm:$0xff]
    %v2800 = vld [vmem:[#allocation22 + $0x13e0] sm:$0xff]
    %v2801 = vld [vmem:[#allocation22 + $0x13e8] sm:$0xff]
    %v2802 = vld [vmem:[#allocation22 + $0x13f0] sm:$0xff]
    %v2803 = vld [vmem:[#allocation22 + $0x13f8] sm:$0xff]
    %v2806 = vrot.slane %v1481, 2
    %v2807 = vrot.slane %v1482, 2
    %2810 = vmatprep.subr.mxu0 %v2771
    %2811 = vmatpush1.msra.mxu0 %v2770
    %2812 = vmatprep.subr.mxu0 %v2769
    %2813 = vmatpush1.msra.mxu0 %v2768
    %2814 = vmatprep.subr.mxu0 %v2767
    %2815 = vmatpush1.msra.mxu0 %v2766
    %2816 = vmatprep.subr.mxu0 %v2765
    %2817 = vmatpush1.msra.mxu0 %v2764
    %2818 = vmatprep.subr.mxu0 %v2763
    %2819 = vmatpush1.msra.mxu0 %v2762
    %2820 = vmatprep.subr.mxu0 %v2761
    %2821 = vmatpush1.msra.mxu0 %v2760
    %2822 = vmatprep.subr.mxu0 %v2759
    %2823 = vmatpush1.msra.mxu0 %v2758
    %2824 = vmatprep.subr.mxu0 %v2757
    %2825 = vmatpush1.msra.mxu0 %v2756
    %2826 = vmatprep.subr.mxu0 %v2755
    %2827 = vmatpush1.msra.mxu0 %v2754
    %2828 = vmatprep.subr.mxu0 %v2753
    %2829 = vmatpush1.msra.mxu0 %v2752
    %2830 = vmatprep.subr.mxu0 %v2751
    %2831 = vmatpush1.msra.mxu0 %v2750
    %2832 = vmatprep.subr.mxu0 %v2749
    %2833 = vmatpush1.msra.mxu0 %v2748
    %2834 = vmatprep.subr.mxu0 %v2747
    %2835 = vmatpush1.msra.mxu0 %v2746
    %2836 = vmatprep.subr.mxu0 %v2745
    %2837 = vmatpush1.msra.mxu0 %v2744
    %2838 = vmatprep.subr.mxu0 %v2743
    %2839 = vmatpush1.msra.mxu0 %v2742
    %2840 = vmatprep.subr.mxu0 %v2741
    %2841 = vmatpush1.msra.mxu0 %v2740
    %2842 = vmatprep.subr.mxu0 %v2803
    %2843 = vmatpush2.msra.mxu0 %v2802
    %2844 = vmatprep.subr.mxu0 %v2801
    %2845 = vmatpush2.msra.mxu0 %v2800
    %2846 = vmatprep.subr.mxu0 %v2799
    %2847 = vmatpush2.msra.mxu0 %v2798
    %2848 = vmatprep.subr.mxu0 %v2797
    %2849 = vmatpush2.msra.mxu0 %v2796
    %2850 = vmatprep.subr.mxu0 %v2795
    %2851 = vmatpush2.msra.mxu0 %v2794
    %2852 = vmatprep.subr.mxu0 %v2793
    %2853 = vmatpush2.msra.mxu0 %v2792
    %2854 = vmatprep.subr.mxu0 %v2791
    %2855 = vmatpush2.msra.mxu0 %v2790
    %2856 = vmatprep.subr.mxu0 %v2789
    %2857 = vmatpush2.msra.mxu0 %v2788
    %2858 = vmatprep.subr.mxu0 %v2787
    %2859 = vmatpush2.msra.mxu0 %v2786
    %2860 = vmatprep.subr.mxu0 %v2785
    %2861 = vmatpush2.msra.mxu0 %v2784
    %2862 = vmatprep.subr.mxu0 %v2783
    %2863 = vmatpush2.msra.mxu0 %v2782
    %2864 = vmatprep.subr.mxu0 %v2781
    %2865 = vmatpush2.msra.mxu0 %v2780
    %2866 = vmatprep.subr.mxu0 %v2779
    %2867 = vmatpush2.msra.mxu0 %v2778
    %2868 = vmatprep.subr.mxu0 %v2777
    %2869 = vmatpush2.msra.mxu0 %v2776
    %2870 = vmatprep.subr.mxu0 %v2775
    %2871 = vmatpush2.msra.mxu0 %v2774
    %2872 = vmatprep.subr.mxu0 %v2773
    %2873 = vmatpush2.msra.mxu0 %v2772
    %2874 = vmatprep.mubr.f32.mxu0 %v2807
    %2875 = vmatmul.mubr.f32.gmra.mxu0 %v2806
    %v2876 = vpop.f32.mrf.mxu0
    %v2877 = vadd.f32 0.0, %v2876
    %v2878 = vpop.f32.mrf.mxu0
    %v2879 = vadd.f32 0.0, %v2878
    %2880 = vdwg.mxu0
    %v2881 = vadd.f32 %v2738, %v2877
    %v2882 = vadd.f32 %v2739, %v2879
    %v2883 = vld [vmem:[#allocation22 + $0x1400] sm:$0xff]
    %v2884 = vld [vmem:[#allocation22 + $0x1408] sm:$0xff]
    %v2885 = vld [vmem:[#allocation22 + $0x1410] sm:$0xff]
    %v2886 = vld [vmem:[#allocation22 + $0x1418] sm:$0xff]
    %v2887 = vld [vmem:[#allocation22 + $0x1420] sm:$0xff]
    %v2888 = vld [vmem:[#allocation22 + $0x1428] sm:$0xff]
    %v2889 = vld [vmem:[#allocation22 + $0x1430] sm:$0xff]
    %v2890 = vld [vmem:[#allocation22 + $0x1438] sm:$0xff]
    %v2891 = vld [vmem:[#allocation22 + $0x1440] sm:$0xff]
    %v2892 = vld [vmem:[#allocation22 + $0x1448] sm:$0xff]
    %v2893 = vld [vmem:[#allocation22 + $0x1450] sm:$0xff]
    %v2894 = vld [vmem:[#allocation22 + $0x1458] sm:$0xff]
    %v2895 = vld [vmem:[#allocation22 + $0x1460] sm:$0xff]
    %v2896 = vld [vmem:[#allocation22 + $0x1468] sm:$0xff]
    %v2897 = vld [vmem:[#allocation22 + $0x1470] sm:$0xff]
    %v2898 = vld [vmem:[#allocation22 + $0x1478] sm:$0xff]
    %v2899 = vld [vmem:[#allocation22 + $0x1480] sm:$0xff]
    %v2900 = vld [vmem:[#allocation22 + $0x1488] sm:$0xff]
    %v2901 = vld [vmem:[#allocation22 + $0x1490] sm:$0xff]
    %v2902 = vld [vmem:[#allocation22 + $0x1498] sm:$0xff]
    %v2903 = vld [vmem:[#allocation22 + $0x14a0] sm:$0xff]
    %v2904 = vld [vmem:[#allocation22 + $0x14a8] sm:$0xff]
    %v2905 = vld [vmem:[#allocation22 + $0x14b0] sm:$0xff]
    %v2906 = vld [vmem:[#allocation22 + $0x14b8] sm:$0xff]
    %v2907 = vld [vmem:[#allocation22 + $0x14c0] sm:$0xff]
    %v2908 = vld [vmem:[#allocation22 + $0x14c8] sm:$0xff]
    %v2909 = vld [vmem:[#allocation22 + $0x14d0] sm:$0xff]
    %v2910 = vld [vmem:[#allocation22 + $0x14d8] sm:$0xff]
    %v2911 = vld [vmem:[#allocation22 + $0x14e0] sm:$0xff]
    %v2912 = vld [vmem:[#allocation22 + $0x14e8] sm:$0xff]
    %v2913 = vld [vmem:[#allocation22 + $0x14f0] sm:$0xff]
    %v2914 = vld [vmem:[#allocation22 + $0x14f8] sm:$0xff]
    %v2915 = vld [vmem:[#allocation22 + $0x1500] sm:$0xff]
    %v2916 = vld [vmem:[#allocation22 + $0x1508] sm:$0xff]
    %v2917 = vld [vmem:[#allocation22 + $0x1510] sm:$0xff]
    %v2918 = vld [vmem:[#allocation22 + $0x1518] sm:$0xff]
    %v2919 = vld [vmem:[#allocation22 + $0x1520] sm:$0xff]
    %v2920 = vld [vmem:[#allocation22 + $0x1528] sm:$0xff]
    %v2921 = vld [vmem:[#allocation22 + $0x1530] sm:$0xff]
    %v2922 = vld [vmem:[#allocation22 + $0x1538] sm:$0xff]
    %v2923 = vld [vmem:[#allocation22 + $0x1540] sm:$0xff]
    %v2924 = vld [vmem:[#allocation22 + $0x1548] sm:$0xff]
    %v2925 = vld [vmem:[#allocation22 + $0x1550] sm:$0xff]
    %v2926 = vld [vmem:[#allocation22 + $0x1558] sm:$0xff]
    %v2927 = vld [vmem:[#allocation22 + $0x1560] sm:$0xff]
    %v2928 = vld [vmem:[#allocation22 + $0x1568] sm:$0xff]
    %v2929 = vld [vmem:[#allocation22 + $0x1570] sm:$0xff]
    %v2930 = vld [vmem:[#allocation22 + $0x1578] sm:$0xff]
    %v2931 = vld [vmem:[#allocation22 + $0x1580] sm:$0xff]
    %v2932 = vld [vmem:[#allocation22 + $0x1588] sm:$0xff]
    %v2933 = vld [vmem:[#allocation22 + $0x1590] sm:$0xff]
    %v2934 = vld [vmem:[#allocation22 + $0x1598] sm:$0xff]
    %v2935 = vld [vmem:[#allocation22 + $0x15a0] sm:$0xff]
    %v2936 = vld [vmem:[#allocation22 + $0x15a8] sm:$0xff]
    %v2937 = vld [vmem:[#allocation22 + $0x15b0] sm:$0xff]
    %v2938 = vld [vmem:[#allocation22 + $0x15b8] sm:$0xff]
    %v2939 = vld [vmem:[#allocation22 + $0x15c0] sm:$0xff]
    %v2940 = vld [vmem:[#allocation22 + $0x15c8] sm:$0xff]
    %v2941 = vld [vmem:[#allocation22 + $0x15d0] sm:$0xff]
    %v2942 = vld [vmem:[#allocation22 + $0x15d8] sm:$0xff]
    %v2943 = vld [vmem:[#allocation22 + $0x15e0] sm:$0xff]
    %v2944 = vld [vmem:[#allocation22 + $0x15e8] sm:$0xff]
    %v2945 = vld [vmem:[#allocation22 + $0x15f0] sm:$0xff]
    %v2946 = vld [vmem:[#allocation22 + $0x15f8] sm:$0xff]
    %v2947 = vrot.slane %v1481, 4
    %v2948 = vrot.slane %v1482, 4
    %2951 = vmatprep.subr.mxu0 %v2914
    %2952 = vmatpush1.msra.mxu0 %v2913
    %2953 = vmatprep.subr.mxu0 %v2912
    %2954 = vmatpush1.msra.mxu0 %v2911
    %2955 = vmatprep.subr.mxu0 %v2910
    %2956 = vmatpush1.msra.mxu0 %v2909
    %2957 = vmatprep.subr.mxu0 %v2908
    %2958 = vmatpush1.msra.mxu0 %v2907
    %2959 = vmatprep.subr.mxu0 %v2906
    %2960 = vmatpush1.msra.mxu0 %v2905
    %2961 = vmatprep.subr.mxu0 %v2904
    %2962 = vmatpush1.msra.mxu0 %v2903
    %2963 = vmatprep.subr.mxu0 %v2902
    %2964 = vmatpush1.msra.mxu0 %v2901
    %2965 = vmatprep.subr.mxu0 %v2900
    %2966 = vmatpush1.msra.mxu0 %v2899
    %2967 = vmatprep.subr.mxu0 %v2898
    %2968 = vmatpush1.msra.mxu0 %v2897
    %2969 = vmatprep.subr.mxu0 %v2896
    %2970 = vmatpush1.msra.mxu0 %v2895
    %2971 = vmatprep.subr.mxu0 %v2894
    %2972 = vmatpush1.msra.mxu0 %v2893
    %2973 = vmatprep.subr.mxu0 %v2892
    %2974 = vmatpush1.msra.mxu0 %v2891
    %2975 = vmatprep.subr.mxu0 %v2890
    %2976 = vmatpush1.msra.mxu0 %v2889
    %2977 = vmatprep.subr.mxu0 %v2888
    %2978 = vmatpush1.msra.mxu0 %v2887
    %2979 = vmatprep.subr.mxu0 %v2886
    %2980 = vmatpush1.msra.mxu0 %v2885
    %2981 = vmatprep.subr.mxu0 %v2884
    %2982 = vmatpush1.msra.mxu0 %v2883
    %2983 = vmatprep.subr.mxu0 %v2946
    %2984 = vmatpush2.msra.mxu0 %v2945
    %2985 = vmatprep.subr.mxu0 %v2944
    %2986 = vmatpush2.msra.mxu0 %v2943
    %2987 = vmatprep.subr.mxu0 %v2942
    %2988 = vmatpush2.msra.mxu0 %v2941
    %2989 = vmatprep.subr.mxu0 %v2940
    %2990 = vmatpush2.msra.mxu0 %v2939
    %2991 = vmatprep.subr.mxu0 %v2938
    %2992 = vmatpush2.msra.mxu0 %v2937
    %2993 = vmatprep.subr.mxu0 %v2936
    %2994 = vmatpush2.msra.mxu0 %v2935
    %2995 = vmatprep.subr.mxu0 %v2934
    %2996 = vmatpush2.msra.mxu0 %v2933
    %2997 = vmatprep.subr.mxu0 %v2932
    %2998 = vmatpush2.msra.mxu0 %v2931
    %2999 = vmatprep.subr.mxu0 %v2930
    %3000 = vmatpush2.msra.mxu0 %v2929
    %3001 = vmatprep.subr.mxu0 %v2928
    %3002 = vmatpush2.msra.mxu0 %v2927
    %3003 = vmatprep.subr.mxu0 %v2926
    %3004 = vmatpush2.msra.mxu0 %v2925
    %3005 = vmatprep.subr.mxu0 %v2924
    %3006 = vmatpush2.msra.mxu0 %v2923
    %3007 = vmatprep.subr.mxu0 %v2922
    %3008 = vmatpush2.msra.mxu0 %v2921
    %3009 = vmatprep.subr.mxu0 %v2920
    %3010 = vmatpush2.msra.mxu0 %v2919
    %3011 = vmatprep.subr.mxu0 %v2918
    %3012 = vmatpush2.msra.mxu0 %v2917
    %3013 = vmatprep.subr.mxu0 %v2916
    %3014 = vmatpush2.msra.mxu0 %v2915
    %3015 = vmatprep.mubr.f32.mxu0 %v2948
    %3016 = vmatmul.mubr.f32.gmra.mxu0 %v2947
    %v3017 = vpop.f32.mrf.mxu0
    %v3018 = vadd.f32 0.0, %v3017
    %v3019 = vpop.f32.mrf.mxu0
    %v3020 = vadd.f32 0.0, %v3019
    %3021 = vdwg.mxu0
    %v3022 = vadd.f32 %v2881, %v3018
    %v3023 = vadd.f32 %v2882, %v3020
    %v3024 = vld [vmem:[#allocation23] sm:$0x3]
    %v3026 = vlaneseq
    %v3027 = vshrl.u32 %v3026, 7
    %v3028 = vsub.s32 0, %v3027
    %v3029 = vrot.slane %v3024, %v3028
    %v3030 = vlaneseq
    %v3031 = vshrl.u32 %v3030, 7
    %v3032 = vsub.s32 1, %v3031
    %v3033 = vrot.slane %v3024, %v3032
    %v3036 = vadd.f32 %v3022, %v3029
    %v3037 = vadd.f32 %v3023, %v3033
    %v3040 = vcombine.low %v3036, %v3037
    %v3042 = vunpack.c.l.s4 1983009808
    %v3043 = vunpack.c.0.s8 %v3042
    %v3044 = vlaneseq
    %v3045 = vshrl.u32 %v3044, 7
    %v3046 = vsub.s32 %v3043, %v3045
    %v3047 = vrot.slane %v3040, %v3046
    %3049 = vst [vmem:[#allocation25] sm:$0xf] %v3047
    // Predicated region
    $region118: #{tpu_custom_call.1} parent=1 // pred_check
      _
    $region119: #{tpu_custom_call.1} parent=1 // pred_check_branch
      %3051 = sbr.rel (0) target = $region121
    $region120: #{tpu_custom_call.1} parent=1 // pred_region
      %s3053 = ssub.s32 64, 64
      %3054 = vsyncadd [#allocation4], %s3053
      %s3056 = sshll.u32 [#allocation25], 4
      %s3057 = int_to_ptr.vmem [resolvable:$true] %s3056
      %3059 = dma.vmem_to_hbm [thread:$0]  %s3057, 64, %s15, [#allocation4]
    $region121: #{tpu_custom_call.1} parent=1 // pred_fallthru
      _
    // Predicated region
    $region122: #{tpu_custom_call.1} parent=1 // pred_check
      _
    $region123: #{tpu_custom_call.1} parent=1 // pred_check_branch
      %3061 = sbr.rel (0) target = $region125
    $region124: #{tpu_custom_call.1} parent=1 // pred_region
      %3062 = dma.done [#allocation4], 64
    $region125: #{tpu_custom_call.1} parent=1 // pred_fallthru
      _
    %3063 = vsyncpa [#allocation3], 1
    %3064 = vsyncpa [#allocation6], 1
    %3065 = vsyncpa [#allocation9], 1
    %3066 = vsyncpa [#allocation12], 1
    %3067 = vsyncpa [#allocation15], 1
    %3068 = vsyncpa [#allocation18], 1
    %3069 = vsyncpa [#allocation21], 1
    %3070 = vsyncpa [#allocation24], 1
    %3071 = vsyncpa [#allocation4], 1

</llo_original>
